<compile_context>
chip_gen: v6e
topology: v6e:2x2x1
jax: 0.10.0
libtpu: 0.0.40
codegen_flags: <defaults>
</compile_context>

<pallas_src>
import functools
import math

import jax
import jax.numpy as jnp
from jax.experimental import pallas as pl
from jax.experimental.pallas import tpu as pltpu

WGANGP = False          # params.WGANGP
LRELU_SLOPE = 0.2       # LeakyReLU negative slope
IN_EPS = 1e-5           # torch.nn.InstanceNorm2d default eps
KSIZE = 4               # all convs: kernel_size=4, padding=1


def _conv_out_size(hin, stride):
    return (hin + 2 - KSIZE) // stride + 1


# ----------------------------------------------------------------------------
# In-kernel helpers
# ----------------------------------------------------------------------------
def _lrelu(a):
    return jnp.where(a > 0, a, LRELU_SLOPE * a)


def _fill_padded(s_ref, vals, hin, bsize):
    """Write per-sample activations into the row-padded scratch.

    Scratch layout per sample: [zero row | hin rows | zero row]; the zero rows
    realise the conv's padding=1 along H (padding along W lives inside R).
    """
    s_ref[...] = jnp.zeros(s_ref.shape, s_ref.dtype)
    for b in range(bsize):
        s_ref[pl.ds(b * (hin + 2) + 1, hin), :] = vals[b].astype(s_ref.dtype)


def _conv_layer(s_ref, r_ref, brow_ref, hin, ho, stride, bsize):
    """4x4 conv as ONE MXU matmul.

    The 4 kh taps are strided row slices of the padded scratch, concatenated
    along lanes -> (B*Ho, 4*Win*Cin), then multiplied by the pre-stacked
    bf16 weight matrix R (4*Win*Cin, Wo*Cout) with f32 accumulation.
    """
    rows = []
    for b in range(bsize):
        base = b * (hin + 2)
        taps = []
        for kh in range(KSIZE):
            if stride == 1:
                taps.append(s_ref[pl.ds(base + kh, ho), :])
            else:
                taps.append(s_ref[pl.ds(base + kh, ho, stride=stride), :])
        rows.append(jnp.concatenate(taps, axis=1))
    g = rows[0] if bsize == 1 else jnp.concatenate(rows, axis=0)
    acc = jnp.dot(g.astype(r_ref.dtype), r_ref[...],
                  preferred_element_type=jnp.float32)
    return acc + brow_ref[...]


def _channel_proj(wc, cout):
    """In-kernel 0/1 matrix P[x, y] = 1 iff chan(x) == chan(y)."""
    li = jax.lax.broadcasted_iota(jnp.int32, (wc, wc), 0) % cout
    lj = jax.lax.broadcasted_iota(jnp.int32, (wc, wc), 1) % cout
    return (li == lj).astype(jnp.float32)


def _inorm(a, proj, n_spatial):
    """InstanceNorm2d for one sample in the (H, W*C) layout.

    Stats are computed on a slab-mean-centred copy (guards against the
    E[x^2]-E[x]^2 cancellation) and reduced per channel with one small matmul
    against the in-kernel projection P.
    """
    m0 = jnp.mean(jnp.mean(a, axis=1, keepdims=True), axis=0, keepdims=True)
    x = a - m0
    rs = jnp.sum(x, axis=0, keepdims=True)                    # (1, WC)
    rq = jnp.sum(x * x, axis=0, keepdims=True)                # (1, WC)
    st = jnp.concatenate([rs, rq], axis=0)                    # (2, WC)
    red = jnp.dot(st, proj,
                  preferred_element_type=jnp.float32) * (1.0 / n_spatial)
    mean = red[0:1, :]
    var = red[1:2, :] - mean * mean
    return (x - mean) * jax.lax.rsqrt(var + IN_EPS)


def _disc_kernel(x_ref,
                 r1, c1, r2, c2, r3, c3, r4, c4, r5, c5,
                 o_ref,
                 s1, s2, s3, s4, s5,
                 *, dims, bsize, inst_norm, sigmoid):
    r_refs = (r1, r2, r3, r4, r5)
    c_refs = (c1, c2, c3, c4, c5)
    scratches = (s1, s2, s3, s4, s5)

    a = None
    for layer in range(5):
        hin, ho, wo, cout, stride, nf = dims[layer]
        if layer == 0:                              # conv1: no activation
            vals = [x_ref[b] for b in range(bsize)]
        else:                                       # conv(lrelu(x))
            act = _lrelu(a)
            vals = [act[b * hin:(b + 1) * hin, :] for b in range(bsize)]
        _fill_padded(scratches[layer], vals, hin, bsize)
        a = _conv_layer(scratches[layer], r_refs[layer], c_refs[layer],
                        hin, ho, stride, bsize)     # (B*Ho, Wo*Cout) f32
        if nf and inst_norm:
            proj = _channel_proj(wo * cout, cout)   # hoisted out of the b-loop
            parts = [_inorm(a[b * ho:(b + 1) * ho, :], proj, ho * wo)
                     for b in range(bsize)]
            a = parts[0] if bsize == 1 else jnp.concatenate(parts, axis=0)

    if sigmoid:
        a = pl.reciprocal(1.0 + jnp.exp(-a), approx=True)     # EUP exp + rcp

    ho_last = dims[-1][1]
    for b in range(bsize):
        o_ref[b] = a[b * ho_last:(b + 1) * ho_last, :].astype(o_ref.dtype)


# ----------------------------------------------------------------------------
# Wrapper-side operand construction (pure XLA layout plumbing, tiny tensors)
# ----------------------------------------------------------------------------
def _layer_operands(w, b, hin, win, stride):
    """R (4*Win*Cin, Wo*Cout): the 4 kh taps stacked row-wise; plus bias row.

    R carries the kw taps, the column stride and the padding=1 along W.
    """
    _, _, cin, cout = w.shape
    ho = _conv_out_size(hin, stride)
    wo = _conv_out_size(win, stride)
    wgrid = jnp.arange(win)[:, None]               # (Win, 1)
    jgrid = jnp.arange(wo)[None, :]                # (1, Wo)
    kw = wgrid - stride * jgrid + 1                # (Win, Wo)
    valid = (kw >= 0) & (kw < KSIZE)
    kw_c = jnp.clip(kw, 0, KSIZE - 1)
    blocks = []
    for kh in range(KSIZE):
        wk = w[kh][kw_c]                           # (Win, Wo, Cin, Cout)
        wk = jnp.where(valid[:, :, None, None], wk, 0.0)
        blocks.append(
            jnp.transpose(wk, (0, 2, 1, 3)).reshape(win * cin, wo * cout))
    r = jnp.concatenate(blocks, axis=0)            # (4*Win*Cin, Wo*Cout)
    brow = jnp.tile(b, (wo,))[None, :]             # (1, Wo*Cout)
    return r, brow, ho, wo, cout


def _pick_batch_block(n):
    # As many samples per grid step as possible (feeds the MXU rows) while
    # keeping >= 2 grid steps so dimension_semantics=("parallel",) can use
    # both v7x TensorCores.
    for b in (8, 4, 2):
        if n % b == 0 and n // b >= 2:
            return b
    return 1


# ----------------------------------------------------------------------------
# Discriminator: parameter init + fused forward
# ----------------------------------------------------------------------------
def init_discriminator_params(key, input_dim, num_filter, output_dim):
    # normal_weight_init(mean=0, std=0.02); conv bias ~ U(-1/sqrt(fan_in), ...)
    chans = [(input_dim, num_filter),
             (num_filter, num_filter * 2),
             (num_filter * 2, num_filter * 4),
             (num_filter * 4, num_filter * 8),
             (num_filter * 8, output_dim)]
    keys = jax.random.split(key, 2 * len(chans))
    params = []
    for i, (ci, co) in enumerate(chans):
        w = 0.02 * jax.random.normal(keys[2 * i], (KSIZE, KSIZE, ci, co),
                                     jnp.float32)
        bound = 1.0 / math.sqrt(ci * KSIZE * KSIZE)
        b = jax.random.uniform(keys[2 * i + 1], (co,), jnp.float32,
                               -bound, bound)
        params.append((w, b))
    return params


def discriminator_forward(x, label, params):
    """x: (N,H,W,Cx), label: (N,H,W,Cl); returns sigmoid(patch scores), NHWC."""
    n, hin, win, _ = x.shape
    h0 = jnp.concatenate([x, label], axis=-1).astype(jnp.float32)
    cin0 = h0.shape[-1]
    x2d = h0.reshape(n, hin, win * cin0)            # lane-dense (N, H, W*Cin)

    (w1, b1), (w2, b2), (w3, b3), (w4, b4), (w5, b5) = params
    out_dim = w5.shape[-1]
    strides = (2, 2, 2, 1, 1)
    norm_flags = (False, True, True, True, False)

    # Final spatial size -> pad conv5's output channels so the only HBM store
    # is lane-dense (the padded channels are sliced off in the wrapper).
    w_last = win
    for s in strides:
        w_last = _conv_out_size(w_last, s)
    cpad = out_dim
    if 128 % w_last == 0 and 128 // w_last > out_dim:
        cpad = 128 // w_last
    w5p = jnp.zeros(w5.shape[:3] + (cpad,), w5.dtype).at[..., :out_dim].set(w5)
    b5p = jnp.zeros((cpad,), b5.dtype).at[:out_dim].set(b5)

    weights = [(w1, b1), (w2, b2), (w3, b3), (w4, b4), (w5p, b5p)]
    rs, crows, dims = [], [], []
    h_cur, w_cur = hin, win
    for (w, b), s, nf in zip(weights, strides, norm_flags):
        r, crow, ho, wo, cout = _layer_operands(w, b, h_cur, w_cur, s)
        rs.append(r.astype(jnp.bfloat16))           # bf16 MXU operands
        crows.append(crow.astype(jnp.float32))      # bias added in f32
        dims.append((h_cur, ho, wo, cout, s, nf))
        h_cur, w_cur = ho, wo
    ho_last, wo_last = dims[-1][1], dims[-1][2]

    bsize = _pick_batch_block(n)
    grid = (n // bsize,)

    inputs = [x2d]
    for r, c in zip(rs, crows):
        inputs.extend([r, c])

    in_specs = [pl.BlockSpec((bsize, hin, win * cin0), lambda i: (i, 0, 0))]
    for arr in inputs[1:]:
        in_specs.append(pl.BlockSpec(arr.shape, lambda i: (0, 0)))

    out_spec = pl.BlockSpec((bsize, ho_last, wo_last * cpad),
                            lambda i: (i, 0, 0))
    out_shape = jax.ShapeDtypeStruct((n, ho_last, wo_last * cpad), jnp.float32)

    # Row-padded f32 scratch per layer input (per-sample blocks of Hin+2 rows).
    scratch_shapes = []
    wc_in = win * cin0
    for (h_in, ho, wo, cout, s, nf) in dims:
        scratch_shapes.append(
            pltpu.VMEM((bsize * (h_in + 2), wc_in), jnp.float32))
        wc_in = wo * cout

    kernel = functools.partial(_disc_kernel, dims=tuple(dims), bsize=bsize,
                               inst_norm=not WGANGP, sigmoid=not WGANGP)

    out2d = pl.pallas_call(
        kernel,
        out_shape=out_shape,
        grid_spec=pltpu.PrefetchScalarGridSpec(
            num_scalar_prefetch=0,
            grid=grid,
            in_specs=in_specs,
            out_specs=out_spec,
            scratch_shapes=scratch_shapes,
        ),
        compiler_params=pltpu.CompilerParams(
            dimension_semantics=("parallel",)),
    )(*inputs)

    # (N, Ho, Wo*Cpad) -> (N, Ho, Wo, out_dim): keep only the real channel(s).
    out = out2d.reshape(n, ho_last, wo_last, cpad)[..., :out_dim]
    return out


# ----------------------------------------------------------------------------
# Pure-JAX reference (for correctness check only)
# ----------------------------------------------------------------------------
def _ref_forward(x, label, params):
    def conv(h, w, b, stride):
        y = jax.lax.conv_general_dilated(
            h, w, (stride, stride), [(1, 1), (1, 1)],
            dimension_numbers=("NHWC", "HWIO", "NHWC"))
        return y + b

    def lrelu(h):
        return jnp.where(h > 0, h, LRELU_SLOPE * h)

    def inorm(h):
        m = jnp.mean(h, axis=(1, 2), keepdims=True)
        v = jnp.mean((h - m) ** 2, axis=(1, 2), keepdims=True)
        return (h - m) * jax.lax.rsqrt(v + IN_EPS)

    (w1, b1), (w2, b2), (w3, b3), (w4, b4), (w5, b5) = params
    h = jnp.concatenate([x, label], axis=-1)
    h = conv(h, w1, b1, 2)
    h = inorm(conv(lrelu(h), w2, b2, 2))
    h = inorm(conv(lrelu(h), w3, b3, 2))
    h = inorm(conv(lrelu(h), w4, b4, 1))
    h = conv(lrelu(h), w5, b5, 1)
    return jax.nn.sigmoid(h)


if __name__ == "__main__":
    # Small shapes consistent with the module:
    #   x: N=2, 3 channels, 32x32 spatial; label: 1 channel -> input_dim = 4
    #   num_filter = 8, output_dim = 1  (32 is the minimum spatial size that
    #   survives three stride-2 and two stride-1 4x4 convs).
    key = jax.random.PRNGKey(0)
    kx, kl, kp = jax.random.split(key, 3)
    batch, spatial = 2, 32
    x = jax.random.normal(kx, (batch, spatial, spatial, 3), jnp.float32)
    label = jax.random.normal(kl, (batch, spatial, spatial, 1), jnp.float32)

    params = init_discriminator_params(kp, input_dim=4, num_filter=8,
                                       output_dim=1)

    out = jax.block_until_ready(discriminator_forward(x, label, params))
    ref = jax.block_until_ready(_ref_forward(x, label, params))

    assert out.shape == ref.shape == (batch, 2, 2, 1), out.shape
    # bf16 matmul operands + approx reciprocal in the sigmoid -> loosen the
    # f32-reference tolerance (a structural bug would show up as >> 3e-2).
    err = float(jnp.max(jnp.abs(out - ref)))
    assert jnp.allclose(out, ref, rtol=0.0, atol=3e-2), err

    print("KERNEL_OK")
</pallas_src>

<mosaic_0001>
module attributes {stable_mosaic.version = 11 : i64} {
  func.func @_disc_kernel(%arg0: i32, %arg1: memref<1x32x128xf32, #tpu.memory_space<vmem>>, %arg2: memref<512x128xbf16, #tpu.memory_space<vmem>>, %arg3: memref<1x128xf32, #tpu.memory_space<vmem>>, %arg4: memref<512x128xbf16, #tpu.memory_space<vmem>>, %arg5: memref<1x128xf32, #tpu.memory_space<vmem>>, %arg6: memref<512x128xbf16, #tpu.memory_space<vmem>>, %arg7: memref<1x128xf32, #tpu.memory_space<vmem>>, %arg8: memref<512x192xbf16, #tpu.memory_space<vmem>>, %arg9: memref<1x192xf32, #tpu.memory_space<vmem>>, %arg10: memref<768x128xbf16, #tpu.memory_space<vmem>>, %arg11: memref<1x128xf32, #tpu.memory_space<vmem>>, %arg12: memref<1x2x128xf32, #tpu.memory_space<vmem>>, %arg13: memref<34x128xf32, #tpu.memory_space<vmem>>, %arg14: memref<18x128xf32, #tpu.memory_space<vmem>>, %arg15: memref<10x128xf32, #tpu.memory_space<vmem>>, %arg16: memref<6x128xf32, #tpu.memory_space<vmem>>, %arg17: memref<5x192xf32, #tpu.memory_space<vmem>>) attributes {dimension_semantics = [#tpu.dimension_semantics<parallel>], iteration_bounds = array<i64: 2>, scalar_prefetch = 0 : i64, scratch_operands = 5 : i64, tpu.core_type = #tpu.core_type<tc>, window_params = [{transform_indices = @transform_0, window_bounds = array<i64: 1, 32, 128>}, {pipeline_mode = #tpu.pipeline_mode<synchronous>, transform_indices = @transform_1, window_bounds = array<i64: 512, 128>}, {pipeline_mode = #tpu.pipeline_mode<synchronous>, transform_indices = @transform_2, window_bounds = array<i64: 1, 128>}, {pipeline_mode = #tpu.pipeline_mode<synchronous>, transform_indices = @transform_3, window_bounds = array<i64: 512, 128>}, {pipeline_mode = #tpu.pipeline_mode<synchronous>, transform_indices = @transform_4, window_bounds = array<i64: 1, 128>}, {pipeline_mode = #tpu.pipeline_mode<synchronous>, transform_indices = @transform_5, window_bounds = array<i64: 512, 128>}, {pipeline_mode = #tpu.pipeline_mode<synchronous>, transform_indices = @transform_6, window_bounds = array<i64: 1, 128>}, {pipeline_mode = #tpu.pipeline_mode<synchronous>, transform_indices = @transform_7, window_bounds = array<i64: 512, 192>}, {pipeline_mode = #tpu.pipeline_mode<synchronous>, transform_indices = @transform_8, window_bounds = array<i64: 1, 192>}, {pipeline_mode = #tpu.pipeline_mode<synchronous>, transform_indices = @transform_9, window_bounds = array<i64: 768, 128>}, {pipeline_mode = #tpu.pipeline_mode<synchronous>, transform_indices = @transform_10, window_bounds = array<i64: 1, 128>}, {transform_indices = @transform_11, window_bounds = array<i64: 1, 2, 128>}]} {
    %c0 = arith.constant 0 : index
    %c0_0 = arith.constant 0 : index
    %c0_1 = arith.constant 0 : index
    %0 = vector.load %arg1[%c0, %c0_0, %c0_1] : memref<1x32x128xf32, #tpu.memory_space<vmem>>, vector<1x32x128xf32>
    %1 = vector.shape_cast %0 : vector<1x32x128xf32> to vector<32x128xf32>
    %cst = arith.constant 0.000000e+00 : f32
    %2 = vector.broadcast %cst : f32 to vector<34x128xf32>
    %c0_2 = arith.constant 0 : index
    %c0_3 = arith.constant 0 : index
    %3 = vector.load %arg13[%c0_2, %c0_3] : memref<34x128xf32, #tpu.memory_space<vmem>>, vector<34x128xf32>
    tpu.vector_store %arg13[%c0_2, %c0_3], %2 {strides = array<i32>} : memref<34x128xf32, #tpu.memory_space<vmem>>, vector<34x128xf32>,
    %c1 = arith.constant 1 : index
    %c0_4 = arith.constant 0 : index
    %4 = vector.load %arg13[%c1, %c0_4] : memref<34x128xf32, #tpu.memory_space<vmem>>, vector<32x128xf32>
    tpu.vector_store %arg13[%c1, %c0_4], %1 {strides = array<i32>} : memref<34x128xf32, #tpu.memory_space<vmem>>, vector<32x128xf32>,
    %c0_5 = arith.constant 0 : index
    %c0_6 = arith.constant 0 : index
    %5 = tpu.strided_load %arg13[%c0_5, %c0_6] {strides = array<i32: 2, 1>} : memref<34x128xf32, #tpu.memory_space<vmem>>, vector<16x128xf32>
    %c1_7 = arith.constant 1 : index
    %c0_8 = arith.constant 0 : index
    %6 = tpu.strided_load %arg13[%c1_7, %c0_8] {strides = array<i32: 2, 1>} : memref<34x128xf32, #tpu.memory_space<vmem>>, vector<16x128xf32>
    %c2 = arith.constant 2 : index
    %c0_9 = arith.constant 0 : index
    %7 = tpu.strided_load %arg13[%c2, %c0_9] {strides = array<i32: 2, 1>} : memref<34x128xf32, #tpu.memory_space<vmem>>, vector<16x128xf32>
    %c3 = arith.constant 3 : index
    %c0_10 = arith.constant 0 : index
    %8 = tpu.strided_load %arg13[%c3, %c0_10] {strides = array<i32: 2, 1>} : memref<34x128xf32, #tpu.memory_space<vmem>>, vector<16x128xf32>
    %9 = tpu.concatenate %5, %6, %7, %8 in 1 : vector<16x128xf32>, vector<16x128xf32>, vector<16x128xf32>, vector<16x128xf32> -> vector<16x512xf32>
    %10 = arith.truncf %9 : vector<16x512xf32> to vector<16x512xbf16>
    %c0_11 = arith.constant 0 : index
    %c0_12 = arith.constant 0 : index
    %11 = vector.load %arg2[%c0_11, %c0_12] : memref<512x128xbf16, #tpu.memory_space<vmem>>, vector<512x128xbf16>
    %cst_13 = arith.constant dense<0.000000e+00> : vector<16x128xf32>
    %12 = tpu.matmul %10, %11, %cst_13 {dimension_numbers = #tpu.dot_dimension_numbers<[1], [0], [0], [1], [0, 0, 1, 1], [], []>} : vector<16x512xbf16>, vector<512x128xbf16>, vector<16x128xf32> -> vector<16x128xf32>
    %c0_14 = arith.constant 0 : index
    %c0_15 = arith.constant 0 : index
    %13 = vector.load %arg3[%c0_14, %c0_15] : memref<1x128xf32, #tpu.memory_space<vmem>>, vector<1x128xf32>
    %14 = vector.broadcast %13 : vector<1x128xf32> to vector<16x128xf32>
    %15 = arith.addf %12, %14 : vector<16x128xf32>
    %cst_16 = arith.constant 0.000000e+00 : f32
    %16 = vector.broadcast %cst_16 : f32 to vector<16x128xf32>
    %17 = arith.cmpf ogt, %15, %16 : vector<16x128xf32>
    %cst_17 = arith.constant 2.000000e-01 : f32
    %18 = vector.broadcast %cst_17 : f32 to vector<16x128xf32>
    %19 = arith.mulf %18, %15 : vector<16x128xf32>
    %20 = arith.select %17, %15, %19 : vector<16x128xi1>, vector<16x128xf32>
    %cst_18 = arith.constant 0.000000e+00 : f32
    %21 = vector.broadcast %cst_18 : f32 to vector<18x128xf32>
    %c0_19 = arith.constant 0 : index
    %c0_20 = arith.constant 0 : index
    %22 = vector.load %arg14[%c0_19, %c0_20] : memref<18x128xf32, #tpu.memory_space<vmem>>, vector<18x128xf32>
    tpu.vector_store %arg14[%c0_19, %c0_20], %21 {strides = array<i32>} : memref<18x128xf32, #tpu.memory_space<vmem>>, vector<18x128xf32>,
    %c1_21 = arith.constant 1 : index
    %c0_22 = arith.constant 0 : index
    %23 = vector.load %arg14[%c1_21, %c0_22] : memref<18x128xf32, #tpu.memory_space<vmem>>, vector<16x128xf32>
    tpu.vector_store %arg14[%c1_21, %c0_22], %20 {strides = array<i32>} : memref<18x128xf32, #tpu.memory_space<vmem>>, vector<16x128xf32>,
    %c0_23 = arith.constant 0 : index
    %c0_24 = arith.constant 0 : index
    %24 = tpu.strided_load %arg14[%c0_23, %c0_24] {strides = array<i32: 2, 1>} : memref<18x128xf32, #tpu.memory_space<vmem>>, vector<8x128xf32>
    %c1_25 = arith.constant 1 : index
    %c0_26 = arith.constant 0 : index
    %25 = tpu.strided_load %arg14[%c1_25, %c0_26] {strides = array<i32: 2, 1>} : memref<18x128xf32, #tpu.memory_space<vmem>>, vector<8x128xf32>
    %c2_27 = arith.constant 2 : index
    %c0_28 = arith.constant 0 : index
    %26 = tpu.strided_load %arg14[%c2_27, %c0_28] {strides = array<i32: 2, 1>} : memref<18x128xf32, #tpu.memory_space<vmem>>, vector<8x128xf32>
    %c3_29 = arith.constant 3 : index
    %c0_30 = arith.constant 0 : index
    %27 = tpu.strided_load %arg14[%c3_29, %c0_30] {strides = array<i32: 2, 1>} : memref<18x128xf32, #tpu.memory_space<vmem>>, vector<8x128xf32>
    %28 = tpu.concatenate %24, %25, %26, %27 in 1 : vector<8x128xf32>, vector<8x128xf32>, vector<8x128xf32>, vector<8x128xf32> -> vector<8x512xf32>
    %29 = arith.truncf %28 : vector<8x512xf32> to vector<8x512xbf16>
    %c0_31 = arith.constant 0 : index
    %c0_32 = arith.constant 0 : index
    %30 = vector.load %arg4[%c0_31, %c0_32] : memref<512x128xbf16, #tpu.memory_space<vmem>>, vector<512x128xbf16>
    %cst_33 = arith.constant dense<0.000000e+00> : vector<8x128xf32>
    %31 = tpu.matmul %29, %30, %cst_33 {dimension_numbers = #tpu.dot_dimension_numbers<[1], [0], [0], [1], [0, 0, 1, 1], [], []>} : vector<8x512xbf16>, vector<512x128xbf16>, vector<8x128xf32> -> vector<8x128xf32>
    %c0_34 = arith.constant 0 : index
    %c0_35 = arith.constant 0 : index
    %32 = vector.load %arg5[%c0_34, %c0_35] : memref<1x128xf32, #tpu.memory_space<vmem>>, vector<1x128xf32>
    %33 = vector.broadcast %32 : vector<1x128xf32> to vector<8x128xf32>
    %34 = arith.addf %31, %33 : vector<8x128xf32>
    %35 = tpu.iota {dimensions = array<i32: 0>} : vector<128x128xi32>
    %c16_i32 = arith.constant 16 : i32
    %c0_i32 = arith.constant 0 : i32
    %36 = arith.cmpi eq, %c16_i32, %c0_i32 : i32
    %c1_i32 = arith.constant 1 : i32
    %37 = arith.select %36, %c1_i32, %c16_i32 : i32
    %38 = vector.broadcast %37 : i32 to vector<128x128xi32>
    %39 = arith.remsi %35, %38 : vector<128x128xi32>
    %c0_i32_36 = arith.constant 0 : i32
    %40 = vector.broadcast %c0_i32_36 : i32 to vector<128x128xi32>
    %41 = arith.cmpi ne, %39, %40 : vector<128x128xi32>
    %c0_i32_37 = arith.constant 0 : i32
    %42 = vector.broadcast %c0_i32_37 : i32 to vector<128x128xi32>
    %43 = arith.cmpi slt, %39, %42 : vector<128x128xi32>
    %c0_i32_38 = arith.constant 0 : i32
    %44 = arith.cmpi slt, %37, %c0_i32_38 : i32
    %45 = vector.broadcast %44 : i1 to vector<128x128xi1>
    %46 = vector.broadcast %45 : vector<128x128xi1> to vector<128x128xi1>
    %47 = arith.xori %43, %46 : vector<128x128xi1>
    %48 = arith.andi %47, %41 : vector<128x128xi1>
    %49 = vector.broadcast %37 : i32 to vector<128x128xi32>
    %50 = arith.addi %39, %49 : vector<128x128xi32>
    %51 = arith.select %48, %50, %39 : vector<128x128xi1>, vector<128x128xi32>
    %52 = tpu.iota {dimensions = array<i32: 1>} : vector<128x128xi32>
    %c16_i32_39 = arith.constant 16 : i32
    %c0_i32_40 = arith.constant 0 : i32
    %53 = arith.cmpi eq, %c16_i32_39, %c0_i32_40 : i32
    %c1_i32_41 = arith.constant 1 : i32
    %54 = arith.select %53, %c1_i32_41, %c16_i32_39 : i32
    %55 = vector.broadcast %54 : i32 to vector<128x128xi32>
    %56 = arith.remsi %52, %55 : vector<128x128xi32>
    %c0_i32_42 = arith.constant 0 : i32
    %57 = vector.broadcast %c0_i32_42 : i32 to vector<128x128xi32>
    %58 = arith.cmpi ne, %56, %57 : vector<128x128xi32>
    %c0_i32_43 = arith.constant 0 : i32
    %59 = vector.broadcast %c0_i32_43 : i32 to vector<128x128xi32>
    %60 = arith.cmpi slt, %56, %59 : vector<128x128xi32>
    %c0_i32_44 = arith.constant 0 : i32
    %61 = arith.cmpi slt, %54, %c0_i32_44 : i32
    %62 = vector.broadcast %61 : i1 to vector<128x128xi1>
    %63 = vector.broadcast %62 : vector<128x128xi1> to vector<128x128xi1>
    %64 = arith.xori %60, %63 : vector<128x128xi1>
    %65 = arith.andi %64, %58 : vector<128x128xi1>
    %66 = vector.broadcast %54 : i32 to vector<128x128xi32>
    %67 = arith.addi %56, %66 : vector<128x128xi32>
    %68 = arith.select %65, %67, %56 : vector<128x128xi1>, vector<128x128xi32>
    %69 = arith.cmpi eq, %51, %68 : vector<128x128xi32>
    %70 = arith.extui %69 : vector<128x128xi1> to vector<128x128xi32>
    %71 = arith.sitofp %70 : vector<128x128xi32> to vector<128x128xf32>
    %cst_45 = arith.constant dense<0.000000e+00> : vector<8xf32>
    %72 = vector.multi_reduction <add>, %34, %cst_45 [1] : vector<8x128xf32> to vector<8xf32>
    %73 = vector.shape_cast %72 : vector<8xf32> to vector<8x1xf32>
    %cst_46 = arith.constant 1.280000e+02 : f32
    %74 = vector.broadcast %cst_46 : f32 to vector<8x1xf32>
    %75 = arith.divf %73, %74 : vector<8x1xf32>
    %cst_47 = arith.constant dense<0.000000e+00> : vector<1xf32>
    %76 = vector.multi_reduction <add>, %75, %cst_47 [0] : vector<8x1xf32> to vector<1xf32>
    %77 = vector.shape_cast %76 : vector<1xf32> to vector<1x1xf32>
    %cst_48 = arith.constant 8.000000e+00 : f32
    %78 = vector.broadcast %cst_48 : f32 to vector<1x1xf32>
    %79 = arith.divf %77, %78 : vector<1x1xf32>
    %80 = vector.broadcast %79 : vector<1x1xf32> to vector<8x128xf32>
    %81 = arith.subf %34, %80 : vector<8x128xf32>
    %cst_49 = arith.constant dense<0.000000e+00> : vector<128xf32>
    %82 = vector.multi_reduction <add>, %81, %cst_49 [0] : vector<8x128xf32> to vector<128xf32>
    %83 = vector.shape_cast %82 : vector<128xf32> to vector<1x128xf32>
    %84 = arith.mulf %81, %81 : vector<8x128xf32>
    %cst_50 = arith.constant dense<0.000000e+00> : vector<128xf32>
    %85 = vector.multi_reduction <add>, %84, %cst_50 [0] : vector<8x128xf32> to vector<128xf32>
    %86 = vector.shape_cast %85 : vector<128xf32> to vector<1x128xf32>
    %87 = tpu.concatenate %83, %86 in 0 : vector<1x128xf32>, vector<1x128xf32> -> vector<2x128xf32>
    %cst_51 = arith.constant dense<0.000000e+00> : vector<2x128xf32>
    %88 = tpu.matmul %87, %71, %cst_51 {dimension_numbers = #tpu.dot_dimension_numbers<[1], [0], [0], [1], [0, 0, 1, 1], [], []>} : vector<2x128xf32>, vector<128x128xf32>, vector<2x128xf32> -> vector<2x128xf32>
    %cst_52 = arith.constant 1.562500e-02 : f32
    %89 = vector.broadcast %cst_52 : f32 to vector<2x128xf32>
    %90 = arith.mulf %88, %89 : vector<2x128xf32>
    %91 = vector.extract_strided_slice %90 {offsets = [0, 0], sizes = [1, 128], strides = [1, 1]} : vector<2x128xf32> to vector<1x128xf32>
    %92 = vector.extract_strided_slice %90 {offsets = [1, 0], sizes = [1, 128], strides = [1, 1]} : vector<2x128xf32> to vector<1x128xf32>
    %93 = arith.mulf %91, %91 : vector<1x128xf32>
    %94 = arith.subf %92, %93 : vector<1x128xf32>
    %95 = vector.broadcast %91 : vector<1x128xf32> to vector<8x128xf32>
    %96 = arith.subf %81, %95 : vector<8x128xf32>
    %cst_53 = arith.constant 9.99999974E-6 : f32
    %97 = vector.broadcast %cst_53 : f32 to vector<1x128xf32>
    %98 = arith.addf %94, %97 : vector<1x128xf32>
    %99 = math.rsqrt %98 : vector<1x128xf32>
    %100 = vector.broadcast %99 : vector<1x128xf32> to vector<8x128xf32>
    %101 = arith.mulf %96, %100 : vector<8x128xf32>
    %cst_54 = arith.constant 0.000000e+00 : f32
    %102 = vector.broadcast %cst_54 : f32 to vector<8x128xf32>
    %103 = arith.cmpf ogt, %101, %102 : vector<8x128xf32>
    %cst_55 = arith.constant 2.000000e-01 : f32
    %104 = vector.broadcast %cst_55 : f32 to vector<8x128xf32>
    %105 = arith.mulf %104, %101 : vector<8x128xf32>
    %106 = arith.select %103, %101, %105 : vector<8x128xi1>, vector<8x128xf32>
    %cst_56 = arith.constant 0.000000e+00 : f32
    %107 = vector.broadcast %cst_56 : f32 to vector<10x128xf32>
    %c0_57 = arith.constant 0 : index
    %c0_58 = arith.constant 0 : index
    %108 = vector.load %arg15[%c0_57, %c0_58] : memref<10x128xf32, #tpu.memory_space<vmem>>, vector<10x128xf32>
    tpu.vector_store %arg15[%c0_57, %c0_58], %107 {strides = array<i32>} : memref<10x128xf32, #tpu.memory_space<vmem>>, vector<10x128xf32>,
    %c1_59 = arith.constant 1 : index
    %c0_60 = arith.constant 0 : index
    %109 = vector.load %arg15[%c1_59, %c0_60] : memref<10x128xf32, #tpu.memory_space<vmem>>, vector<8x128xf32>
    tpu.vector_store %arg15[%c1_59, %c0_60], %106 {strides = array<i32>} : memref<10x128xf32, #tpu.memory_space<vmem>>, vector<8x128xf32>,
    %c0_61 = arith.constant 0 : index
    %c0_62 = arith.constant 0 : index
    %110 = tpu.strided_load %arg15[%c0_61, %c0_62] {strides = array<i32: 2, 1>} : memref<10x128xf32, #tpu.memory_space<vmem>>, vector<4x128xf32>
    %c1_63 = arith.constant 1 : index
    %c0_64 = arith.constant 0 : index
    %111 = tpu.strided_load %arg15[%c1_63, %c0_64] {strides = array<i32: 2, 1>} : memref<10x128xf32, #tpu.memory_space<vmem>>, vector<4x128xf32>
    %c2_65 = arith.constant 2 : index
    %c0_66 = arith.constant 0 : index
    %112 = tpu.strided_load %arg15[%c2_65, %c0_66] {strides = array<i32: 2, 1>} : memref<10x128xf32, #tpu.memory_space<vmem>>, vector<4x128xf32>
    %c3_67 = arith.constant 3 : index
    %c0_68 = arith.constant 0 : index
    %113 = tpu.strided_load %arg15[%c3_67, %c0_68] {strides = array<i32: 2, 1>} : memref<10x128xf32, #tpu.memory_space<vmem>>, vector<4x128xf32>
    %114 = tpu.concatenate %110, %111, %112, %113 in 1 : vector<4x128xf32>, vector<4x128xf32>, vector<4x128xf32>, vector<4x128xf32> -> vector<4x512xf32>
    %115 = arith.truncf %114 : vector<4x512xf32> to vector<4x512xbf16>
    %c0_69 = arith.constant 0 : index
    %c0_70 = arith.constant 0 : index
    %116 = vector.load %arg6[%c0_69, %c0_70] : memref<512x128xbf16, #tpu.memory_space<vmem>>, vector<512x128xbf16>
    %cst_71 = arith.constant dense<0.000000e+00> : vector<4x128xf32>
    %117 = tpu.matmul %115, %116, %cst_71 {dimension_numbers = #tpu.dot_dimension_numbers<[1], [0], [0], [1], [0, 0, 1, 1], [], []>} : vector<4x512xbf16>, vector<512x128xbf16>, vector<4x128xf32> -> vector<4x128xf32>
    %c0_72 = arith.constant 0 : index
    %c0_73 = arith.constant 0 : index
    %118 = vector.load %arg7[%c0_72, %c0_73] : memref<1x128xf32, #tpu.memory_space<vmem>>, vector<1x128xf32>
    %119 = vector.broadcast %118 : vector<1x128xf32> to vector<4x128xf32>
    %120 = arith.addf %117, %119 : vector<4x128xf32>
    %121 = tpu.iota {dimensions = array<i32: 0>} : vector<128x128xi32>
    %c32_i32 = arith.constant 32 : i32
    %c0_i32_74 = arith.constant 0 : i32
    %122 = arith.cmpi eq, %c32_i32, %c0_i32_74 : i32
    %c1_i32_75 = arith.constant 1 : i32
    %123 = arith.select %122, %c1_i32_75, %c32_i32 : i32
    %124 = vector.broadcast %123 : i32 to vector<128x128xi32>
    %125 = arith.remsi %121, %124 : vector<128x128xi32>
    %c0_i32_76 = arith.constant 0 : i32
    %126 = vector.broadcast %c0_i32_76 : i32 to vector<128x128xi32>
    %127 = arith.cmpi ne, %125, %126 : vector<128x128xi32>
    %c0_i32_77 = arith.constant 0 : i32
    %128 = vector.broadcast %c0_i32_77 : i32 to vector<128x128xi32>
    %129 = arith.cmpi slt, %125, %128 : vector<128x128xi32>
    %c0_i32_78 = arith.constant 0 : i32
    %130 = arith.cmpi slt, %123, %c0_i32_78 : i32
    %131 = vector.broadcast %130 : i1 to vector<128x128xi1>
    %132 = vector.broadcast %131 : vector<128x128xi1> to vector<128x128xi1>
    %133 = arith.xori %129, %132 : vector<128x128xi1>
    %134 = arith.andi %133, %127 : vector<128x128xi1>
    %135 = vector.broadcast %123 : i32 to vector<128x128xi32>
    %136 = arith.addi %125, %135 : vector<128x128xi32>
    %137 = arith.select %134, %136, %125 : vector<128x128xi1>, vector<128x128xi32>
    %138 = tpu.iota {dimensions = array<i32: 1>} : vector<128x128xi32>
    %c32_i32_79 = arith.constant 32 : i32
    %c0_i32_80 = arith.constant 0 : i32
    %139 = arith.cmpi eq, %c32_i32_79, %c0_i32_80 : i32
    %c1_i32_81 = arith.constant 1 : i32
    %140 = arith.select %139, %c1_i32_81, %c32_i32_79 : i32
    %141 = vector.broadcast %140 : i32 to vector<128x128xi32>
    %142 = arith.remsi %138, %141 : vector<128x128xi32>
    %c0_i32_82 = arith.constant 0 : i32
    %143 = vector.broadcast %c0_i32_82 : i32 to vector<128x128xi32>
    %144 = arith.cmpi ne, %142, %143 : vector<128x128xi32>
    %c0_i32_83 = arith.constant 0 : i32
    %145 = vector.broadcast %c0_i32_83 : i32 to vector<128x128xi32>
    %146 = arith.cmpi slt, %142, %145 : vector<128x128xi32>
    %c0_i32_84 = arith.constant 0 : i32
    %147 = arith.cmpi slt, %140, %c0_i32_84 : i32
    %148 = vector.broadcast %147 : i1 to vector<128x128xi1>
    %149 = vector.broadcast %148 : vector<128x128xi1> to vector<128x128xi1>
    %150 = arith.xori %146, %149 : vector<128x128xi1>
    %151 = arith.andi %150, %144 : vector<128x128xi1>
    %152 = vector.broadcast %140 : i32 to vector<128x128xi32>
    %153 = arith.addi %142, %152 : vector<128x128xi32>
    %154 = arith.select %151, %153, %142 : vector<128x128xi1>, vector<128x128xi32>
    %155 = arith.cmpi eq, %137, %154 : vector<128x128xi32>
    %156 = arith.extui %155 : vector<128x128xi1> to vector<128x128xi32>
    %157 = arith.sitofp %156 : vector<128x128xi32> to vector<128x128xf32>
    %cst_85 = arith.constant dense<0.000000e+00> : vector<4xf32>
    %158 = vector.multi_reduction <add>, %120, %cst_85 [1] : vector<4x128xf32> to vector<4xf32>
    %159 = vector.shape_cast %158 : vector<4xf32> to vector<4x1xf32>
    %cst_86 = arith.constant 1.280000e+02 : f32
    %160 = vector.broadcast %cst_86 : f32 to vector<4x1xf32>
    %161 = arith.divf %159, %160 : vector<4x1xf32>
    %cst_87 = arith.constant dense<0.000000e+00> : vector<1xf32>
    %162 = vector.multi_reduction <add>, %161, %cst_87 [0] : vector<4x1xf32> to vector<1xf32>
    %163 = vector.shape_cast %162 : vector<1xf32> to vector<1x1xf32>
    %cst_88 = arith.constant 4.000000e+00 : f32
    %164 = vector.broadcast %cst_88 : f32 to vector<1x1xf32>
    %165 = arith.divf %163, %164 : vector<1x1xf32>
    %166 = vector.broadcast %165 : vector<1x1xf32> to vector<4x128xf32>
    %167 = arith.subf %120, %166 : vector<4x128xf32>
    %cst_89 = arith.constant dense<0.000000e+00> : vector<128xf32>
    %168 = vector.multi_reduction <add>, %167, %cst_89 [0] : vector<4x128xf32> to vector<128xf32>
    %169 = vector.shape_cast %168 : vector<128xf32> to vector<1x128xf32>
    %170 = arith.mulf %167, %167 : vector<4x128xf32>
    %cst_90 = arith.constant dense<0.000000e+00> : vector<128xf32>
    %171 = vector.multi_reduction <add>, %170, %cst_90 [0] : vector<4x128xf32> to vector<128xf32>
    %172 = vector.shape_cast %171 : vector<128xf32> to vector<1x128xf32>
    %173 = tpu.concatenate %169, %172 in 0 : vector<1x128xf32>, vector<1x128xf32> -> vector<2x128xf32>
    %cst_91 = arith.constant dense<0.000000e+00> : vector<2x128xf32>
    %174 = tpu.matmul %173, %157, %cst_91 {dimension_numbers = #tpu.dot_dimension_numbers<[1], [0], [0], [1], [0, 0, 1, 1], [], []>} : vector<2x128xf32>, vector<128x128xf32>, vector<2x128xf32> -> vector<2x128xf32>
    %cst_92 = arith.constant 6.250000e-02 : f32
    %175 = vector.broadcast %cst_92 : f32 to vector<2x128xf32>
    %176 = arith.mulf %174, %175 : vector<2x128xf32>
    %177 = vector.extract_strided_slice %176 {offsets = [0, 0], sizes = [1, 128], strides = [1, 1]} : vector<2x128xf32> to vector<1x128xf32>
    %178 = vector.extract_strided_slice %176 {offsets = [1, 0], sizes = [1, 128], strides = [1, 1]} : vector<2x128xf32> to vector<1x128xf32>
    %179 = arith.mulf %177, %177 : vector<1x128xf32>
    %180 = arith.subf %178, %179 : vector<1x128xf32>
    %181 = vector.broadcast %177 : vector<1x128xf32> to vector<4x128xf32>
    %182 = arith.subf %167, %181 : vector<4x128xf32>
    %cst_93 = arith.constant 9.99999974E-6 : f32
    %183 = vector.broadcast %cst_93 : f32 to vector<1x128xf32>
    %184 = arith.addf %180, %183 : vector<1x128xf32>
    %185 = math.rsqrt %184 : vector<1x128xf32>
    %186 = vector.broadcast %185 : vector<1x128xf32> to vector<4x128xf32>
    %187 = arith.mulf %182, %186 : vector<4x128xf32>
    %cst_94 = arith.constant 0.000000e+00 : f32
    %188 = vector.broadcast %cst_94 : f32 to vector<4x128xf32>
    %189 = arith.cmpf ogt, %187, %188 : vector<4x128xf32>
    %cst_95 = arith.constant 2.000000e-01 : f32
    %190 = vector.broadcast %cst_95 : f32 to vector<4x128xf32>
    %191 = arith.mulf %190, %187 : vector<4x128xf32>
    %192 = arith.select %189, %187, %191 : vector<4x128xi1>, vector<4x128xf32>
    %cst_96 = arith.constant 0.000000e+00 : f32
    %193 = vector.broadcast %cst_96 : f32 to vector<6x128xf32>
    %c0_97 = arith.constant 0 : index
    %c0_98 = arith.constant 0 : index
    %194 = vector.load %arg16[%c0_97, %c0_98] : memref<6x128xf32, #tpu.memory_space<vmem>>, vector<6x128xf32>
    tpu.vector_store %arg16[%c0_97, %c0_98], %193 {strides = array<i32>} : memref<6x128xf32, #tpu.memory_space<vmem>>, vector<6x128xf32>,
    %c1_99 = arith.constant 1 : index
    %c0_100 = arith.constant 0 : index
    %195 = vector.load %arg16[%c1_99, %c0_100] : memref<6x128xf32, #tpu.memory_space<vmem>>, vector<4x128xf32>
    tpu.vector_store %arg16[%c1_99, %c0_100], %192 {strides = array<i32>} : memref<6x128xf32, #tpu.memory_space<vmem>>, vector<4x128xf32>,
    %c0_101 = arith.constant 0 : index
    %c0_102 = arith.constant 0 : index
    %196 = vector.load %arg16[%c0_101, %c0_102] : memref<6x128xf32, #tpu.memory_space<vmem>>, vector<3x128xf32>
    %c1_103 = arith.constant 1 : index
    %c0_104 = arith.constant 0 : index
    %197 = vector.load %arg16[%c1_103, %c0_104] : memref<6x128xf32, #tpu.memory_space<vmem>>, vector<3x128xf32>
    %c2_105 = arith.constant 2 : index
    %c0_106 = arith.constant 0 : index
    %198 = vector.load %arg16[%c2_105, %c0_106] : memref<6x128xf32, #tpu.memory_space<vmem>>, vector<3x128xf32>
    %c3_107 = arith.constant 3 : index
    %c0_108 = arith.constant 0 : index
    %199 = vector.load %arg16[%c3_107, %c0_108] : memref<6x128xf32, #tpu.memory_space<vmem>>, vector<3x128xf32>
    %200 = tpu.concatenate %196, %197, %198, %199 in 1 : vector<3x128xf32>, vector<3x128xf32>, vector<3x128xf32>, vector<3x128xf32> -> vector<3x512xf32>
    %201 = arith.truncf %200 : vector<3x512xf32> to vector<3x512xbf16>
    %c0_109 = arith.constant 0 : index
    %c0_110 = arith.constant 0 : index
    %202 = vector.load %arg8[%c0_109, %c0_110] : memref<512x192xbf16, #tpu.memory_space<vmem>>, vector<512x192xbf16>
    %cst_111 = arith.constant dense<0.000000e+00> : vector<3x192xf32>
    %203 = tpu.matmul %201, %202, %cst_111 {dimension_numbers = #tpu.dot_dimension_numbers<[1], [0], [0], [1], [0, 0, 1, 1], [], []>} : vector<3x512xbf16>, vector<512x192xbf16>, vector<3x192xf32> -> vector<3x192xf32>
    %c0_112 = arith.constant 0 : index
    %c0_113 = arith.constant 0 : index
    %204 = vector.load %arg9[%c0_112, %c0_113] : memref<1x192xf32, #tpu.memory_space<vmem>>, vector<1x192xf32>
    %205 = vector.broadcast %204 : vector<1x192xf32> to vector<3x192xf32>
    %206 = arith.addf %203, %205 : vector<3x192xf32>
    %207 = tpu.iota {dimensions = array<i32: 0>} : vector<192x192xi32>
    %c64_i32 = arith.constant 64 : i32
    %c0_i32_114 = arith.constant 0 : i32
    %208 = arith.cmpi eq, %c64_i32, %c0_i32_114 : i32
    %c1_i32_115 = arith.constant 1 : i32
    %209 = arith.select %208, %c1_i32_115, %c64_i32 : i32
    %210 = vector.broadcast %209 : i32 to vector<192x192xi32>
    %211 = arith.remsi %207, %210 : vector<192x192xi32>
    %c0_i32_116 = arith.constant 0 : i32
    %212 = vector.broadcast %c0_i32_116 : i32 to vector<192x192xi32>
    %213 = arith.cmpi ne, %211, %212 : vector<192x192xi32>
    %c0_i32_117 = arith.constant 0 : i32
    %214 = vector.broadcast %c0_i32_117 : i32 to vector<192x192xi32>
    %215 = arith.cmpi slt, %211, %214 : vector<192x192xi32>
    %c0_i32_118 = arith.constant 0 : i32
    %216 = arith.cmpi slt, %209, %c0_i32_118 : i32
    %217 = vector.broadcast %216 : i1 to vector<192x192xi1>
    %218 = vector.broadcast %217 : vector<192x192xi1> to vector<192x192xi1>
    %219 = arith.xori %215, %218 : vector<192x192xi1>
    %220 = arith.andi %219, %213 : vector<192x192xi1>
    %221 = vector.broadcast %209 : i32 to vector<192x192xi32>
    %222 = arith.addi %211, %221 : vector<192x192xi32>
    %223 = arith.select %220, %222, %211 : vector<192x192xi1>, vector<192x192xi32>
    %224 = tpu.iota {dimensions = array<i32: 1>} : vector<192x192xi32>
    %c64_i32_119 = arith.constant 64 : i32
    %c0_i32_120 = arith.constant 0 : i32
    %225 = arith.cmpi eq, %c64_i32_119, %c0_i32_120 : i32
    %c1_i32_121 = arith.constant 1 : i32
    %226 = arith.select %225, %c1_i32_121, %c64_i32_119 : i32
    %227 = vector.broadcast %226 : i32 to vector<192x192xi32>
    %228 = arith.remsi %224, %227 : vector<192x192xi32>
    %c0_i32_122 = arith.constant 0 : i32
    %229 = vector.broadcast %c0_i32_122 : i32 to vector<192x192xi32>
    %230 = arith.cmpi ne, %228, %229 : vector<192x192xi32>
    %c0_i32_123 = arith.constant 0 : i32
    %231 = vector.broadcast %c0_i32_123 : i32 to vector<192x192xi32>
    %232 = arith.cmpi slt, %228, %231 : vector<192x192xi32>
    %c0_i32_124 = arith.constant 0 : i32
    %233 = arith.cmpi slt, %226, %c0_i32_124 : i32
    %234 = vector.broadcast %233 : i1 to vector<192x192xi1>
    %235 = vector.broadcast %234 : vector<192x192xi1> to vector<192x192xi1>
    %236 = arith.xori %232, %235 : vector<192x192xi1>
    %237 = arith.andi %236, %230 : vector<192x192xi1>
    %238 = vector.broadcast %226 : i32 to vector<192x192xi32>
    %239 = arith.addi %228, %238 : vector<192x192xi32>
    %240 = arith.select %237, %239, %228 : vector<192x192xi1>, vector<192x192xi32>
    %241 = arith.cmpi eq, %223, %240 : vector<192x192xi32>
    %242 = arith.extui %241 : vector<192x192xi1> to vector<192x192xi32>
    %243 = arith.sitofp %242 : vector<192x192xi32> to vector<192x192xf32>
    %cst_125 = arith.constant dense<0.000000e+00> : vector<3xf32>
    %244 = vector.multi_reduction <add>, %206, %cst_125 [1] : vector<3x192xf32> to vector<3xf32>
    %245 = vector.shape_cast %244 : vector<3xf32> to vector<3x1xf32>
    %cst_126 = arith.constant 1.920000e+02 : f32
    %246 = vector.broadcast %cst_126 : f32 to vector<3x1xf32>
    %247 = arith.divf %245, %246 : vector<3x1xf32>
    %cst_127 = arith.constant dense<0.000000e+00> : vector<1xf32>
    %248 = vector.multi_reduction <add>, %247, %cst_127 [0] : vector<3x1xf32> to vector<1xf32>
    %249 = vector.shape_cast %248 : vector<1xf32> to vector<1x1xf32>
    %cst_128 = arith.constant 3.000000e+00 : f32
    %250 = vector.broadcast %cst_128 : f32 to vector<1x1xf32>
    %251 = arith.divf %249, %250 : vector<1x1xf32>
    %252 = vector.broadcast %251 : vector<1x1xf32> to vector<3x192xf32>
    %253 = arith.subf %206, %252 : vector<3x192xf32>
    %cst_129 = arith.constant dense<0.000000e+00> : vector<192xf32>
    %254 = vector.multi_reduction <add>, %253, %cst_129 [0] : vector<3x192xf32> to vector<192xf32>
    %255 = vector.shape_cast %254 : vector<192xf32> to vector<1x192xf32>
    %256 = arith.mulf %253, %253 : vector<3x192xf32>
    %cst_130 = arith.constant dense<0.000000e+00> : vector<192xf32>
    %257 = vector.multi_reduction <add>, %256, %cst_130 [0] : vector<3x192xf32> to vector<192xf32>
    %258 = vector.shape_cast %257 : vector<192xf32> to vector<1x192xf32>
    %259 = tpu.concatenate %255, %258 in 0 : vector<1x192xf32>, vector<1x192xf32> -> vector<2x192xf32>
    %cst_131 = arith.constant dense<0.000000e+00> : vector<2x192xf32>
    %260 = tpu.matmul %259, %243, %cst_131 {dimension_numbers = #tpu.dot_dimension_numbers<[1], [0], [0], [1], [0, 0, 1, 1], [], []>} : vector<2x192xf32>, vector<192x192xf32>, vector<2x192xf32> -> vector<2x192xf32>
    %cst_132 = arith.constant 0.111111112 : f32
    %261 = vector.broadcast %cst_132 : f32 to vector<2x192xf32>
    %262 = arith.mulf %260, %261 : vector<2x192xf32>
    %263 = vector.extract_strided_slice %262 {offsets = [0, 0], sizes = [1, 192], strides = [1, 1]} : vector<2x192xf32> to vector<1x192xf32>
    %264 = vector.extract_strided_slice %262 {offsets = [1, 0], sizes = [1, 192], strides = [1, 1]} : vector<2x192xf32> to vector<1x192xf32>
    %265 = arith.mulf %263, %263 : vector<1x192xf32>
    %266 = arith.subf %264, %265 : vector<1x192xf32>
    %267 = vector.broadcast %263 : vector<1x192xf32> to vector<3x192xf32>
    %268 = arith.subf %253, %267 : vector<3x192xf32>
    %cst_133 = arith.constant 9.99999974E-6 : f32
    %269 = vector.broadcast %cst_133 : f32 to vector<1x192xf32>
    %270 = arith.addf %266, %269 : vector<1x192xf32>
    %271 = math.rsqrt %270 : vector<1x192xf32>
    %272 = vector.broadcast %271 : vector<1x192xf32> to vector<3x192xf32>
    %273 = arith.mulf %268, %272 : vector<3x192xf32>
    %cst_134 = arith.constant 0.000000e+00 : f32
    %274 = vector.broadcast %cst_134 : f32 to vector<3x192xf32>
    %275 = arith.cmpf ogt, %273, %274 : vector<3x192xf32>
    %cst_135 = arith.constant 2.000000e-01 : f32
    %276 = vector.broadcast %cst_135 : f32 to vector<3x192xf32>
    %277 = arith.mulf %276, %273 : vector<3x192xf32>
    %278 = arith.select %275, %273, %277 : vector<3x192xi1>, vector<3x192xf32>
    %cst_136 = arith.constant 0.000000e+00 : f32
    %279 = vector.broadcast %cst_136 : f32 to vector<5x192xf32>
    %c0_137 = arith.constant 0 : index
    %c0_138 = arith.constant 0 : index
    %280 = vector.load %arg17[%c0_137, %c0_138] : memref<5x192xf32, #tpu.memory_space<vmem>>, vector<5x192xf32>
    tpu.vector_store %arg17[%c0_137, %c0_138], %279 {strides = array<i32>} : memref<5x192xf32, #tpu.memory_space<vmem>>, vector<5x192xf32>,
    %c1_139 = arith.constant 1 : index
    %c0_140 = arith.constant 0 : index
    %281 = vector.load %arg17[%c1_139, %c0_140] : memref<5x192xf32, #tpu.memory_space<vmem>>, vector<3x192xf32>
    tpu.vector_store %arg17[%c1_139, %c0_140], %278 {strides = array<i32>} : memref<5x192xf32, #tpu.memory_space<vmem>>, vector<3x192xf32>,
    %c0_141 = arith.constant 0 : index
    %c0_142 = arith.constant 0 : index
    %282 = vector.load %arg17[%c0_141, %c0_142] : memref<5x192xf32, #tpu.memory_space<vmem>>, vector<2x192xf32>
    %c1_143 = arith.constant 1 : index
    %c0_144 = arith.constant 0 : index
    %283 = vector.load %arg17[%c1_143, %c0_144] : memref<5x192xf32, #tpu.memory_space<vmem>>, vector<2x192xf32>
    %c2_145 = arith.constant 2 : index
    %c0_146 = arith.constant 0 : index
    %284 = vector.load %arg17[%c2_145, %c0_146] : memref<5x192xf32, #tpu.memory_space<vmem>>, vector<2x192xf32>
    %c3_147 = arith.constant 3 : index
    %c0_148 = arith.constant 0 : index
    %285 = vector.load %arg17[%c3_147, %c0_148] : memref<5x192xf32, #tpu.memory_space<vmem>>, vector<2x192xf32>
    %286 = tpu.concatenate %282, %283, %284, %285 in 1 : vector<2x192xf32>, vector<2x192xf32>, vector<2x192xf32>, vector<2x192xf32> -> vector<2x768xf32>
    %287 = arith.truncf %286 : vector<2x768xf32> to vector<2x768xbf16>
    %c0_149 = arith.constant 0 : index
    %c0_150 = arith.constant 0 : index
    %288 = vector.load %arg10[%c0_149, %c0_150] : memref<768x128xbf16, #tpu.memory_space<vmem>>, vector<768x128xbf16>
    %cst_151 = arith.constant dense<0.000000e+00> : vector<2x128xf32>
    %289 = tpu.matmul %287, %288, %cst_151 {dimension_numbers = #tpu.dot_dimension_numbers<[1], [0], [0], [1], [0, 0, 1, 1], [], []>} : vector<2x768xbf16>, vector<768x128xbf16>, vector<2x128xf32> -> vector<2x128xf32>
    %c0_152 = arith.constant 0 : index
    %c0_153 = arith.constant 0 : index
    %290 = vector.load %arg11[%c0_152, %c0_153] : memref<1x128xf32, #tpu.memory_space<vmem>>, vector<1x128xf32>
    %291 = vector.broadcast %290 : vector<1x128xf32> to vector<2x128xf32>
    %292 = arith.addf %289, %291 : vector<2x128xf32>
    %cst_154 = arith.constant 0.000000e+00 : f32
    %293 = vector.broadcast %cst_154 : f32 to vector<2x128xf32>
    %294 = arith.subf %293, %292 : vector<2x128xf32>
    %295 = math.exp %294 : vector<2x128xf32>
    %cst_155 = arith.constant 1.000000e+00 : f32
    %296 = vector.broadcast %cst_155 : f32 to vector<2x128xf32>
    %297 = arith.addf %296, %295 : vector<2x128xf32>
    %298 = tpu.reciprocal %297 {approx = true} : vector<2x128xf32> -> vector<2x128xf32>
    %c0_156 = arith.constant 0 : index
    %c0_157 = arith.constant 0 : index
    %c0_158 = arith.constant 0 : index
    %299 = vector.load %arg12[%c0_156, %c0_157, %c0_158] : memref<1x2x128xf32, #tpu.memory_space<vmem>>, vector<1x2x128xf32>
    %300 = vector.shape_cast %299 : vector<1x2x128xf32> to vector<2x128xf32>
    %301 = vector.shape_cast %298 : vector<2x128xf32> to vector<1x2x128xf32>
    tpu.vector_store %arg12[%c0_156, %c0_157, %c0_158], %301 {strides = array<i32>} : memref<1x2x128xf32, #tpu.memory_space<vmem>>, vector<1x2x128xf32>,
    return
  }
  func.func @transform_0(%arg0: i32) -> (i32, i32, i32) {
    %c0_i32 = arith.constant 0 : i32
    %c0_i32_0 = arith.constant 0 : i32
    %c0_i32_1 = arith.constant 0 : i32
    return %arg0, %c0_i32, %c0_i32_0 : i32, i32, i32
  }
  func.func @transform_1(%arg0: i32) -> (i32, i32) {
    %c0_i32 = arith.constant 0 : i32
    %c0_i32_0 = arith.constant 0 : i32
    %c0_i32_1 = arith.constant 0 : i32
    return %c0_i32, %c0_i32_0 : i32, i32
  }
  func.func @transform_2(%arg0: i32) -> (i32, i32) {
    %c0_i32 = arith.constant 0 : i32
    %c0_i32_0 = arith.constant 0 : i32
    %c0_i32_1 = arith.constant 0 : i32
    return %c0_i32, %c0_i32_0 : i32, i32
  }
  func.func @transform_3(%arg0: i32) -> (i32, i32) {
    %c0_i32 = arith.constant 0 : i32
    %c0_i32_0 = arith.constant 0 : i32
    %c0_i32_1 = arith.constant 0 : i32
    return %c0_i32, %c0_i32_0 : i32, i32
  }
  func.func @transform_4(%arg0: i32) -> (i32, i32) {
    %c0_i32 = arith.constant 0 : i32
    %c0_i32_0 = arith.constant 0 : i32
    %c0_i32_1 = arith.constant 0 : i32
    return %c0_i32, %c0_i32_0 : i32, i32
  }
  func.func @transform_5(%arg0: i32) -> (i32, i32) {
    %c0_i32 = arith.constant 0 : i32
    %c0_i32_0 = arith.constant 0 : i32
    %c0_i32_1 = arith.constant 0 : i32
    return %c0_i32, %c0_i32_0 : i32, i32
  }
  func.func @transform_6(%arg0: i32) -> (i32, i32) {
    %c0_i32 = arith.constant 0 : i32
    %c0_i32_0 = arith.constant 0 : i32
    %c0_i32_1 = arith.constant 0 : i32
    return %c0_i32, %c0_i32_0 : i32, i32
  }
  func.func @transform_7(%arg0: i32) -> (i32, i32) {
    %c0_i32 = arith.constant 0 : i32
    %c0_i32_0 = arith.constant 0 : i32
    %c0_i32_1 = arith.constant 0 : i32
    return %c0_i32, %c0_i32_0 : i32, i32
  }
  func.func @transform_8(%arg0: i32) -> (i32, i32) {
    %c0_i32 = arith.constant 0 : i32
    %c0_i32_0 = arith.constant 0 : i32
    %c0_i32_1 = arith.constant 0 : i32
    return %c0_i32, %c0_i32_0 : i32, i32
  }
  func.func @transform_9(%arg0: i32) -> (i32, i32) {
    %c0_i32 = arith.constant 0 : i32
    %c0_i32_0 = arith.constant 0 : i32
    %c0_i32_1 = arith.constant 0 : i32
    return %c0_i32, %c0_i32_0 : i32, i32
  }
  func.func @transform_10(%arg0: i32) -> (i32, i32) {
    %c0_i32 = arith.constant 0 : i32
    %c0_i32_0 = arith.constant 0 : i32
    %c0_i32_1 = arith.constant 0 : i32
    return %c0_i32, %c0_i32_0 : i32, i32
  }
  func.func @transform_11(%arg0: i32) -> (i32, i32, i32) {
    %c0_i32 = arith.constant 0 : i32
    %c0_i32_0 = arith.constant 0 : i32
    %c0_i32_1 = arith.constant 0 : i32
    return %arg0, %c0_i32, %c0_i32_0 : i32, i32, i32
  }
}

</mosaic_0001>

<llo_original>
// kernel: tpu_custom_call.1
$region0: #{tpu_custom_call.1}
  #allocation0 [shape = 'u32[]', space=smem, size = 0x4, offset = 0x4, fixed_abs, tag = 'smem constant byte address 0x4 - core index']
  #allocation1 [shape = 'u32[144,128]{1,0:T(1,128)}', space=vmem, size = 0x12000, scoped, tag = 'internal scratch']
  #allocation2 [shape = 'f32[34,128]{1,0:T(8,128)}', space=vmem, size = 0x5000, scoped, tag = 'scratch operand']
  #allocation3 [shape = 'f32[18,128]{1,0:T(8,128)}', space=vmem, size = 0x3000, scoped, tag = 'scratch operand']
  #allocation4 [shape = 'f32[10,128]{1,0:T(8,128)}', space=vmem, size = 0x2000, scoped, tag = 'scratch operand']
  #allocation5 [shape = 'f32[6,128]{1,0:T(8,128)}', space=vmem, size = 0x1000, scoped, tag = 'scratch operand']
  #allocation6 [shape = 'f32[5,192]{1,0:T(8,128)}', space=vmem, size = 0x2000, scoped, tag = 'scratch operand']
  %s0 = inlined_call_operand.hbm [shape: f32[2,32,128], index: 0, kind: input, shape index: {}]
  %s1 = inlined_call_operand.vmem [shape: bf16[512,128], index: 1, kind: input, shape index: {}]
  %s2 = inlined_call_operand.hbm [shape: f32[1,128], index: 2, kind: input, shape index: {}]
  %s3 = inlined_call_operand.vmem [shape: bf16[512,128], index: 3, kind: input, shape index: {}]
  %s4 = inlined_call_operand.hbm [shape: f32[1,128], index: 4, kind: input, shape index: {}]
  %s5 = inlined_call_operand.hbm [shape: bf16[512,128], index: 5, kind: input, shape index: {}]
  %s6 = inlined_call_operand.vmem [shape: f32[1,128], index: 6, kind: input, shape index: {}]
  %s7 = inlined_call_operand.vmem [shape: bf16[512,192], index: 7, kind: input, shape index: {}]
  %s8 = inlined_call_operand.vmem [shape: f32[1,192], index: 8, kind: input, shape index: {}]
  %s9 = inlined_call_operand.vmem [shape: bf16[768,128], index: 9, kind: input, shape index: {}]
  %s10 = inlined_call_operand.vmem [shape: f32[1,128], index: 10, kind: input, shape index: {}]
  %s11 = inlined_call_operand.hbm [shape: f32[2,2,128], index: 11, kind: output, shape index: {}]
  %s12 = sld [smem:[#allocation0]]
  $region93: #{tpu_custom_call.1} parent=0
    _
  %s14 = ssub.s32 1, %s12
  %s15 = scalar_select 0, %s14, %s12
  $region1: #{tpu_custom_call.1} parent=0
    #allocation7 [shape = 'u8[32768]{0}', space=vmem, size = 0x8000, scoped, tag = 'input window, operand 0']
    #allocation8 [shape = 's32[2]{0}', space=sflag, size = 0x8, scoped, tag = 'scoped memory for tpu_custom_call.1']
    #allocation9 [shape = 's32[2]{0}', space=sflag, size = 0x8, scoped, tag = 'scoped memory for tpu_custom_call.1']
    #allocation10 [shape = 'u8[512]{0}', space=vmem, size = 0x400, scoped, tag = 'input window, operand 2, single buffered']
    #allocation11 [shape = 's32[1]{0}', space=sflag, size = 0x4, scoped, tag = 'scoped memory for tpu_custom_call.1']
    #allocation12 [shape = 'u8[512]{0}', space=vmem, size = 0x400, scoped, tag = 'input window, operand 4, single buffered']
    #allocation13 [shape = 'u8[131072]{0}', space=vmem, size = 0x20000, scoped, tag = 'input window, operand 5, single buffered']
    #allocation14 [shape = 's32[1]{0}', space=sflag, size = 0x4, scoped, tag = 'scoped memory for tpu_custom_call.1']
    #allocation15 [shape = 'u8[2048]{0}', space=vmem, size = 0x800, scoped, tag = 'output window, operand 0']
    %16 = vsyncpa [#allocation8], 0
    %s17 = scalar_lea.sflag [#allocation8], 1
    %18 = vsyncpa %s17, 0
    %19 = vsyncpa [#allocation11], 0
    %20 = vsyncpa [#allocation14], 0
    %21 = vsyncpa [#allocation9], 0
    %s22 = scalar_lea.sflag [#allocation9], 1
    %23 = vsyncpa %s22, 0
    loop: start=0, step=1, limit=4
    $region2: #{tpu_custom_call.1} parent=1 // loop_pre_header
      _
    $region3: #{tpu_custom_call.1} parent=1 // loop_header
      %s25 = sphi 0, %s29
      %p26 = scmp.ge.s32.totalorder %s25, 4
      %s35 = sphi 0, %s37
      %s38 = sphi 0, %s35
      %s39 = sphi 0, %s38
      %s55 = sphi 0, %s39
      %s59 = sphi 0, %s59
      %s61 = sphi 0, %s59
      %s62 = sphi 0, %s61
      %s76 = sphi 0, %s62
      %s80 = sphi 0, %s80
      %s82 = sphi 0, %s80
      %s83 = sphi 0, %s82
      %s97 = sphi 0, %s83
      %s101 = sphi 0, %s101
      %s103 = sphi 0, %s101
      %s104 = sphi 0, %s103
      %s118 = sphi 0, %s104
      %s122 = sphi 0, %s122
      %s124 = sphi 0, %s122
      %s125 = sphi 0, %s124
      %s139 = sphi 0, %s125
      %s143 = sphi 0, %s143
      %s145 = sphi 0, %s143
      %s146 = sphi 0, %s145
      %s160 = sphi 0, %s146
      %s164 = sphi 0, %s164
      %s166 = sphi 0, %s164
      %s167 = sphi 0, %s166
      %s181 = sphi 0, %s167
      %s185 = sphi 0, %s185
      %s187 = sphi 0, %s185
      %s188 = sphi 0, %s187
      %s202 = sphi 0, %s188
      %s206 = sphi 0, %s206
      %s208 = sphi 0, %s206
      %s209 = sphi 0, %s208
      %s223 = sphi 0, %s209
      %s227 = sphi 0, %s227
      %s229 = sphi 0, %s227
      %s230 = sphi 0, %s229
      %s244 = sphi 0, %s230
      %s248 = sphi 0, %s248
      %s250 = sphi 0, %s248
      %s251 = sphi 0, %s250
      %s265 = sphi 0, %s251
      %s271 = sphi 0, %s273
      %s274 = sphi 0, %s271
      %s275 = sphi 0, %s274
      %s291 = sphi 0, %s275
    $region4: #{tpu_custom_call.1} parent=1 // loop_header_branch
      %28 = sbr.rel (%p26) target = $region8
    $region5: #{tpu_custom_call.1} parent=1 // loop_body
      %s30 = ssub.s32 %s25, 1
      %s31 = ssub.s32 %s25, 2
      %s32 = sadd.s32 %s25, 1
      %s33 = ssub.s32 %s25, %s32
      %p34 = scmp.eq.s32.totalorder %s33, 0
      %s36 = sadd.s32 %s35, 1
      %s37 = scalar_select %p34, %s35, %s36
      %p40 = pneg %p34
      %p41 = scmp.eq.s32.totalorder %s25, 1
      %p42 = por %p40, %p41
      %p43 = scmp.ne.s32.totalorder %s35, %s38
      %p44 = scmp.eq.s32.totalorder %s25, 0
      %p45 = por %p43, %p44
      %p46 = scmp.ne.s32.totalorder %s35, %s38
      %p47 = scmp.eq.s32.totalorder %s30, 1
      %p48 = por %p46, %p47
      %p49 = scmp.ne.s32.totalorder %s38, %s39
      %p50 = scmp.eq.s32.totalorder %s30, 0
      %p51 = por %p49, %p50
      %p52 = scmp.ne.s32.totalorder %s38, %s39
      %p53 = scmp.eq.s32.totalorder %s31, 1
      %p54 = por %p52, %p53
      %p56 = scmp.ne.s32.totalorder %s39, %s55
      %p57 = scmp.eq.s32.totalorder %s31, 0
      %p58 = por %p56, %p57
      %s60 = sadd.s32 %s59, 1
      %p63 = scmp.eq.s32.totalorder %s25, 1
      %p64 = scmp.ne.s32.totalorder %s59, %s61
      %p65 = scmp.eq.s32.totalorder %s25, 0
      %p66 = por %p64, %p65
      %p67 = scmp.ne.s32.totalorder %s59, %s61
      %p68 = scmp.eq.s32.totalorder %s30, 1
      %p69 = por %p67, %p68
      %p70 = scmp.ne.s32.totalorder %s61, %s62
      %p71 = scmp.eq.s32.totalorder %s30, 0
      %p72 = por %p70, %p71
      %p73 = scmp.ne.s32.totalorder %s61, %s62
      %p74 = scmp.eq.s32.totalorder %s31, 1
      %p75 = por %p73, %p74
      %p77 = scmp.ne.s32.totalorder %s62, %s76
      %p78 = scmp.eq.s32.totalorder %s31, 0
      %p79 = por %p77, %p78
      %s81 = sadd.s32 %s80, 1
      %p84 = scmp.eq.s32.totalorder %s25, 1
      %p85 = scmp.ne.s32.totalorder %s80, %s82
      %p86 = scmp.eq.s32.totalorder %s25, 0
      %p87 = por %p85, %p86
      %p88 = scmp.ne.s32.totalorder %s80, %s82
      %p89 = scmp.eq.s32.totalorder %s30, 1
      %p90 = por %p88, %p89
      %p91 = scmp.ne.s32.totalorder %s82, %s83
      %p92 = scmp.eq.s32.totalorder %s30, 0
      %p93 = por %p91, %p92
      %p94 = scmp.ne.s32.totalorder %s82, %s83
      %p95 = scmp.eq.s32.totalorder %s31, 1
      %p96 = por %p94, %p95
      %p98 = scmp.ne.s32.totalorder %s83, %s97
      %p99 = scmp.eq.s32.totalorder %s31, 0
      %p100 = por %p98, %p99
      %s102 = sadd.s32 %s101, 1
      %p105 = scmp.eq.s32.totalorder %s25, 1
      %p106 = scmp.ne.s32.totalorder %s101, %s103
      %p107 = scmp.eq.s32.totalorder %s25, 0
      %p108 = por %p106, %p107
      %p109 = scmp.ne.s32.totalorder %s101, %s103
      %p110 = scmp.eq.s32.totalorder %s30, 1
      %p111 = por %p109, %p110
      %p112 = scmp.ne.s32.totalorder %s103, %s104
      %p113 = scmp.eq.s32.totalorder %s30, 0
      %p114 = por %p112, %p113
      %p115 = scmp.ne.s32.totalorder %s103, %s104
      %p116 = scmp.eq.s32.totalorder %s31, 1
      %p117 = por %p115, %p116
      %p119 = scmp.ne.s32.totalorder %s104, %s118
      %p120 = scmp.eq.s32.totalorder %s31, 0
      %p121 = por %p119, %p120
      %s123 = sadd.s32 %s122, 1
      %p126 = scmp.eq.s32.totalorder %s25, 1
      %p127 = scmp.ne.s32.totalorder %s122, %s124
      %p128 = scmp.eq.s32.totalorder %s25, 0
      %p129 = por %p127, %p128
      %p130 = scmp.ne.s32.totalorder %s122, %s124
      %p131 = scmp.eq.s32.totalorder %s30, 1
      %p132 = por %p130, %p131
      %p133 = scmp.ne.s32.totalorder %s124, %s125
      %p134 = scmp.eq.s32.totalorder %s30, 0
      %p135 = por %p133, %p134
      %p136 = scmp.ne.s32.totalorder %s124, %s125
      %p137 = scmp.eq.s32.totalorder %s31, 1
      %p138 = por %p136, %p137
      %p140 = scmp.ne.s32.totalorder %s125, %s139
      %p141 = scmp.eq.s32.totalorder %s31, 0
      %p142 = por %p140, %p141
      %s144 = sadd.s32 %s143, 1
      %p147 = scmp.eq.s32.totalorder %s25, 1
      %p148 = scmp.ne.s32.totalorder %s143, %s145
      %p149 = scmp.eq.s32.totalorder %s25, 0
      %p150 = por %p148, %p149
      %p151 = scmp.ne.s32.totalorder %s143, %s145
      %p152 = scmp.eq.s32.totalorder %s30, 1
      %p153 = por %p151, %p152
      %p154 = scmp.ne.s32.totalorder %s145, %s146
      %p155 = scmp.eq.s32.totalorder %s30, 0
      %p156 = por %p154, %p155
      %p157 = scmp.ne.s32.totalorder %s145, %s146
      %p158 = scmp.eq.s32.totalorder %s31, 1
      %p159 = por %p157, %p158
      %p161 = scmp.ne.s32.totalorder %s146, %s160
      %p162 = scmp.eq.s32.totalorder %s31, 0
      %p163 = por %p161, %p162
      %s165 = sadd.s32 %s164, 1
      %p168 = scmp.eq.s32.totalorder %s25, 1
      %p169 = scmp.ne.s32.totalorder %s164, %s166
      %p170 = scmp.eq.s32.totalorder %s25, 0
      %p171 = por %p169, %p170
      %p172 = scmp.ne.s32.totalorder %s164, %s166
      %p173 = scmp.eq.s32.totalorder %s30, 1
      %p174 = por %p172, %p173
      %p175 = scmp.ne.s32.totalorder %s166, %s167
      %p176 = scmp.eq.s32.totalorder %s30, 0
      %p177 = por %p175, %p176
      %p178 = scmp.ne.s32.totalorder %s166, %s167
      %p179 = scmp.eq.s32.totalorder %s31, 1
      %p180 = por %p178, %p179
      %p182 = scmp.ne.s32.totalorder %s167, %s181
      %p183 = scmp.eq.s32.totalorder %s31, 0
      %p184 = por %p182, %p183
      %s186 = sadd.s32 %s185, 1
      %p189 = scmp.eq.s32.totalorder %s25, 1
      %p190 = scmp.ne.s32.totalorder %s185, %s187
      %p191 = scmp.eq.s32.totalorder %s25, 0
      %p192 = por %p190, %p191
      %p193 = scmp.ne.s32.totalorder %s185, %s187
      %p194 = scmp.eq.s32.totalorder %s30, 1
      %p195 = por %p193, %p194
      %p196 = scmp.ne.s32.totalorder %s187, %s188
      %p197 = scmp.eq.s32.totalorder %s30, 0
      %p198 = por %p196, %p197
      %p199 = scmp.ne.s32.totalorder %s187, %s188
      %p200 = scmp.eq.s32.totalorder %s31, 1
      %p201 = por %p199, %p200
      %p203 = scmp.ne.s32.totalorder %s188, %s202
      %p204 = scmp.eq.s32.totalorder %s31, 0
      %p205 = por %p203, %p204
      %s207 = sadd.s32 %s206, 1
      %p210 = scmp.eq.s32.totalorder %s25, 1
      %p211 = scmp.ne.s32.totalorder %s206, %s208
      %p212 = scmp.eq.s32.totalorder %s25, 0
      %p213 = por %p211, %p212
      %p214 = scmp.ne.s32.totalorder %s206, %s208
      %p215 = scmp.eq.s32.totalorder %s30, 1
      %p216 = por %p214, %p215
      %p217 = scmp.ne.s32.totalorder %s208, %s209
      %p218 = scmp.eq.s32.totalorder %s30, 0
      %p219 = por %p217, %p218
      %p220 = scmp.ne.s32.totalorder %s208, %s209
      %p221 = scmp.eq.s32.totalorder %s31, 1
      %p222 = por %p220, %p221
      %p224 = scmp.ne.s32.totalorder %s209, %s223
      %p225 = scmp.eq.s32.totalorder %s31, 0
      %p226 = por %p224, %p225
      %s228 = sadd.s32 %s227, 1
      %p231 = scmp.eq.s32.totalorder %s25, 1
      %p232 = scmp.ne.s32.totalorder %s227, %s229
      %p233 = scmp.eq.s32.totalorder %s25, 0
      %p234 = por %p232, %p233
      %p235 = scmp.ne.s32.totalorder %s227, %s229
      %p236 = scmp.eq.s32.totalorder %s30, 1
      %p237 = por %p235, %p236
      %p238 = scmp.ne.s32.totalorder %s229, %s230
      %p239 = scmp.eq.s32.totalorder %s30, 0
      %p240 = por %p238, %p239
      %p241 = scmp.ne.s32.totalorder %s229, %s230
      %p242 = scmp.eq.s32.totalorder %s31, 1
      %p243 = por %p241, %p242
      %p245 = scmp.ne.s32.totalorder %s230, %s244
      %p246 = scmp.eq.s32.totalorder %s31, 0
      %p247 = por %p245, %p246
      %s249 = sadd.s32 %s248, 1
      %p252 = scmp.eq.s32.totalorder %s25, 1
      %p253 = scmp.ne.s32.totalorder %s248, %s250
      %p254 = scmp.eq.s32.totalorder %s25, 0
      %p255 = por %p253, %p254
      %p256 = scmp.ne.s32.totalorder %s248, %s250
      %p257 = scmp.eq.s32.totalorder %s30, 1
      %p258 = por %p256, %p257
      %p259 = scmp.ne.s32.totalorder %s250, %s251
      %p260 = scmp.eq.s32.totalorder %s30, 0
      %p261 = por %p259, %p260
      %p262 = scmp.ne.s32.totalorder %s250, %s251
      %p263 = scmp.eq.s32.totalorder %s31, 1
      %p264 = por %p262, %p263
      %p266 = scmp.ne.s32.totalorder %s251, %s265
      %p267 = scmp.eq.s32.totalorder %s31, 0
      %p268 = por %p266, %p267
      %s269 = ssub.s32 %s25, %s32
      %p270 = scmp.eq.s32.totalorder %s269, 0
      %s272 = sadd.s32 %s271, 1
      %s273 = scalar_select %p270, %s271, %s272
      %p276 = pneg %p270
      %p277 = scmp.eq.s32.totalorder %s25, 1
      %p278 = por %p276, %p277
      %p279 = scmp.ne.s32.totalorder %s271, %s274
      %p280 = scmp.eq.s32.totalorder %s25, 0
      %p281 = por %p279, %p280
      %p282 = scmp.ne.s32.totalorder %s271, %s274
      %p283 = scmp.eq.s32.totalorder %s30, 1
      %p284 = por %p282, %p283
      %p285 = scmp.ne.s32.totalorder %s274, %s275
      %p286 = scmp.eq.s32.totalorder %s30, 0
      %p287 = por %p285, %p286
      %p288 = scmp.ne.s32.totalorder %s274, %s275
      %p289 = scmp.eq.s32.totalorder %s31, 1
      %p290 = por %p288, %p289
      %p292 = scmp.ne.s32.totalorder %s275, %s291
      %p293 = scmp.eq.s32.totalorder %s31, 0
      %p294 = por %p292, %p293
      %p295 = scmp.le.s32.totalorder 1, %s25
      %p296 = scmp.lt.s32.totalorder %s25, 3
      %p297 = pnand %p295, %p296
      %p298 = pneg %p297
      // Predicated region
      $region9: #{tpu_custom_call.1} parent=5 // pred_check
        _
      $region10: #{tpu_custom_call.1} parent=5 // pred_check_branch
        %300 = sbr.rel (%p297) target = $region12
      $region11: #{tpu_custom_call.1} parent=5 // pred_region
        %s301 = ssub.s32 %s25, 1
        // Predicated region
        $region13: #{tpu_custom_call.1} parent=11 // pred_check
          %p302 = pneg %p72
        $region14: #{tpu_custom_call.1} parent=11 // pred_check_branch
          %304 = sbr.rel (%p302) target = $region16
        $region15: #{tpu_custom_call.1} parent=11 // pred_region
          _
        $region16: #{tpu_custom_call.1} parent=11 // pred_fallthru
          _
        // Predicated region
        $region17: #{tpu_custom_call.1} parent=11 // pred_check
          %p305 = pneg %p93
        $region18: #{tpu_custom_call.1} parent=11 // pred_check_branch
          %307 = sbr.rel (%p305) target = $region20
        $region19: #{tpu_custom_call.1} parent=11 // pred_region
          %s309 = ssub.s32 16, 16
          %310 = vsyncadd [#allocation11], %s309
          %s312 = sshll.u32 [#allocation10], 4
          %s313 = int_to_ptr.vmem [resolvable:$true] %s312
          %315 = dma.hbm_to_vmem [thread:$0]  %s2, 16, %s313, [#allocation11]
        $region20: #{tpu_custom_call.1} parent=11 // pred_fallthru
          _
        // Predicated region
        $region21: #{tpu_custom_call.1} parent=11 // pred_check
          %p316 = pneg %p114
        $region22: #{tpu_custom_call.1} parent=11 // pred_check_branch
          %318 = sbr.rel (%p316) target = $region24
        $region23: #{tpu_custom_call.1} parent=11 // pred_region
          _
        $region24: #{tpu_custom_call.1} parent=11 // pred_fallthru
          _
        // Predicated region
        $region25: #{tpu_custom_call.1} parent=11 // pred_check
          %p319 = pneg %p135
        $region26: #{tpu_custom_call.1} parent=11 // pred_check_branch
          %321 = sbr.rel (%p319) target = $region28
        $region27: #{tpu_custom_call.1} parent=11 // pred_region
          %s323 = ssub.s32 16, 16
          %324 = vsyncadd [#allocation11], %s323
          %s326 = sshll.u32 [#allocation12], 4
          %s327 = int_to_ptr.vmem [resolvable:$true] %s326
          %329 = dma.hbm_to_vmem [thread:$0]  %s4, 16, %s327, [#allocation11]
        $region28: #{tpu_custom_call.1} parent=11 // pred_fallthru
          _
        // Predicated region
        $region29: #{tpu_custom_call.1} parent=11 // pred_check
          %p330 = pneg %p156
        $region30: #{tpu_custom_call.1} parent=11 // pred_check_branch
          %332 = sbr.rel (%p330) target = $region32
        $region31: #{tpu_custom_call.1} parent=11 // pred_region
          %s334 = ssub.s32 4096, 4096
          %335 = vsyncadd [#allocation14], %s334
          %s336 = sshll.u32 [#allocation13], 4
          %s337 = int_to_ptr.vmem [resolvable:$true] %s336
          %342 = dma.hbm_to_vmem [thread:$0]  %s5, 4096, %s337, [#allocation14], 64, 64, 4
        $region32: #{tpu_custom_call.1} parent=11 // pred_fallthru
          _
        // Predicated region
        $region33: #{tpu_custom_call.1} parent=11 // pred_check
          %p343 = pneg %p177
        $region34: #{tpu_custom_call.1} parent=11 // pred_check_branch
          %345 = sbr.rel (%p343) target = $region36
        $region35: #{tpu_custom_call.1} parent=11 // pred_region
          _
        $region36: #{tpu_custom_call.1} parent=11 // pred_fallthru
          _
        // Predicated region
        $region37: #{tpu_custom_call.1} parent=11 // pred_check
          %p346 = pneg %p198
        $region38: #{tpu_custom_call.1} parent=11 // pred_check_branch
          %348 = sbr.rel (%p346) target = $region40
        $region39: #{tpu_custom_call.1} parent=11 // pred_region
          _
        $region40: #{tpu_custom_call.1} parent=11 // pred_fallthru
          _
        // Predicated region
        $region41: #{tpu_custom_call.1} parent=11 // pred_check
          %p349 = pneg %p219
        $region42: #{tpu_custom_call.1} parent=11 // pred_check_branch
          %351 = sbr.rel (%p349) target = $region44
        $region43: #{tpu_custom_call.1} parent=11 // pred_region
          _
        $region44: #{tpu_custom_call.1} parent=11 // pred_fallthru
          _
        // Predicated region
        $region45: #{tpu_custom_call.1} parent=11 // pred_check
          %p352 = pneg %p240
        $region46: #{tpu_custom_call.1} parent=11 // pred_check_branch
          %354 = sbr.rel (%p352) target = $region48
        $region47: #{tpu_custom_call.1} parent=11 // pred_region
          _
        $region48: #{tpu_custom_call.1} parent=11 // pred_fallthru
          _
        // Predicated region
        $region49: #{tpu_custom_call.1} parent=11 // pred_check
          %p355 = pneg %p261
        $region50: #{tpu_custom_call.1} parent=11 // pred_check_branch
          %357 = sbr.rel (%p355) target = $region52
        $region51: #{tpu_custom_call.1} parent=11 // pred_region
          _
        $region52: #{tpu_custom_call.1} parent=11 // pred_fallthru
          _
      $region12: #{tpu_custom_call.1} parent=5 // pred_fallthru
        _
      %p358 = scmp.lt.s32.totalorder %s25, 2
      // Predicated region
      $region53: #{tpu_custom_call.1} parent=5 // pred_check
        %p359 = pneg %p358
      $region54: #{tpu_custom_call.1} parent=5 // pred_check_branch
        %361 = sbr.rel (%p359) target = $region56
      $region55: #{tpu_custom_call.1} parent=5 // pred_region
        // Predicated region
        $region57: #{tpu_custom_call.1} parent=55 // pred_check
          %p362 = pneg %p45
        $region58: #{tpu_custom_call.1} parent=55 // pred_check_branch
          %364 = sbr.rel (%p362) target = $region60
        $region59: #{tpu_custom_call.1} parent=55 // pred_region
          %s365 = sand.u32 %s35, 1
          %s366 = scalar_lea.sflag [#allocation8], %s365
          %s367 = sand.u32 %s35, 1
          %s368 = smul.addr %s367, 32
          %s369 = scalar_lea.vmem [#allocation7], %s368
          %s371 = ssub.s32 512, 512
          %372 = vsyncadd %s366, %s371
          %s373 = smul.addr %s25, 4
          %s374 = smul.addr %s373, 128
          %s375 = scalar_lea.hbm %s0, %s374
          %s376 = sshll.u32 %s369, 4
          %s377 = int_to_ptr.vmem [resolvable:$true] %s376
          %382 = dma.hbm_to_vmem [thread:$0]  %s375, 512, %s377, %s366, 128, 128, 8
        $region60: #{tpu_custom_call.1} parent=55 // pred_fallthru
          _
      $region56: #{tpu_custom_call.1} parent=5 // pred_fallthru
        _
      %p383 = scmp.le.s32.totalorder 1, %s25
      %p384 = scmp.lt.s32.totalorder %s25, 3
      %p385 = pnand %p383, %p384
      %p386 = pneg %p385
      // Predicated region
      $region61: #{tpu_custom_call.1} parent=5 // pred_check
        _
      $region62: #{tpu_custom_call.1} parent=5 // pred_check_branch
        %388 = sbr.rel (%p385) target = $region64
      $region63: #{tpu_custom_call.1} parent=5 // pred_region
        %s389 = ssub.s32 %s25, 1
        %s390 = sand.u32 %s38, 1
        %s391 = scalar_lea.sflag [#allocation8], %s390
        %s392 = sand.u32 %s38, 1
        %s393 = smul.addr %s392, 32
        %s394 = scalar_lea.vmem [#allocation7], %s393
        // Predicated region
        $region65: #{tpu_custom_call.1} parent=63 // pred_check
          %p395 = pneg %p51
        $region66: #{tpu_custom_call.1} parent=63 // pred_check_branch
          %397 = sbr.rel (%p395) target = $region68
        $region67: #{tpu_custom_call.1} parent=63 // pred_region
          %398 = dma.done %s391, 512
        $region68: #{tpu_custom_call.1} parent=63 // pred_fallthru
          _
        // Predicated region
        $region69: #{tpu_custom_call.1} parent=63 // pred_check
          %p399 = pneg %p93
        $region70: #{tpu_custom_call.1} parent=63 // pred_check_branch
          %401 = sbr.rel (%p399) target = $region72
        $region71: #{tpu_custom_call.1} parent=63 // pred_region
          %402 = dma.done [#allocation11], 16
        $region72: #{tpu_custom_call.1} parent=63 // pred_fallthru
          _
        // Predicated region
        $region73: #{tpu_custom_call.1} parent=63 // pred_check
          %p403 = pneg %p135
        $region74: #{tpu_custom_call.1} parent=63 // pred_check_branch
          %405 = sbr.rel (%p403) target = $region76
        $region75: #{tpu_custom_call.1} parent=63 // pred_region
          %406 = dma.done [#allocation11], 16
        $region76: #{tpu_custom_call.1} parent=63 // pred_fallthru
          _
        // Predicated region
        $region77: #{tpu_custom_call.1} parent=63 // pred_check
          %p407 = pneg %p156
        $region78: #{tpu_custom_call.1} parent=63 // pred_check_branch
          %409 = sbr.rel (%p407) target = $region80
        $region79: #{tpu_custom_call.1} parent=63 // pred_region
          %410 = dma.done [#allocation14], 4096
        $region80: #{tpu_custom_call.1} parent=63 // pred_fallthru
          _
        %s411 = sand.u32 %s38, 1
        %s412 = scalar_lea.sflag [#allocation8], %s411
        %s413 = sand.u32 %s38, 1
        %s414 = smul.addr %s413, 32
        %s415 = scalar_lea.vmem [#allocation7], %s414
        %p416 = pneg %p51
        %p417 = pneg %p48
        %p418 = pneg %p72
        %p419 = pneg %p69
        %p420 = pneg %p93
        %p421 = pneg %p90
        %p422 = pneg %p114
        %p423 = pneg %p111
        %p424 = pneg %p135
        %p425 = pneg %p132
        %p426 = pneg %p156
        %p427 = pneg %p153
        %p428 = pneg %p177
        %p429 = pneg %p174
        %p430 = pneg %p198
        %p431 = pneg %p195
        %p432 = pneg %p219
        %p433 = pneg %p216
        %p434 = pneg %p240
        %p435 = pneg %p237
        %p436 = pneg %p261
        %p437 = pneg %p258
        %p438 = pneg %p287
        %p439 = pneg %p284
        %s440 = sand.u32 %s274, 1
        %s441 = scalar_lea.sflag [#allocation9], %s440
        %s442 = sand.u32 %s274, 1
        %s443 = smul.addr %s442, 2
        %s444 = scalar_lea.vmem [#allocation15], %s443
        %v446 = vld [vmem:[%s394] sm:$0xff]
        %v447 = vld [vmem:[%s394 + $0x8] sm:$0xff]
        %v448 = vld [vmem:[%s394 + $0x10] sm:$0xff]
        %v449 = vld [vmem:[%s394 + $0x18] sm:$0xff]
        %450 = vst [vmem:[#allocation2] sm:$0xff] 0.0
        %451 = vst [vmem:[#allocation2 + $0x8] sm:$0xff] 0.0
        %452 = vst [vmem:[#allocation2 + $0x10] sm:$0xff] 0.0
        %453 = vst [vmem:[#allocation2 + $0x18] sm:$0xff] 0.0
        %454 = vst [vmem:[#allocation2 + $0x20] sm:$0x3] 0.0
        %455 = vst [vmem:[#allocation2 + $0x1] sm:$0xff] %v446
        %456 = vst [vmem:[#allocation2 + $0x9] sm:$0xff] %v447
        %457 = vst [vmem:[#allocation2 + $0x11] sm:$0xff] %v448
        %458 = vst [vmem:[#allocation2 + $0x19] sm:$0xff] %v449
        %v459 = vld [vmem:[#allocation2] ss:$2 sm:$0xff]
        %s460 = scalar_lea.vmem [#allocation2], 16
        %v461 = vld [vmem:[%s460] ss:$2 sm:$0xff]
        %s462 = scalar_lea.vmem [#allocation2], 1
        %v463 = vld [vmem:[%s462] ss:$2 sm:$0xff]
        %s464 = scalar_lea.vmem [#allocation2], 17
        %v465 = vld [vmem:[%s464] ss:$2 sm:$0xff]
        %s466 = scalar_lea.vmem [#allocation2], 2
        %v467 = vld [vmem:[%s466] ss:$2 sm:$0xff]
        %s468 = scalar_lea.vmem [#allocation2], 18
        %v469 = vld [vmem:[%s468] ss:$2 sm:$0xff]
        %s470 = scalar_lea.vmem [#allocation2], 3
        %v471 = vld [vmem:[%s470] ss:$2 sm:$0xff]
        %s472 = scalar_lea.vmem [#allocation2], 19
        %v473 = vld [vmem:[%s472] ss:$2 sm:$0xff]
        %v474 = vpack.c.bf16 %v461, %v459
        %v475 = vpack.c.bf16 %v465, %v463
        %v476 = vpack.c.bf16 %v469, %v467
        %v477 = vpack.c.bf16 %v473, %v471
        %v478 = vld [vmem:[%s1] sm:$0xf]
        %v479 = vld [vmem:[%s1 + $0x4] sm:$0xf]
        %v480 = vld [vmem:[%s1 + $0x8] sm:$0xf]
        %v481 = vld [vmem:[%s1 + $0xc] sm:$0xf]
        %v482 = vld [vmem:[%s1 + $0x10] sm:$0xf]
        %v483 = vld [vmem:[%s1 + $0x14] sm:$0xf]
        %v484 = vld [vmem:[%s1 + $0x18] sm:$0xf]
        %v485 = vld [vmem:[%s1 + $0x1c] sm:$0xf]
        %v486 = vld [vmem:[%s1 + $0x20] sm:$0xf]
        %v487 = vld [vmem:[%s1 + $0x24] sm:$0xf]
        %v488 = vld [vmem:[%s1 + $0x28] sm:$0xf]
        %v489 = vld [vmem:[%s1 + $0x2c] sm:$0xf]
        %v490 = vld [vmem:[%s1 + $0x30] sm:$0xf]
        %v491 = vld [vmem:[%s1 + $0x34] sm:$0xf]
        %v492 = vld [vmem:[%s1 + $0x38] sm:$0xf]
        %v493 = vld [vmem:[%s1 + $0x3c] sm:$0xf]
        %v494 = vld [vmem:[%s1 + $0x40] sm:$0xf]
        %v495 = vld [vmem:[%s1 + $0x44] sm:$0xf]
        %v496 = vld [vmem:[%s1 + $0x48] sm:$0xf]
        %v497 = vld [vmem:[%s1 + $0x4c] sm:$0xf]
        %v498 = vld [vmem:[%s1 + $0x50] sm:$0xf]
        %v499 = vld [vmem:[%s1 + $0x54] sm:$0xf]
        %v500 = vld [vmem:[%s1 + $0x58] sm:$0xf]
        %v501 = vld [vmem:[%s1 + $0x5c] sm:$0xf]
        %v502 = vld [vmem:[%s1 + $0x60] sm:$0xf]
        %v503 = vld [vmem:[%s1 + $0x64] sm:$0xf]
        %v504 = vld [vmem:[%s1 + $0x68] sm:$0xf]
        %v505 = vld [vmem:[%s1 + $0x6c] sm:$0xf]
        %v506 = vld [vmem:[%s1 + $0x70] sm:$0xf]
        %v507 = vld [vmem:[%s1 + $0x74] sm:$0xf]
        %v508 = vld [vmem:[%s1 + $0x78] sm:$0xf]
        %v509 = vld [vmem:[%s1 + $0x7c] sm:$0xf]
        %v510 = vld [vmem:[%s1 + $0x80] sm:$0xf]
        %v511 = vld [vmem:[%s1 + $0x84] sm:$0xf]
        %v512 = vld [vmem:[%s1 + $0x88] sm:$0xf]
        %v513 = vld [vmem:[%s1 + $0x8c] sm:$0xf]
        %v514 = vld [vmem:[%s1 + $0x90] sm:$0xf]
        %v515 = vld [vmem:[%s1 + $0x94] sm:$0xf]
        %v516 = vld [vmem:[%s1 + $0x98] sm:$0xf]
        %v517 = vld [vmem:[%s1 + $0x9c] sm:$0xf]
        %v518 = vld [vmem:[%s1 + $0xa0] sm:$0xf]
        %v519 = vld [vmem:[%s1 + $0xa4] sm:$0xf]
        %v520 = vld [vmem:[%s1 + $0xa8] sm:$0xf]
        %v521 = vld [vmem:[%s1 + $0xac] sm:$0xf]
        %v522 = vld [vmem:[%s1 + $0xb0] sm:$0xf]
        %v523 = vld [vmem:[%s1 + $0xb4] sm:$0xf]
        %v524 = vld [vmem:[%s1 + $0xb8] sm:$0xf]
        %v525 = vld [vmem:[%s1 + $0xbc] sm:$0xf]
        %v526 = vld [vmem:[%s1 + $0xc0] sm:$0xf]
        %v527 = vld [vmem:[%s1 + $0xc4] sm:$0xf]
        %v528 = vld [vmem:[%s1 + $0xc8] sm:$0xf]
        %v529 = vld [vmem:[%s1 + $0xcc] sm:$0xf]
        %v530 = vld [vmem:[%s1 + $0xd0] sm:$0xf]
        %v531 = vld [vmem:[%s1 + $0xd4] sm:$0xf]
        %v532 = vld [vmem:[%s1 + $0xd8] sm:$0xf]
        %v533 = vld [vmem:[%s1 + $0xdc] sm:$0xf]
        %v534 = vld [vmem:[%s1 + $0xe0] sm:$0xf]
        %v535 = vld [vmem:[%s1 + $0xe4] sm:$0xf]
        %v536 = vld [vmem:[%s1 + $0xe8] sm:$0xf]
        %v537 = vld [vmem:[%s1 + $0xec] sm:$0xf]
        %v538 = vld [vmem:[%s1 + $0xf0] sm:$0xf]
        %v539 = vld [vmem:[%s1 + $0xf4] sm:$0xf]
        %v540 = vld [vmem:[%s1 + $0xf8] sm:$0xf]
        %v541 = vld [vmem:[%s1 + $0xfc] sm:$0xf]
        %v542 = vld [vmem:[#allocation10] sm:$0x1]
        %v544 = vlaneseq
        %v545 = vshrl.u32 %v544, 7
        %v546 = vsub.s32 0, %v545
        %v547 = vrot.slane %v542, %v546
        %v613 = vunpack.c.l.b16 %v478
        %v614 = vunpack.c.l.b16 %v479
        %v615 = vunpack.c.l.b16 %v480
        %v616 = vunpack.c.l.b16 %v481
        %v617 = vunpack.c.l.b16 %v482
        %v618 = vunpack.c.l.b16 %v483
        %v619 = vunpack.c.l.b16 %v484
        %v620 = vunpack.c.l.b16 %v485
        %v621 = vunpack.c.l.b16 %v486
        %v622 = vunpack.c.l.b16 %v487
        %v623 = vunpack.c.l.b16 %v488
        %v624 = vunpack.c.l.b16 %v489
        %v625 = vunpack.c.l.b16 %v490
        %v626 = vunpack.c.l.b16 %v491
        %v627 = vunpack.c.l.b16 %v492
        %v628 = vunpack.c.l.b16 %v493
        %v629 = vunpack.c.l.b16 %v494
        %v630 = vunpack.c.l.b16 %v495
        %v631 = vunpack.c.l.b16 %v496
        %v632 = vunpack.c.l.b16 %v497
        %v633 = vunpack.c.l.b16 %v498
        %v634 = vunpack.c.l.b16 %v499
        %v635 = vunpack.c.l.b16 %v500
        %v636 = vunpack.c.l.b16 %v501
        %v637 = vunpack.c.l.b16 %v502
        %v638 = vunpack.c.l.b16 %v503
        %v639 = vunpack.c.l.b16 %v504
        %v640 = vunpack.c.l.b16 %v505
        %v641 = vunpack.c.l.b16 %v506
        %v642 = vunpack.c.l.b16 %v507
        %v643 = vunpack.c.l.b16 %v508
        %v644 = vunpack.c.l.b16 %v509
        %v645 = vunpack.c.l.b16 %v510
        %v646 = vunpack.c.l.b16 %v511
        %v647 = vunpack.c.l.b16 %v512
        %v648 = vunpack.c.l.b16 %v513
        %v649 = vunpack.c.l.b16 %v514
        %v650 = vunpack.c.l.b16 %v515
        %v651 = vunpack.c.l.b16 %v516
        %v652 = vunpack.c.l.b16 %v517
        %v653 = vunpack.c.l.b16 %v518
        %v654 = vunpack.c.l.b16 %v519
        %v655 = vunpack.c.l.b16 %v520
        %v656 = vunpack.c.l.b16 %v521
        %v657 = vunpack.c.l.b16 %v522
        %v658 = vunpack.c.l.b16 %v523
        %v659 = vunpack.c.l.b16 %v524
        %v660 = vunpack.c.l.b16 %v525
        %v661 = vunpack.c.l.b16 %v526
        %v662 = vunpack.c.l.b16 %v527
        %v663 = vunpack.c.l.b16 %v528
        %v664 = vunpack.c.l.b16 %v529
        %v665 = vunpack.c.l.b16 %v530
        %v666 = vunpack.c.l.b16 %v531
        %v667 = vunpack.c.l.b16 %v532
        %v668 = vunpack.c.l.b16 %v533
        %v669 = vunpack.c.l.b16 %v534
        %v670 = vunpack.c.l.b16 %v535
        %v671 = vunpack.c.l.b16 %v536
        %v672 = vunpack.c.l.b16 %v537
        %v673 = vunpack.c.l.b16 %v538
        %v674 = vunpack.c.l.b16 %v539
        %v675 = vunpack.c.l.b16 %v540
        %v676 = vunpack.c.l.b16 %v541
        %v677 = vpack.c.b16 %v614, %v613
        %v678 = vpack.c.b16 %v616, %v615
        %v679 = vpack.c.b16 %v618, %v617
        %v680 = vpack.c.b16 %v620, %v619
        %v681 = vpack.c.b16 %v622, %v621
        %v682 = vpack.c.b16 %v624, %v623
        %v683 = vpack.c.b16 %v626, %v625
        %v684 = vpack.c.b16 %v628, %v627
        %v685 = vpack.c.b16 %v630, %v629
        %v686 = vpack.c.b16 %v632, %v631
        %v687 = vpack.c.b16 %v634, %v633
        %v688 = vpack.c.b16 %v636, %v635
        %v689 = vpack.c.b16 %v638, %v637
        %v690 = vpack.c.b16 %v640, %v639
        %v691 = vpack.c.b16 %v642, %v641
        %v692 = vpack.c.b16 %v644, %v643
        %v693 = vpack.c.b16 %v646, %v645
        %v694 = vpack.c.b16 %v648, %v647
        %v695 = vpack.c.b16 %v650, %v649
        %v696 = vpack.c.b16 %v652, %v651
        %v697 = vpack.c.b16 %v654, %v653
        %v698 = vpack.c.b16 %v656, %v655
        %v699 = vpack.c.b16 %v658, %v657
        %v700 = vpack.c.b16 %v660, %v659
        %v701 = vpack.c.b16 %v662, %v661
        %v702 = vpack.c.b16 %v664, %v663
        %v703 = vpack.c.b16 %v666, %v665
        %v704 = vpack.c.b16 %v668, %v667
        %v705 = vpack.c.b16 %v670, %v669
        %v706 = vpack.c.b16 %v672, %v671
        %v707 = vpack.c.b16 %v674, %v673
        %v708 = vpack.c.b16 %v676, %v675
        %741 = vmatprep.subr.bf16.mxu0 0
        %742 = vmatpush1.bf16.msra.mxu0 %v684
        %743 = vmatprep.subr.bf16.mxu0 0
        %744 = vmatpush1.bf16.msra.mxu0 %v683
        %745 = vmatprep.subr.bf16.mxu0 0
        %746 = vmatpush1.bf16.msra.mxu0 %v682
        %747 = vmatprep.subr.bf16.mxu0 0
        %748 = vmatpush1.bf16.msra.mxu0 %v681
        %749 = vmatprep.subr.bf16.mxu0 0
        %750 = vmatpush1.bf16.msra.mxu0 %v680
        %751 = vmatprep.subr.bf16.mxu0 0
        %752 = vmatpush1.bf16.msra.mxu0 %v679
        %753 = vmatprep.subr.bf16.mxu0 0
        %754 = vmatpush1.bf16.msra.mxu0 %v678
        %755 = vmatprep.subr.bf16.mxu0 0
        %756 = vmatpush1.bf16.msra.mxu0 %v677
        %757 = vmatprep.subr.bf16.mxu0 0
        %758 = vmatpush2.bf16.msra.mxu0 %v692
        %759 = vmatprep.subr.bf16.mxu0 0
        %760 = vmatpush2.bf16.msra.mxu0 %v691
        %761 = vmatprep.subr.bf16.mxu0 0
        %762 = vmatpush2.bf16.msra.mxu0 %v690
        %763 = vmatprep.subr.bf16.mxu0 0
        %764 = vmatpush2.bf16.msra.mxu0 %v689
        %765 = vmatprep.subr.bf16.mxu0 0
        %766 = vmatpush2.bf16.msra.mxu0 %v688
        %767 = vmatprep.subr.bf16.mxu0 0
        %768 = vmatpush2.bf16.msra.mxu0 %v687
        %769 = vmatprep.subr.bf16.mxu0 0
        %770 = vmatpush2.bf16.msra.mxu0 %v686
        %771 = vmatprep.subr.bf16.mxu0 0
        %772 = vmatpush2.bf16.msra.mxu0 %v685
        %773 = vmatprep.mubr.bf16.mxu0 %v475
        %774 = vmatmul.mubr.bf16.gmra.mxu0 %v474
        %v775 = vpop.f32.mrf.mxu0
        %v776 = vadd.f32 %v547, %v775
        %v777 = vpop.f32.mrf.mxu0
        %v778 = vpop.f32.mrf.mxu0
        %v779 = vadd.f32 %v547, %v778
        %v780 = vpop.f32.mrf.mxu0
        %781 = vdwg.mxu0
        %782 = vmatprep.subr.bf16.mxu0 0
        %783 = vmatpush1.bf16.msra.mxu0 %v700
        %784 = vmatprep.subr.bf16.mxu0 0
        %785 = vmatpush1.bf16.msra.mxu0 %v699
        %786 = vmatprep.subr.bf16.mxu0 0
        %787 = vmatpush1.bf16.msra.mxu0 %v698
        %788 = vmatprep.subr.bf16.mxu0 0
        %789 = vmatpush1.bf16.msra.mxu0 %v697
        %790 = vmatprep.subr.bf16.mxu0 0
        %791 = vmatpush1.bf16.msra.mxu0 %v696
        %792 = vmatprep.subr.bf16.mxu0 0
        %793 = vmatpush1.bf16.msra.mxu0 %v695
        %794 = vmatprep.subr.bf16.mxu0 0
        %795 = vmatpush1.bf16.msra.mxu0 %v694
        %796 = vmatprep.subr.bf16.mxu0 0
        %797 = vmatpush1.bf16.msra.mxu0 %v693
        %798 = vmatprep.subr.bf16.mxu0 0
        %799 = vmatpush2.bf16.msra.mxu0 %v708
        %800 = vmatprep.subr.bf16.mxu0 0
        %801 = vmatpush2.bf16.msra.mxu0 %v707
        %802 = vmatprep.subr.bf16.mxu0 0
        %803 = vmatpush2.bf16.msra.mxu0 %v706
        %804 = vmatprep.subr.bf16.mxu0 0
        %805 = vmatpush2.bf16.msra.mxu0 %v705
        %806 = vmatprep.subr.bf16.mxu0 0
        %807 = vmatpush2.bf16.msra.mxu0 %v704
        %808 = vmatprep.subr.bf16.mxu0 0
        %809 = vmatpush2.bf16.msra.mxu0 %v703
        %810 = vmatprep.subr.bf16.mxu0 0
        %811 = vmatpush2.bf16.msra.mxu0 %v702
        %812 = vmatprep.subr.bf16.mxu0 0
        %813 = vmatpush2.bf16.msra.mxu0 %v701
        %814 = vmatprep.mubr.bf16.mxu0 %v477
        %815 = vmatmul.mubr.bf16.gmra.mxu0 %v476
        %v816 = vpop.f32.mrf.mxu0
        %v817 = vadd.f32 %v776, %v816
        %v818 = vpop.f32.mrf.mxu0
        %v819 = vpop.f32.mrf.mxu0
        %v820 = vadd.f32 %v779, %v819
        %v821 = vpop.f32.mrf.mxu0
        %822 = vdwg.mxu0
        %vm823 = vcmp.gt.f32.partialorder %v817, 0.0
        %vm824 = vcmp.gt.f32.partialorder %v820, 0.0
        %v825 = vmul.f32 %v817, 0.2
        %v826 = vmul.f32 %v820, 0.2
        %v827 = vsel %vm823, %v817, %v825
        %v828 = vsel %vm824, %v820, %v826
        %829 = vst [vmem:[#allocation3] sm:$0xff] 0.0
        %830 = vst [vmem:[#allocation3 + $0x8] sm:$0xff] 0.0
        %831 = vst [vmem:[#allocation3 + $0x10] sm:$0x3] 0.0
        %832 = vst [vmem:[#allocation3 + $0x1] sm:$0xff] %v827
        %833 = vst [vmem:[#allocation3 + $0x9] sm:$0xff] %v828
        %v834 = vld [vmem:[#allocation3] ss:$2 sm:$0xff]
        %s835 = scalar_lea.vmem [#allocation3], 1
        %v836 = vld [vmem:[%s835] ss:$2 sm:$0xff]
        %s837 = scalar_lea.vmem [#allocation3], 2
        %v838 = vld [vmem:[%s837] ss:$2 sm:$0xff]
        %s839 = scalar_lea.vmem [#allocation3], 3
        %v840 = vld [vmem:[%s839] ss:$2 sm:$0xff]
        %v841 = vpack.c.bf16 %v834, %v834
        %v842 = vpack.c.bf16 %v836, %v836
        %v843 = vpack.c.bf16 %v838, %v838
        %v844 = vpack.c.bf16 %v840, %v840
        %v845 = vld [vmem:[%s3] sm:$0xf]
        %v846 = vld [vmem:[%s3 + $0x4] sm:$0xf]
        %v847 = vld [vmem:[%s3 + $0x8] sm:$0xf]
        %v848 = vld [vmem:[%s3 + $0xc] sm:$0xf]
        %v849 = vld [vmem:[%s3 + $0x10] sm:$0xf]
        %v850 = vld [vmem:[%s3 + $0x14] sm:$0xf]
        %v851 = vld [vmem:[%s3 + $0x18] sm:$0xf]
        %v852 = vld [vmem:[%s3 + $0x1c] sm:$0xf]
        %v853 = vld [vmem:[%s3 + $0x20] sm:$0xf]
        %v854 = vld [vmem:[%s3 + $0x24] sm:$0xf]
        %v855 = vld [vmem:[%s3 + $0x28] sm:$0xf]
        %v856 = vld [vmem:[%s3 + $0x2c] sm:$0xf]
        %v857 = vld [vmem:[%s3 + $0x30] sm:$0xf]
        %v858 = vld [vmem:[%s3 + $0x34] sm:$0xf]
        %v859 = vld [vmem:[%s3 + $0x38] sm:$0xf]
        %v860 = vld [vmem:[%s3 + $0x3c] sm:$0xf]
        %v861 = vld [vmem:[%s3 + $0x40] sm:$0xf]
        %v862 = vld [vmem:[%s3 + $0x44] sm:$0xf]
        %v863 = vld [vmem:[%s3 + $0x48] sm:$0xf]
        %v864 = vld [vmem:[%s3 + $0x4c] sm:$0xf]
        %v865 = vld [vmem:[%s3 + $0x50] sm:$0xf]
        %v866 = vld [vmem:[%s3 + $0x54] sm:$0xf]
        %v867 = vld [vmem:[%s3 + $0x58] sm:$0xf]
        %v868 = vld [vmem:[%s3 + $0x5c] sm:$0xf]
        %v869 = vld [vmem:[%s3 + $0x60] sm:$0xf]
        %v870 = vld [vmem:[%s3 + $0x64] sm:$0xf]
        %v871 = vld [vmem:[%s3 + $0x68] sm:$0xf]
        %v872 = vld [vmem:[%s3 + $0x6c] sm:$0xf]
        %v873 = vld [vmem:[%s3 + $0x70] sm:$0xf]
        %v874 = vld [vmem:[%s3 + $0x74] sm:$0xf]
        %v875 = vld [vmem:[%s3 + $0x78] sm:$0xf]
        %v876 = vld [vmem:[%s3 + $0x7c] sm:$0xf]
        %v877 = vld [vmem:[%s3 + $0x80] sm:$0xf]
        %v878 = vld [vmem:[%s3 + $0x84] sm:$0xf]
        %v879 = vld [vmem:[%s3 + $0x88] sm:$0xf]
        %v880 = vld [vmem:[%s3 + $0x8c] sm:$0xf]
        %v881 = vld [vmem:[%s3 + $0x90] sm:$0xf]
        %v882 = vld [vmem:[%s3 + $0x94] sm:$0xf]
        %v883 = vld [vmem:[%s3 + $0x98] sm:$0xf]
        %v884 = vld [vmem:[%s3 + $0x9c] sm:$0xf]
        %v885 = vld [vmem:[%s3 + $0xa0] sm:$0xf]
        %v886 = vld [vmem:[%s3 + $0xa4] sm:$0xf]
        %v887 = vld [vmem:[%s3 + $0xa8] sm:$0xf]
        %v888 = vld [vmem:[%s3 + $0xac] sm:$0xf]
        %v889 = vld [vmem:[%s3 + $0xb0] sm:$0xf]
        %v890 = vld [vmem:[%s3 + $0xb4] sm:$0xf]
        %v891 = vld [vmem:[%s3 + $0xb8] sm:$0xf]
        %v892 = vld [vmem:[%s3 + $0xbc] sm:$0xf]
        %v893 = vld [vmem:[%s3 + $0xc0] sm:$0xf]
        %v894 = vld [vmem:[%s3 + $0xc4] sm:$0xf]
        %v895 = vld [vmem:[%s3 + $0xc8] sm:$0xf]
        %v896 = vld [vmem:[%s3 + $0xcc] sm:$0xf]
        %v897 = vld [vmem:[%s3 + $0xd0] sm:$0xf]
        %v898 = vld [vmem:[%s3 + $0xd4] sm:$0xf]
        %v899 = vld [vmem:[%s3 + $0xd8] sm:$0xf]
        %v900 = vld [vmem:[%s3 + $0xdc] sm:$0xf]
        %v901 = vld [vmem:[%s3 + $0xe0] sm:$0xf]
        %v902 = vld [vmem:[%s3 + $0xe4] sm:$0xf]
        %v903 = vld [vmem:[%s3 + $0xe8] sm:$0xf]
        %v904 = vld [vmem:[%s3 + $0xec] sm:$0xf]
        %v905 = vld [vmem:[%s3 + $0xf0] sm:$0xf]
        %v906 = vld [vmem:[%s3 + $0xf4] sm:$0xf]
        %v907 = vld [vmem:[%s3 + $0xf8] sm:$0xf]
        %v908 = vld [vmem:[%s3 + $0xfc] sm:$0xf]
        %v909 = vld [vmem:[#allocation12] sm:$0x1]
        %v911 = vlaneseq
        %v912 = vshrl.u32 %v911, 7
        %v913 = vsub.s32 0, %v912
        %v914 = vrot.slane %v909, %v913
        %v980 = vunpack.c.l.b16 %v845
        %v981 = vunpack.c.l.b16 %v846
        %v982 = vunpack.c.l.b16 %v847
        %v983 = vunpack.c.l.b16 %v848
        %v984 = vunpack.c.l.b16 %v849
        %v985 = vunpack.c.l.b16 %v850
        %v986 = vunpack.c.l.b16 %v851
        %v987 = vunpack.c.l.b16 %v852
        %v988 = vunpack.c.l.b16 %v853
        %v989 = vunpack.c.l.b16 %v854
        %v990 = vunpack.c.l.b16 %v855
        %v991 = vunpack.c.l.b16 %v856
        %v992 = vunpack.c.l.b16 %v857
        %v993 = vunpack.c.l.b16 %v858
        %v994 = vunpack.c.l.b16 %v859
        %v995 = vunpack.c.l.b16 %v860
        %v996 = vunpack.c.l.b16 %v861
        %v997 = vunpack.c.l.b16 %v862
        %v998 = vunpack.c.l.b16 %v863
        %v999 = vunpack.c.l.b16 %v864
        %v1000 = vunpack.c.l.b16 %v865
        %v1001 = vunpack.c.l.b16 %v866
        %v1002 = vunpack.c.l.b16 %v867
        %v1003 = vunpack.c.l.b16 %v868
        %v1004 = vunpack.c.l.b16 %v869
        %v1005 = vunpack.c.l.b16 %v870
        %v1006 = vunpack.c.l.b16 %v871
        %v1007 = vunpack.c.l.b16 %v872
        %v1008 = vunpack.c.l.b16 %v873
        %v1009 = vunpack.c.l.b16 %v874
        %v1010 = vunpack.c.l.b16 %v875
        %v1011 = vunpack.c.l.b16 %v876
        %v1012 = vunpack.c.l.b16 %v877
        %v1013 = vunpack.c.l.b16 %v878
        %v1014 = vunpack.c.l.b16 %v879
        %v1015 = vunpack.c.l.b16 %v880
        %v1016 = vunpack.c.l.b16 %v881
        %v1017 = vunpack.c.l.b16 %v882
        %v1018 = vunpack.c.l.b16 %v883
        %v1019 = vunpack.c.l.b16 %v884
        %v1020 = vunpack.c.l.b16 %v885
        %v1021 = vunpack.c.l.b16 %v886
        %v1022 = vunpack.c.l.b16 %v887
        %v1023 = vunpack.c.l.b16 %v888
        %v1024 = vunpack.c.l.b16 %v889
        %v1025 = vunpack.c.l.b16 %v890
        %v1026 = vunpack.c.l.b16 %v891
        %v1027 = vunpack.c.l.b16 %v892
        %v1028 = vunpack.c.l.b16 %v893
        %v1029 = vunpack.c.l.b16 %v894
        %v1030 = vunpack.c.l.b16 %v895
        %v1031 = vunpack.c.l.b16 %v896
        %v1032 = vunpack.c.l.b16 %v897
        %v1033 = vunpack.c.l.b16 %v898
        %v1034 = vunpack.c.l.b16 %v899
        %v1035 = vunpack.c.l.b16 %v900
        %v1036 = vunpack.c.l.b16 %v901
        %v1037 = vunpack.c.l.b16 %v902
        %v1038 = vunpack.c.l.b16 %v903
        %v1039 = vunpack.c.l.b16 %v904
        %v1040 = vunpack.c.l.b16 %v905
        %v1041 = vunpack.c.l.b16 %v906
        %v1042 = vunpack.c.l.b16 %v907
        %v1043 = vunpack.c.l.b16 %v908
        %v1044 = vpack.c.b16 %v981, %v980
        %v1045 = vpack.c.b16 %v983, %v982
        %v1046 = vpack.c.b16 %v985, %v984
        %v1047 = vpack.c.b16 %v987, %v986
        %v1048 = vpack.c.b16 %v989, %v988
        %v1049 = vpack.c.b16 %v991, %v990
        %v1050 = vpack.c.b16 %v993, %v992
        %v1051 = vpack.c.b16 %v995, %v994
        %v1052 = vpack.c.b16 %v997, %v996
        %v1053 = vpack.c.b16 %v999, %v998
        %v1054 = vpack.c.b16 %v1001, %v1000
        %v1055 = vpack.c.b16 %v1003, %v1002
        %v1056 = vpack.c.b16 %v1005, %v1004
        %v1057 = vpack.c.b16 %v1007, %v1006
        %v1058 = vpack.c.b16 %v1009, %v1008
        %v1059 = vpack.c.b16 %v1011, %v1010
        %v1060 = vpack.c.b16 %v1013, %v1012
        %v1061 = vpack.c.b16 %v1015, %v1014
        %v1062 = vpack.c.b16 %v1017, %v1016
        %v1063 = vpack.c.b16 %v1019, %v1018
        %v1064 = vpack.c.b16 %v1021, %v1020
        %v1065 = vpack.c.b16 %v1023, %v1022
        %v1066 = vpack.c.b16 %v1025, %v1024
        %v1067 = vpack.c.b16 %v1027, %v1026
        %v1068 = vpack.c.b16 %v1029, %v1028
        %v1069 = vpack.c.b16 %v1031, %v1030
        %v1070 = vpack.c.b16 %v1033, %v1032
        %v1071 = vpack.c.b16 %v1035, %v1034
        %v1072 = vpack.c.b16 %v1037, %v1036
        %v1073 = vpack.c.b16 %v1039, %v1038
        %v1074 = vpack.c.b16 %v1041, %v1040
        %v1075 = vpack.c.b16 %v1043, %v1042
        %1108 = vmatprep.subr.bf16.mxu0 0
        %1109 = vmatpush1.bf16.msra.mxu0 %v1051
        %1110 = vmatprep.subr.bf16.mxu0 0
        %1111 = vmatpush1.bf16.msra.mxu0 %v1050
        %1112 = vmatprep.subr.bf16.mxu0 0
        %1113 = vmatpush1.bf16.msra.mxu0 %v1049
        %1114 = vmatprep.subr.bf16.mxu0 0
        %1115 = vmatpush1.bf16.msra.mxu0 %v1048
        %1116 = vmatprep.subr.bf16.mxu0 0
        %1117 = vmatpush1.bf16.msra.mxu0 %v1047
        %1118 = vmatprep.subr.bf16.mxu0 0
        %1119 = vmatpush1.bf16.msra.mxu0 %v1046
        %1120 = vmatprep.subr.bf16.mxu0 0
        %1121 = vmatpush1.bf16.msra.mxu0 %v1045
        %1122 = vmatprep.subr.bf16.mxu0 0
        %1123 = vmatpush1.bf16.msra.mxu0 %v1044
        %1124 = vmatprep.subr.bf16.mxu0 0
        %1125 = vmatpush2.bf16.msra.mxu0 %v1059
        %1126 = vmatprep.subr.bf16.mxu0 0
        %1127 = vmatpush2.bf16.msra.mxu0 %v1058
        %1128 = vmatprep.subr.bf16.mxu0 0
        %1129 = vmatpush2.bf16.msra.mxu0 %v1057
        %1130 = vmatprep.subr.bf16.mxu0 0
        %1131 = vmatpush2.bf16.msra.mxu0 %v1056
        %1132 = vmatprep.subr.bf16.mxu0 0
        %1133 = vmatpush2.bf16.msra.mxu0 %v1055
        %1134 = vmatprep.subr.bf16.mxu0 0
        %1135 = vmatpush2.bf16.msra.mxu0 %v1054
        %1136 = vmatprep.subr.bf16.mxu0 0
        %1137 = vmatpush2.bf16.msra.mxu0 %v1053
        %1138 = vmatprep.subr.bf16.mxu0 0
        %1139 = vmatpush2.bf16.msra.mxu0 %v1052
        %1140 = vmatprep.mubr.bf16.mxu0 %v842
        %1141 = vmatmul.mubr.bf16.gmra.mxu0 %v841
        %v1142 = vpop.f32.mrf.mxu0
        %v1143 = vadd.f32 %v914, %v1142
        %v1144 = vpop.f32.mrf.mxu0
        %v1145 = vpop.f32.mrf.mxu0
        %v1146 = vpop.f32.mrf.mxu0
        %1147 = vdwg.mxu0
        %1148 = vmatprep.subr.bf16.mxu0 0
        %1149 = vmatpush1.bf16.msra.mxu0 %v1067
        %1150 = vmatprep.subr.bf16.mxu0 0
        %1151 = vmatpush1.bf16.msra.mxu0 %v1066
        %1152 = vmatprep.subr.bf16.mxu0 0
        %1153 = vmatpush1.bf16.msra.mxu0 %v1065
        %1154 = vmatprep.subr.bf16.mxu0 0
        %1155 = vmatpush1.bf16.msra.mxu0 %v1064
        %1156 = vmatprep.subr.bf16.mxu0 0
        %1157 = vmatpush1.bf16.msra.mxu0 %v1063
        %1158 = vmatprep.subr.bf16.mxu0 0
        %1159 = vmatpush1.bf16.msra.mxu0 %v1062
        %1160 = vmatprep.subr.bf16.mxu0 0
        %1161 = vmatpush1.bf16.msra.mxu0 %v1061
        %1162 = vmatprep.subr.bf16.mxu0 0
        %1163 = vmatpush1.bf16.msra.mxu0 %v1060
        %1164 = vmatprep.subr.bf16.mxu0 0
        %1165 = vmatpush2.bf16.msra.mxu0 %v1075
        %1166 = vmatprep.subr.bf16.mxu0 0
        %1167 = vmatpush2.bf16.msra.mxu0 %v1074
        %1168 = vmatprep.subr.bf16.mxu0 0
        %1169 = vmatpush2.bf16.msra.mxu0 %v1073
        %1170 = vmatprep.subr.bf16.mxu0 0
        %1171 = vmatpush2.bf16.msra.mxu0 %v1072
        %1172 = vmatprep.subr.bf16.mxu0 0
        %1173 = vmatpush2.bf16.msra.mxu0 %v1071
        %1174 = vmatprep.subr.bf16.mxu0 0
        %1175 = vmatpush2.bf16.msra.mxu0 %v1070
        %1176 = vmatprep.subr.bf16.mxu0 0
        %1177 = vmatpush2.bf16.msra.mxu0 %v1069
        %1178 = vmatprep.subr.bf16.mxu0 0
        %1179 = vmatpush2.bf16.msra.mxu0 %v1068
        %1180 = vmatprep.mubr.bf16.mxu0 %v844
        %1181 = vmatmul.mubr.bf16.gmra.mxu0 %v843
        %v1182 = vpop.f32.mrf.mxu0
        %v1183 = vadd.f32 %v1143, %v1182
        %v1184 = vpop.f32.mrf.mxu0
        %v1185 = vpop.f32.mrf.mxu0
        %v1186 = vpop.f32.mrf.mxu0
        %1187 = vdwg.mxu0
        %v1188 = vlaneseq
        %v1189 = vshrl.u32 %v1188, 7
        %v1190 = vadd.s32 %v1189, 8
        %v1191 = vadd.s32 %v1189, 16
        %v1192 = vadd.s32 %v1189, 24
        %v1193 = vadd.s32 %v1189, 32
        %v1194 = vadd.s32 %v1189, 40
        %v1195 = vadd.s32 %v1189, 48
        %v1196 = vadd.s32 %v1189, 56
        %v1197 = vadd.s32 %v1189, 64
        %v1198 = vadd.s32 %v1189, 72
        %v1199 = vadd.s32 %v1189, 80
        %v1200 = vadd.s32 %v1189, 88
        %v1201 = vadd.s32 %v1189, 96
        %v1202 = vadd.s32 %v1189, 104
        %v1203 = vadd.s32 %v1189, 112
        %v1204 = vadd.s32 %v1189, 120
        %vm1205 = vcmp.lt.s32.totalorder %v1189, 0
        %v1206 = vsub.s32 0, %v1189
        %v1207 = vsel %vm1205, %v1206, %v1189
        %v1208 = vshrl.u32 %v1207, 4
        %v1209 = vand.u32 %v1207, 15
        %v1210 = vsub.s32 0, %v1209
        %v1211 = vsel %vm1205, %v1210, %v1209
        %vm1212 = vcmp.lt.s32.totalorder %v1190, 0
        %v1213 = vsub.s32 0, %v1190
        %v1214 = vsel %vm1212, %v1213, %v1190
        %v1215 = vshrl.u32 %v1214, 4
        %v1216 = vand.u32 %v1214, 15
        %v1217 = vsub.s32 0, %v1216
        %v1218 = vsel %vm1212, %v1217, %v1216
        %vm1219 = vcmp.lt.s32.totalorder %v1191, 0
        %v1220 = vsub.s32 0, %v1191
        %v1221 = vsel %vm1219, %v1220, %v1191
        %v1222 = vshrl.u32 %v1221, 4
        %v1223 = vand.u32 %v1221, 15
        %v1224 = vsub.s32 0, %v1223
        %v1225 = vsel %vm1219, %v1224, %v1223
        %vm1226 = vcmp.lt.s32.totalorder %v1192, 0
        %v1227 = vsub.s32 0, %v1192
        %v1228 = vsel %vm1226, %v1227, %v1192
        %v1229 = vshrl.u32 %v1228, 4
        %v1230 = vand.u32 %v1228, 15
        %v1231 = vsub.s32 0, %v1230
        %v1232 = vsel %vm1226, %v1231, %v1230
        %vm1233 = vcmp.lt.s32.totalorder %v1193, 0
        %v1234 = vsub.s32 0, %v1193
        %v1235 = vsel %vm1233, %v1234, %v1193
        %v1236 = vshrl.u32 %v1235, 4
        %v1237 = vand.u32 %v1235, 15
        %v1238 = vsub.s32 0, %v1237
        %v1239 = vsel %vm1233, %v1238, %v1237
        %vm1240 = vcmp.lt.s32.totalorder %v1194, 0
        %v1241 = vsub.s32 0, %v1194
        %v1242 = vsel %vm1240, %v1241, %v1194
        %v1243 = vshrl.u32 %v1242, 4
        %v1244 = vand.u32 %v1242, 15
        %v1245 = vsub.s32 0, %v1244
        %v1246 = vsel %vm1240, %v1245, %v1244
        %vm1247 = vcmp.lt.s32.totalorder %v1195, 0
        %v1248 = vsub.s32 0, %v1195
        %v1249 = vsel %vm1247, %v1248, %v1195
        %v1250 = vshrl.u32 %v1249, 4
        %v1251 = vand.u32 %v1249, 15
        %v1252 = vsub.s32 0, %v1251
        %v1253 = vsel %vm1247, %v1252, %v1251
        %vm1254 = vcmp.lt.s32.totalorder %v1196, 0
        %v1255 = vsub.s32 0, %v1196
        %v1256 = vsel %vm1254, %v1255, %v1196
        %v1257 = vshrl.u32 %v1256, 4
        %v1258 = vand.u32 %v1256, 15
        %v1259 = vsub.s32 0, %v1258
        %v1260 = vsel %vm1254, %v1259, %v1258
        %vm1261 = vcmp.lt.s32.totalorder %v1197, 0
        %v1262 = vsub.s32 0, %v1197
        %v1263 = vsel %vm1261, %v1262, %v1197
        %v1264 = vshrl.u32 %v1263, 4
        %v1265 = vand.u32 %v1263, 15
        %v1266 = vsub.s32 0, %v1265
        %v1267 = vsel %vm1261, %v1266, %v1265
        %vm1268 = vcmp.lt.s32.totalorder %v1198, 0
        %v1269 = vsub.s32 0, %v1198
        %v1270 = vsel %vm1268, %v1269, %v1198
        %v1271 = vshrl.u32 %v1270, 4
        %v1272 = vand.u32 %v1270, 15
        %v1273 = vsub.s32 0, %v1272
        %v1274 = vsel %vm1268, %v1273, %v1272
        %vm1275 = vcmp.lt.s32.totalorder %v1199, 0
        %v1276 = vsub.s32 0, %v1199
        %v1277 = vsel %vm1275, %v1276, %v1199
        %v1278 = vshrl.u32 %v1277, 4
        %v1279 = vand.u32 %v1277, 15
        %v1280 = vsub.s32 0, %v1279
        %v1281 = vsel %vm1275, %v1280, %v1279
        %vm1282 = vcmp.lt.s32.totalorder %v1200, 0
        %v1283 = vsub.s32 0, %v1200
        %v1284 = vsel %vm1282, %v1283, %v1200
        %v1285 = vshrl.u32 %v1284, 4
        %v1286 = vand.u32 %v1284, 15
        %v1287 = vsub.s32 0, %v1286
        %v1288 = vsel %vm1282, %v1287, %v1286
        %vm1289 = vcmp.lt.s32.totalorder %v1201, 0
        %v1290 = vsub.s32 0, %v1201
        %v1291 = vsel %vm1289, %v1290, %v1201
        %v1292 = vshrl.u32 %v1291, 4
        %v1293 = vand.u32 %v1291, 15
        %v1294 = vsub.s32 0, %v1293
        %v1295 = vsel %vm1289, %v1294, %v1293
        %vm1296 = vcmp.lt.s32.totalorder %v1202, 0
        %v1297 = vsub.s32 0, %v1202
        %v1298 = vsel %vm1296, %v1297, %v1202
        %v1299 = vshrl.u32 %v1298, 4
        %v1300 = vand.u32 %v1298, 15
        %v1301 = vsub.s32 0, %v1300
        %v1302 = vsel %vm1296, %v1301, %v1300
        %vm1303 = vcmp.lt.s32.totalorder %v1203, 0
        %v1304 = vsub.s32 0, %v1203
        %v1305 = vsel %vm1303, %v1304, %v1203
        %v1306 = vshrl.u32 %v1305, 4
        %v1307 = vand.u32 %v1305, 15
        %v1308 = vsub.s32 0, %v1307
        %v1309 = vsel %vm1303, %v1308, %v1307
        %vm1310 = vcmp.lt.s32.totalorder %v1204, 0
        %v1311 = vsub.s32 0, %v1204
        %v1312 = vsel %vm1310, %v1311, %v1204
        %v1313 = vshrl.u32 %v1312, 4
        %v1314 = vand.u32 %v1312, 15
        %v1315 = vsub.s32 0, %v1314
        %v1316 = vsel %vm1310, %v1315, %v1314
        %vm1317 = vcmp.ne.s32.totalorder %v1211, 0
        %vm1318 = vcmp.ne.s32.totalorder %v1218, 0
        %vm1319 = vcmp.ne.s32.totalorder %v1225, 0
        %vm1320 = vcmp.ne.s32.totalorder %v1232, 0
        %vm1321 = vcmp.ne.s32.totalorder %v1239, 0
        %vm1322 = vcmp.ne.s32.totalorder %v1246, 0
        %vm1323 = vcmp.ne.s32.totalorder %v1253, 0
        %vm1324 = vcmp.ne.s32.totalorder %v1260, 0
        %vm1325 = vcmp.ne.s32.totalorder %v1267, 0
        %vm1326 = vcmp.ne.s32.totalorder %v1274, 0
        %vm1327 = vcmp.ne.s32.totalorder %v1281, 0
        %vm1328 = vcmp.ne.s32.totalorder %v1288, 0
        %vm1329 = vcmp.ne.s32.totalorder %v1295, 0
        %vm1330 = vcmp.ne.s32.totalorder %v1302, 0
        %vm1331 = vcmp.ne.s32.totalorder %v1309, 0
        %vm1332 = vcmp.ne.s32.totalorder %v1316, 0
        %vm1333 = vcmp.lt.s32.totalorder %v1211, 0
        %vm1334 = vcmp.lt.s32.totalorder %v1218, 0
        %vm1335 = vcmp.lt.s32.totalorder %v1225, 0
        %vm1336 = vcmp.lt.s32.totalorder %v1232, 0
        %vm1337 = vcmp.lt.s32.totalorder %v1239, 0
        %vm1338 = vcmp.lt.s32.totalorder %v1246, 0
        %vm1339 = vcmp.lt.s32.totalorder %v1253, 0
        %vm1340 = vcmp.lt.s32.totalorder %v1260, 0
        %vm1341 = vcmp.lt.s32.totalorder %v1267, 0
        %vm1342 = vcmp.lt.s32.totalorder %v1274, 0
        %vm1343 = vcmp.lt.s32.totalorder %v1281, 0
        %vm1344 = vcmp.lt.s32.totalorder %v1288, 0
        %vm1345 = vcmp.lt.s32.totalorder %v1295, 0
        %vm1346 = vcmp.lt.s32.totalorder %v1302, 0
        %vm1347 = vcmp.lt.s32.totalorder %v1309, 0
        %vm1348 = vcmp.lt.s32.totalorder %v1316, 0
        %vm1349 = vmand %vm1333, %vm1317
        %vm1350 = vmand %vm1334, %vm1318
        %vm1351 = vmand %vm1335, %vm1319
        %vm1352 = vmand %vm1336, %vm1320
        %vm1353 = vmand %vm1337, %vm1321
        %vm1354 = vmand %vm1338, %vm1322
        %vm1355 = vmand %vm1339, %vm1323
        %vm1356 = vmand %vm1340, %vm1324
        %vm1357 = vmand %vm1341, %vm1325
        %vm1358 = vmand %vm1342, %vm1326
        %vm1359 = vmand %vm1343, %vm1327
        %vm1360 = vmand %vm1344, %vm1328
        %vm1361 = vmand %vm1345, %vm1329
        %vm1362 = vmand %vm1346, %vm1330
        %vm1363 = vmand %vm1347, %vm1331
        %vm1364 = vmand %vm1348, %vm1332
        %v1365 = vadd.s32 %v1211, 16
        %v1366 = vadd.s32 %v1218, 16
        %v1367 = vadd.s32 %v1225, 16
        %v1368 = vadd.s32 %v1232, 16
        %v1369 = vadd.s32 %v1239, 16
        %v1370 = vadd.s32 %v1246, 16
        %v1371 = vadd.s32 %v1253, 16
        %v1372 = vadd.s32 %v1260, 16
        %v1373 = vadd.s32 %v1267, 16
        %v1374 = vadd.s32 %v1274, 16
        %v1375 = vadd.s32 %v1281, 16
        %v1376 = vadd.s32 %v1288, 16
        %v1377 = vadd.s32 %v1295, 16
        %v1378 = vadd.s32 %v1302, 16
        %v1379 = vadd.s32 %v1309, 16
        %v1380 = vadd.s32 %v1316, 16
        %v1381 = vsel %vm1349, %v1365, %v1211
        %v1382 = vsel %vm1350, %v1366, %v1218
        %v1383 = vsel %vm1351, %v1367, %v1225
        %v1384 = vsel %vm1352, %v1368, %v1232
        %v1385 = vsel %vm1353, %v1369, %v1239
        %v1386 = vsel %vm1354, %v1370, %v1246
        %v1387 = vsel %vm1355, %v1371, %v1253
        %v1388 = vsel %vm1356, %v1372, %v1260
        %v1389 = vsel %vm1357, %v1373, %v1267
        %v1390 = vsel %vm1358, %v1374, %v1274
        %v1391 = vsel %vm1359, %v1375, %v1281
        %v1392 = vsel %vm1360, %v1376, %v1288
        %v1393 = vsel %vm1361, %v1377, %v1295
        %v1394 = vsel %vm1362, %v1378, %v1302
        %v1395 = vsel %vm1363, %v1379, %v1309
        %v1396 = vsel %vm1364, %v1380, %v1316
        %v1397 = vlaneseq
        %v1398 = vand.u32 %v1397, 127
        %vm1399 = vcmp.lt.s32.totalorder %v1398, 0
        %v1400 = vsub.s32 0, %v1398
        %v1401 = vsel %vm1399, %v1400, %v1398
        %v1402 = vshrl.u32 %v1401, 4
        %v1403 = vand.u32 %v1401, 15
        %v1404 = vsub.s32 0, %v1403
        %v1405 = vsel %vm1399, %v1404, %v1403
        %vm1406 = vcmp.ne.s32.totalorder %v1405, 0
        %vm1407 = vcmp.lt.s32.totalorder %v1405, 0
        %vm1408 = vmand %vm1407, %vm1406
        %v1409 = vadd.s32 %v1405, 16
        %v1410 = vsel %vm1408, %v1409, %v1405
        %vm1411 = vcmp.eq.s32.totalorder %v1381, %v1410
        %vm1412 = vcmp.eq.s32.totalorder %v1382, %v1410
        %vm1413 = vcmp.eq.s32.totalorder %v1383, %v1410
        %vm1414 = vcmp.eq.s32.totalorder %v1384, %v1410
        %vm1415 = vcmp.eq.s32.totalorder %v1385, %v1410
        %vm1416 = vcmp.eq.s32.totalorder %v1386, %v1410
        %vm1417 = vcmp.eq.s32.totalorder %v1387, %v1410
        %vm1418 = vcmp.eq.s32.totalorder %v1388, %v1410
        %vm1419 = vcmp.eq.s32.totalorder %v1389, %v1410
        %vm1420 = vcmp.eq.s32.totalorder %v1390, %v1410
        %vm1421 = vcmp.eq.s32.totalorder %v1391, %v1410
        %vm1422 = vcmp.eq.s32.totalorder %v1392, %v1410
        %vm1423 = vcmp.eq.s32.totalorder %v1393, %v1410
        %vm1424 = vcmp.eq.s32.totalorder %v1394, %v1410
        %vm1425 = vcmp.eq.s32.totalorder %v1395, %v1410
        %vm1426 = vcmp.eq.s32.totalorder %v1396, %v1410
        %v1427 = vsel %vm1411, 1, 0
        %v1428 = vsel %vm1412, 1, 0
        %v1429 = vsel %vm1413, 1, 0
        %v1430 = vsel %vm1414, 1, 0
        %v1431 = vsel %vm1415, 1, 0
        %v1432 = vsel %vm1416, 1, 0
        %v1433 = vsel %vm1417, 1, 0
        %v1434 = vsel %vm1418, 1, 0
        %v1435 = vsel %vm1419, 1, 0
        %v1436 = vsel %vm1420, 1, 0
        %v1437 = vsel %vm1421, 1, 0
        %v1438 = vsel %vm1422, 1, 0
        %v1439 = vsel %vm1423, 1, 0
        %v1440 = vsel %vm1424, 1, 0
        %v1441 = vsel %vm1425, 1, 0
        %v1442 = vsel %vm1426, 1, 0
        %v1443 = vcvt.s32.f32 %v1427
        %v1444 = vcvt.s32.f32 %v1428
        %v1445 = vcvt.s32.f32 %v1429
        %v1446 = vcvt.s32.f32 %v1430
        %v1447 = vcvt.s32.f32 %v1431
        %v1448 = vcvt.s32.f32 %v1432
        %v1449 = vcvt.s32.f32 %v1433
        %v1450 = vcvt.s32.f32 %v1434
        %v1451 = vcvt.s32.f32 %v1435
        %v1452 = vcvt.s32.f32 %v1436
        %v1453 = vcvt.s32.f32 %v1437
        %v1454 = vcvt.s32.f32 %v1438
        %v1455 = vcvt.s32.f32 %v1439
        %v1456 = vcvt.s32.f32 %v1440
        %v1457 = vcvt.s32.f32 %v1441
        %v1458 = vcvt.s32.f32 %v1442
        %1459 = vadd.xlane.f32.xlu0 %v1183
        %v1460 = vpop.xlane.xlu0 %1459
        %v1461 = vrcp.pop 128.0
        %v1462 = vmul.f32 %v1460, %v1461
        %v1463 = vrot.slane %v1462, 4
        %v1464 = vadd.f32 %v1462, %v1463
        %v1465 = vrot.slane %v1464, 2
        %v1466 = vadd.f32 %v1464, %v1465
        %v1467 = vrot.slane %v1466, 1
        %v1468 = vadd.f32 %v1466, %v1467
        %v1469 = vrcp.pop 8.0
        %v1470 = vmul.f32 %v1468, %v1469
        %v1471 = vsub.f32 %v1183, %v1470
        %v1472 = vrot.slane %v1471, 4
        %v1473 = vadd.f32 %v1471, %v1472
        %v1474 = vrot.slane %v1473, 2
        %v1475 = vadd.f32 %v1473, %v1474
        %v1476 = vrot.slane %v1475, 1
        %v1477 = vadd.f32 %v1475, %v1476
        %v1478 = vmul.f32 %v1471, %v1471
        %v1479 = vrot.slane %v1478, 4
        %v1480 = vadd.f32 %v1478, %v1479
        %v1481 = vrot.slane %v1480, 2
        %v1482 = vadd.f32 %v1480, %v1481
        %v1483 = vrot.slane %v1482, 1
        %v1484 = vadd.f32 %v1482, %v1483
        %vm1485 = vcmask 1040384
        %v1486 = vsel %vm1485, %v1477, %v1484
        %1487 = vmatprep.subr.mxu0 0.0
        %1488 = vmatpush1.msra.mxu0 %v1458
        %1489 = vmatprep.subr.mxu0 0.0
        %1490 = vmatpush1.msra.mxu0 %v1457
        %1491 = vmatprep.subr.mxu0 0.0
        %1492 = vmatpush1.msra.mxu0 %v1456
        %1493 = vmatprep.subr.mxu0 0.0
        %1494 = vmatpush1.msra.mxu0 %v1455
        %1495 = vmatprep.subr.mxu0 0.0
        %1496 = vmatpush1.msra.mxu0 %v1454
        %1497 = vmatprep.subr.mxu0 0.0
        %1498 = vmatpush1.msra.mxu0 %v1453
        %1499 = vmatprep.subr.mxu0 0.0
        %1500 = vmatpush1.msra.mxu0 %v1452
        %1501 = vmatprep.subr.mxu0 0.0
        %1502 = vmatpush1.msra.mxu0 %v1451
        %1503 = vmatprep.subr.mxu0 0.0
        %1504 = vmatpush1.msra.mxu0 %v1450
        %1505 = vmatprep.subr.mxu0 0.0
        %1506 = vmatpush1.msra.mxu0 %v1449
        %1507 = vmatprep.subr.mxu0 0.0
        %1508 = vmatpush1.msra.mxu0 %v1448
        %1509 = vmatprep.subr.mxu0 0.0
        %1510 = vmatpush1.msra.mxu0 %v1447
        %1511 = vmatprep.subr.mxu0 0.0
        %1512 = vmatpush1.msra.mxu0 %v1446
        %1513 = vmatprep.subr.mxu0 0.0
        %1514 = vmatpush1.msra.mxu0 %v1445
        %1515 = vmatprep.subr.mxu0 0.0
        %1516 = vmatpush1.msra.mxu0 %v1444
        %1517 = vmatprep.subr.mxu0 0.0
        %1518 = vmatpush1.msra.mxu0 %v1443
        %1519 = vmatprep.subr.mxu0 0.0
        %1520 = vmatpush2.msra.mxu0 0.0
        %1521 = vmatprep.subr.mxu0 0.0
        %1522 = vmatpush2.msra.mxu0 0.0
        %1523 = vmatprep.subr.mxu0 0.0
        %1524 = vmatpush2.msra.mxu0 0.0
        %1525 = vmatprep.subr.mxu0 0.0
        %1526 = vmatpush2.msra.mxu0 0.0
        %1527 = vmatprep.subr.mxu0 0.0
        %1528 = vmatpush2.msra.mxu0 0.0
        %1529 = vmatprep.subr.mxu0 0.0
        %1530 = vmatpush2.msra.mxu0 0.0
        %1531 = vmatprep.subr.mxu0 0.0
        %1532 = vmatpush2.msra.mxu0 0.0
        %1533 = vmatprep.subr.mxu0 0.0
        %1534 = vmatpush2.msra.mxu0 0.0
        %1535 = vmatprep.subr.mxu0 0.0
        %1536 = vmatpush2.msra.mxu0 0.0
        %1537 = vmatprep.subr.mxu0 0.0
        %1538 = vmatpush2.msra.mxu0 0.0
        %1539 = vmatprep.subr.mxu0 0.0
        %1540 = vmatpush2.msra.mxu0 0.0
        %1541 = vmatprep.subr.mxu0 0.0
        %1542 = vmatpush2.msra.mxu0 0.0
        %1543 = vmatprep.subr.mxu0 0.0
        %1544 = vmatpush2.msra.mxu0 0.0
        %1545 = vmatprep.subr.mxu0 0.0
        %1546 = vmatpush2.msra.mxu0 0.0
        %1547 = vmatprep.subr.mxu0 0.0
        %1548 = vmatpush2.msra.mxu0 0.0
        %1549 = vmatprep.subr.mxu0 0.0
        %1550 = vmatpush2.msra.mxu0 0.0
        %1551 = vmatprep.mubr.f32.mxu0 0.0
        %1552 = vmatmul.mubr.f32.gmra.mxu0 %v1486
        %v1553 = vpop.f32.mrf.mxu0
        %v1554 = vadd.f32 0.0, %v1553
        %v1555 = vpop.f32.mrf.mxu0
        %1556 = vdwg.mxu0
        %v1557 = vmul.f32 %v1554, 0.015625
        %v1558 = vmul.f32 %v1557, %v1557
        %v1560 = vrot.slane %v1558, 7
        %v1562 = vsub.f32 %v1557, %v1560
        %v1563 = vlaneseq
        %v1564 = vshrl.u32 %v1563, 7
        %v1565 = vsub.s32 0, %v1564
        %v1566 = vrot.slane %v1557, %v1565
        %v1567 = vsub.f32 %v1471, %v1566
        %v1568 = vadd.f32 %v1562, 1e-05
        %v1569 = vrsqrt.pop %v1568
        %v1570 = vlaneseq
        %v1571 = vshrl.u32 %v1570, 7
        %v1572 = vsub.s32 1, %v1571
        %v1573 = vrot.slane %v1569, %v1572
        %v1574 = vmul.f32 %v1567, %v1573
        %vm1575 = vcmp.gt.f32.partialorder %v1574, 0.0
        %v1576 = vmul.f32 %v1574, 0.2
        %v1577 = vsel %vm1575, %v1574, %v1576
        %1578 = vst [vmem:[#allocation4] sm:$0xff] 0.0
        %1579 = vst [vmem:[#allocation4 + $0x8] sm:$0x3] 0.0
        %1580 = vst [vmem:[#allocation4 + $0x1] sm:$0xff] %v1577
        %v1581 = vld [vmem:[#allocation4] ss:$2 sm:$0xf]
        %s1582 = scalar_lea.vmem [#allocation4], 1
        %v1583 = vld [vmem:[%s1582] ss:$2 sm:$0xf]
        %s1584 = scalar_lea.vmem [#allocation4], 2
        %v1585 = vld [vmem:[%s1584] ss:$2 sm:$0xf]
        %s1586 = scalar_lea.vmem [#allocation4], 3
        %v1587 = vld [vmem:[%s1586] ss:$2 sm:$0xf]
        %v1588 = vpack.c.bf16 %v1581, %v1581
        %v1589 = vpack.c.bf16 %v1583, %v1583
        %v1590 = vpack.c.bf16 %v1585, %v1585
        %v1591 = vpack.c.bf16 %v1587, %v1587
        %v1592 = vld [vmem:[#allocation13] sm:$0xf]
        %v1593 = vld [vmem:[#allocation13 + $0x4] sm:$0xf]
        %v1594 = vld [vmem:[#allocation13 + $0x8] sm:$0xf]
        %v1595 = vld [vmem:[#allocation13 + $0xc] sm:$0xf]
        %v1596 = vld [vmem:[#allocation13 + $0x10] sm:$0xf]
        %v1597 = vld [vmem:[#allocation13 + $0x14] sm:$0xf]
        %v1598 = vld [vmem:[#allocation13 + $0x18] sm:$0xf]
        %v1599 = vld [vmem:[#allocation13 + $0x1c] sm:$0xf]
        %v1600 = vld [vmem:[#allocation13 + $0x20] sm:$0xf]
        %v1601 = vld [vmem:[#allocation13 + $0x24] sm:$0xf]
        %v1602 = vld [vmem:[#allocation13 + $0x28] sm:$0xf]
        %v1603 = vld [vmem:[#allocation13 + $0x2c] sm:$0xf]
        %v1604 = vld [vmem:[#allocation13 + $0x30] sm:$0xf]
        %v1605 = vld [vmem:[#allocation13 + $0x34] sm:$0xf]
        %v1606 = vld [vmem:[#allocation13 + $0x38] sm:$0xf]
        %v1607 = vld [vmem:[#allocation13 + $0x3c] sm:$0xf]
        %v1608 = vld [vmem:[#allocation13 + $0x40] sm:$0xf]
        %v1609 = vld [vmem:[#allocation13 + $0x44] sm:$0xf]
        %v1610 = vld [vmem:[#allocation13 + $0x48] sm:$0xf]
        %v1611 = vld [vmem:[#allocation13 + $0x4c] sm:$0xf]
        %v1612 = vld [vmem:[#allocation13 + $0x50] sm:$0xf]
        %v1613 = vld [vmem:[#allocation13 + $0x54] sm:$0xf]
        %v1614 = vld [vmem:[#allocation13 + $0x58] sm:$0xf]
        %v1615 = vld [vmem:[#allocation13 + $0x5c] sm:$0xf]
        %v1616 = vld [vmem:[#allocation13 + $0x60] sm:$0xf]
        %v1617 = vld [vmem:[#allocation13 + $0x64] sm:$0xf]
        %v1618 = vld [vmem:[#allocation13 + $0x68] sm:$0xf]
        %v1619 = vld [vmem:[#allocation13 + $0x6c] sm:$0xf]
        %v1620 = vld [vmem:[#allocation13 + $0x70] sm:$0xf]
        %v1621 = vld [vmem:[#allocation13 + $0x74] sm:$0xf]
        %v1622 = vld [vmem:[#allocation13 + $0x78] sm:$0xf]
        %v1623 = vld [vmem:[#allocation13 + $0x7c] sm:$0xf]
        %v1624 = vld [vmem:[#allocation13 + $0x80] sm:$0xf]
        %v1625 = vld [vmem:[#allocation13 + $0x84] sm:$0xf]
        %v1626 = vld [vmem:[#allocation13 + $0x88] sm:$0xf]
        %v1627 = vld [vmem:[#allocation13 + $0x8c] sm:$0xf]
        %v1628 = vld [vmem:[#allocation13 + $0x90] sm:$0xf]
        %v1629 = vld [vmem:[#allocation13 + $0x94] sm:$0xf]
        %v1630 = vld [vmem:[#allocation13 + $0x98] sm:$0xf]
        %v1631 = vld [vmem:[#allocation13 + $0x9c] sm:$0xf]
        %v1632 = vld [vmem:[#allocation13 + $0xa0] sm:$0xf]
        %v1633 = vld [vmem:[#allocation13 + $0xa4] sm:$0xf]
        %v1634 = vld [vmem:[#allocation13 + $0xa8] sm:$0xf]
        %v1635 = vld [vmem:[#allocation13 + $0xac] sm:$0xf]
        %v1636 = vld [vmem:[#allocation13 + $0xb0] sm:$0xf]
        %v1637 = vld [vmem:[#allocation13 + $0xb4] sm:$0xf]
        %v1638 = vld [vmem:[#allocation13 + $0xb8] sm:$0xf]
        %v1639 = vld [vmem:[#allocation13 + $0xbc] sm:$0xf]
        %v1640 = vld [vmem:[#allocation13 + $0xc0] sm:$0xf]
        %v1641 = vld [vmem:[#allocation13 + $0xc4] sm:$0xf]
        %v1642 = vld [vmem:[#allocation13 + $0xc8] sm:$0xf]
        %v1643 = vld [vmem:[#allocation13 + $0xcc] sm:$0xf]
        %v1644 = vld [vmem:[#allocation13 + $0xd0] sm:$0xf]
        %v1645 = vld [vmem:[#allocation13 + $0xd4] sm:$0xf]
        %v1646 = vld [vmem:[#allocation13 + $0xd8] sm:$0xf]
        %v1647 = vld [vmem:[#allocation13 + $0xdc] sm:$0xf]
        %v1648 = vld [vmem:[#allocation13 + $0xe0] sm:$0xf]
        %v1649 = vld [vmem:[#allocation13 + $0xe4] sm:$0xf]
        %v1650 = vld [vmem:[#allocation13 + $0xe8] sm:$0xf]
        %v1651 = vld [vmem:[#allocation13 + $0xec] sm:$0xf]
        %v1652 = vld [vmem:[#allocation13 + $0xf0] sm:$0xf]
        %v1653 = vld [vmem:[#allocation13 + $0xf4] sm:$0xf]
        %v1654 = vld [vmem:[#allocation13 + $0xf8] sm:$0xf]
        %v1655 = vld [vmem:[#allocation13 + $0xfc] sm:$0xf]
        %v1656 = vld [vmem:[%s6] sm:$0x1]
        %v1658 = vlaneseq
        %v1659 = vshrl.u32 %v1658, 7
        %v1660 = vsub.s32 0, %v1659
        %v1661 = vrot.slane %v1656, %v1660
        %v1727 = vunpack.c.l.b16 %v1592
        %v1728 = vunpack.c.l.b16 %v1593
        %v1729 = vunpack.c.l.b16 %v1594
        %v1730 = vunpack.c.l.b16 %v1595
        %v1731 = vunpack.c.l.b16 %v1596
        %v1732 = vunpack.c.l.b16 %v1597
        %v1733 = vunpack.c.l.b16 %v1598
        %v1734 = vunpack.c.l.b16 %v1599
        %v1735 = vunpack.c.l.b16 %v1600
        %v1736 = vunpack.c.l.b16 %v1601
        %v1737 = vunpack.c.l.b16 %v1602
        %v1738 = vunpack.c.l.b16 %v1603
        %v1739 = vunpack.c.l.b16 %v1604
        %v1740 = vunpack.c.l.b16 %v1605
        %v1741 = vunpack.c.l.b16 %v1606
        %v1742 = vunpack.c.l.b16 %v1607
        %v1743 = vunpack.c.l.b16 %v1608
        %v1744 = vunpack.c.l.b16 %v1609
        %v1745 = vunpack.c.l.b16 %v1610
        %v1746 = vunpack.c.l.b16 %v1611
        %v1747 = vunpack.c.l.b16 %v1612
        %v1748 = vunpack.c.l.b16 %v1613
        %v1749 = vunpack.c.l.b16 %v1614
        %v1750 = vunpack.c.l.b16 %v1615
        %v1751 = vunpack.c.l.b16 %v1616
        %v1752 = vunpack.c.l.b16 %v1617
        %v1753 = vunpack.c.l.b16 %v1618
        %v1754 = vunpack.c.l.b16 %v1619
        %v1755 = vunpack.c.l.b16 %v1620
        %v1756 = vunpack.c.l.b16 %v1621
        %v1757 = vunpack.c.l.b16 %v1622
        %v1758 = vunpack.c.l.b16 %v1623
        %v1759 = vunpack.c.l.b16 %v1624
        %v1760 = vunpack.c.l.b16 %v1625
        %v1761 = vunpack.c.l.b16 %v1626
        %v1762 = vunpack.c.l.b16 %v1627
        %v1763 = vunpack.c.l.b16 %v1628
        %v1764 = vunpack.c.l.b16 %v1629
        %v1765 = vunpack.c.l.b16 %v1630
        %v1766 = vunpack.c.l.b16 %v1631
        %v1767 = vunpack.c.l.b16 %v1632
        %v1768 = vunpack.c.l.b16 %v1633
        %v1769 = vunpack.c.l.b16 %v1634
        %v1770 = vunpack.c.l.b16 %v1635
        %v1771 = vunpack.c.l.b16 %v1636
        %v1772 = vunpack.c.l.b16 %v1637
        %v1773 = vunpack.c.l.b16 %v1638
        %v1774 = vunpack.c.l.b16 %v1639
        %v1775 = vunpack.c.l.b16 %v1640
        %v1776 = vunpack.c.l.b16 %v1641
        %v1777 = vunpack.c.l.b16 %v1642
        %v1778 = vunpack.c.l.b16 %v1643
        %v1779 = vunpack.c.l.b16 %v1644
        %v1780 = vunpack.c.l.b16 %v1645
        %v1781 = vunpack.c.l.b16 %v1646
        %v1782 = vunpack.c.l.b16 %v1647
        %v1783 = vunpack.c.l.b16 %v1648
        %v1784 = vunpack.c.l.b16 %v1649
        %v1785 = vunpack.c.l.b16 %v1650
        %v1786 = vunpack.c.l.b16 %v1651
        %v1787 = vunpack.c.l.b16 %v1652
        %v1788 = vunpack.c.l.b16 %v1653
        %v1789 = vunpack.c.l.b16 %v1654
        %v1790 = vunpack.c.l.b16 %v1655
        %v1791 = vpack.c.b16 %v1728, %v1727
        %v1792 = vpack.c.b16 %v1730, %v1729
        %v1793 = vpack.c.b16 %v1732, %v1731
        %v1794 = vpack.c.b16 %v1734, %v1733
        %v1795 = vpack.c.b16 %v1736, %v1735
        %v1796 = vpack.c.b16 %v1738, %v1737
        %v1797 = vpack.c.b16 %v1740, %v1739
        %v1798 = vpack.c.b16 %v1742, %v1741
        %v1799 = vpack.c.b16 %v1744, %v1743
        %v1800 = vpack.c.b16 %v1746, %v1745
        %v1801 = vpack.c.b16 %v1748, %v1747
        %v1802 = vpack.c.b16 %v1750, %v1749
        %v1803 = vpack.c.b16 %v1752, %v1751
        %v1804 = vpack.c.b16 %v1754, %v1753
        %v1805 = vpack.c.b16 %v1756, %v1755
        %v1806 = vpack.c.b16 %v1758, %v1757
        %v1807 = vpack.c.b16 %v1760, %v1759
        %v1808 = vpack.c.b16 %v1762, %v1761
        %v1809 = vpack.c.b16 %v1764, %v1763
        %v1810 = vpack.c.b16 %v1766, %v1765
        %v1811 = vpack.c.b16 %v1768, %v1767
        %v1812 = vpack.c.b16 %v1770, %v1769
        %v1813 = vpack.c.b16 %v1772, %v1771
        %v1814 = vpack.c.b16 %v1774, %v1773
        %v1815 = vpack.c.b16 %v1776, %v1775
        %v1816 = vpack.c.b16 %v1778, %v1777
        %v1817 = vpack.c.b16 %v1780, %v1779
        %v1818 = vpack.c.b16 %v1782, %v1781
        %v1819 = vpack.c.b16 %v1784, %v1783
        %v1820 = vpack.c.b16 %v1786, %v1785
        %v1821 = vpack.c.b16 %v1788, %v1787
        %v1822 = vpack.c.b16 %v1790, %v1789
        %1855 = vmatprep.subr.bf16.mxu0 0
        %1856 = vmatpush1.bf16.msra.mxu0 %v1798
        %1857 = vmatprep.subr.bf16.mxu0 0
        %1858 = vmatpush1.bf16.msra.mxu0 %v1797
        %1859 = vmatprep.subr.bf16.mxu0 0
        %1860 = vmatpush1.bf16.msra.mxu0 %v1796
        %1861 = vmatprep.subr.bf16.mxu0 0
        %1862 = vmatpush1.bf16.msra.mxu0 %v1795
        %1863 = vmatprep.subr.bf16.mxu0 0
        %1864 = vmatpush1.bf16.msra.mxu0 %v1794
        %1865 = vmatprep.subr.bf16.mxu0 0
        %1866 = vmatpush1.bf16.msra.mxu0 %v1793
        %1867 = vmatprep.subr.bf16.mxu0 0
        %1868 = vmatpush1.bf16.msra.mxu0 %v1792
        %1869 = vmatprep.subr.bf16.mxu0 0
        %1870 = vmatpush1.bf16.msra.mxu0 %v1791
        %1871 = vmatprep.subr.bf16.mxu0 0
        %1872 = vmatpush2.bf16.msra.mxu0 %v1806
        %1873 = vmatprep.subr.bf16.mxu0 0
        %1874 = vmatpush2.bf16.msra.mxu0 %v1805
        %1875 = vmatprep.subr.bf16.mxu0 0
        %1876 = vmatpush2.bf16.msra.mxu0 %v1804
        %1877 = vmatprep.subr.bf16.mxu0 0
        %1878 = vmatpush2.bf16.msra.mxu0 %v1803
        %1879 = vmatprep.subr.bf16.mxu0 0
        %1880 = vmatpush2.bf16.msra.mxu0 %v1802
        %1881 = vmatprep.subr.bf16.mxu0 0
        %1882 = vmatpush2.bf16.msra.mxu0 %v1801
        %1883 = vmatprep.subr.bf16.mxu0 0
        %1884 = vmatpush2.bf16.msra.mxu0 %v1800
        %1885 = vmatprep.subr.bf16.mxu0 0
        %1886 = vmatpush2.bf16.msra.mxu0 %v1799
        %1887 = vmatprep.mubr.bf16.mxu0 %v1589
        %1888 = vmatmul.mubr.bf16.gmra.mxu0 %v1588
        %v1889 = vpop.f32.mrf.mxu0
        %v1890 = vadd.f32 %v1661, %v1889
        %v1891 = vpop.f32.mrf.mxu0
        %v1892 = vpop.f32.mrf.mxu0
        %v1893 = vpop.f32.mrf.mxu0
        %1894 = vdwg.mxu0
        %1895 = vmatprep.subr.bf16.mxu0 0
        %1896 = vmatpush1.bf16.msra.mxu0 %v1814
        %1897 = vmatprep.subr.bf16.mxu0 0
        %1898 = vmatpush1.bf16.msra.mxu0 %v1813
        %1899 = vmatprep.subr.bf16.mxu0 0
        %1900 = vmatpush1.bf16.msra.mxu0 %v1812
        %1901 = vmatprep.subr.bf16.mxu0 0
        %1902 = vmatpush1.bf16.msra.mxu0 %v1811
        %1903 = vmatprep.subr.bf16.mxu0 0
        %1904 = vmatpush1.bf16.msra.mxu0 %v1810
        %1905 = vmatprep.subr.bf16.mxu0 0
        %1906 = vmatpush1.bf16.msra.mxu0 %v1809
        %1907 = vmatprep.subr.bf16.mxu0 0
        %1908 = vmatpush1.bf16.msra.mxu0 %v1808
        %1909 = vmatprep.subr.bf16.mxu0 0
        %1910 = vmatpush1.bf16.msra.mxu0 %v1807
        %1911 = vmatprep.subr.bf16.mxu0 0
        %1912 = vmatpush2.bf16.msra.mxu0 %v1822
        %1913 = vmatprep.subr.bf16.mxu0 0
        %1914 = vmatpush2.bf16.msra.mxu0 %v1821
        %1915 = vmatprep.subr.bf16.mxu0 0
        %1916 = vmatpush2.bf16.msra.mxu0 %v1820
        %1917 = vmatprep.subr.bf16.mxu0 0
        %1918 = vmatpush2.bf16.msra.mxu0 %v1819
        %1919 = vmatprep.subr.bf16.mxu0 0
        %1920 = vmatpush2.bf16.msra.mxu0 %v1818
        %1921 = vmatprep.subr.bf16.mxu0 0
        %1922 = vmatpush2.bf16.msra.mxu0 %v1817
        %1923 = vmatprep.subr.bf16.mxu0 0
        %1924 = vmatpush2.bf16.msra.mxu0 %v1816
        %1925 = vmatprep.subr.bf16.mxu0 0
        %1926 = vmatpush2.bf16.msra.mxu0 %v1815
        %1927 = vmatprep.mubr.bf16.mxu0 %v1591
        %1928 = vmatmul.mubr.bf16.gmra.mxu0 %v1590
        %v1929 = vpop.f32.mrf.mxu0
        %v1930 = vadd.f32 %v1890, %v1929
        %v1931 = vpop.f32.mrf.mxu0
        %v1932 = vpop.f32.mrf.mxu0
        %v1933 = vpop.f32.mrf.mxu0
        %1934 = vdwg.mxu0
        %vm1935 = vcmp.lt.s32.totalorder %v1189, 0
        %v1936 = vsub.s32 0, %v1189
        %v1937 = vsel %vm1935, %v1936, %v1189
        %v1938 = vshrl.u32 %v1937, 5
        %v1939 = vand.u32 %v1937, 31
        %v1940 = vsub.s32 0, %v1939
        %v1941 = vsel %vm1935, %v1940, %v1939
        %vm1942 = vcmp.lt.s32.totalorder %v1190, 0
        %v1943 = vsub.s32 0, %v1190
        %v1944 = vsel %vm1942, %v1943, %v1190
        %v1945 = vshrl.u32 %v1944, 5
        %v1946 = vand.u32 %v1944, 31
        %v1947 = vsub.s32 0, %v1946
        %v1948 = vsel %vm1942, %v1947, %v1946
        %vm1949 = vcmp.lt.s32.totalorder %v1191, 0
        %v1950 = vsub.s32 0, %v1191
        %v1951 = vsel %vm1949, %v1950, %v1191
        %v1952 = vshrl.u32 %v1951, 5
        %v1953 = vand.u32 %v1951, 31
        %v1954 = vsub.s32 0, %v1953
        %v1955 = vsel %vm1949, %v1954, %v1953
        %vm1956 = vcmp.lt.s32.totalorder %v1192, 0
        %v1957 = vsub.s32 0, %v1192
        %v1958 = vsel %vm1956, %v1957, %v1192
        %v1959 = vshrl.u32 %v1958, 5
        %v1960 = vand.u32 %v1958, 31
        %v1961 = vsub.s32 0, %v1960
        %v1962 = vsel %vm1956, %v1961, %v1960
        %vm1963 = vcmp.lt.s32.totalorder %v1193, 0
        %v1964 = vsub.s32 0, %v1193
        %v1965 = vsel %vm1963, %v1964, %v1193
        %v1966 = vshrl.u32 %v1965, 5
        %v1967 = vand.u32 %v1965, 31
        %v1968 = vsub.s32 0, %v1967
        %v1969 = vsel %vm1963, %v1968, %v1967
        %vm1970 = vcmp.lt.s32.totalorder %v1194, 0
        %v1971 = vsub.s32 0, %v1194
        %v1972 = vsel %vm1970, %v1971, %v1194
        %v1973 = vshrl.u32 %v1972, 5
        %v1974 = vand.u32 %v1972, 31
        %v1975 = vsub.s32 0, %v1974
        %v1976 = vsel %vm1970, %v1975, %v1974
        %vm1977 = vcmp.lt.s32.totalorder %v1195, 0
        %v1978 = vsub.s32 0, %v1195
        %v1979 = vsel %vm1977, %v1978, %v1195
        %v1980 = vshrl.u32 %v1979, 5
        %v1981 = vand.u32 %v1979, 31
        %v1982 = vsub.s32 0, %v1981
        %v1983 = vsel %vm1977, %v1982, %v1981
        %vm1984 = vcmp.lt.s32.totalorder %v1196, 0
        %v1985 = vsub.s32 0, %v1196
        %v1986 = vsel %vm1984, %v1985, %v1196
        %v1987 = vshrl.u32 %v1986, 5
        %v1988 = vand.u32 %v1986, 31
        %v1989 = vsub.s32 0, %v1988
        %v1990 = vsel %vm1984, %v1989, %v1988
        %vm1991 = vcmp.lt.s32.totalorder %v1197, 0
        %v1992 = vsub.s32 0, %v1197
        %v1993 = vsel %vm1991, %v1992, %v1197
        %v1994 = vshrl.u32 %v1993, 5
        %v1995 = vand.u32 %v1993, 31
        %v1996 = vsub.s32 0, %v1995
        %v1997 = vsel %vm1991, %v1996, %v1995
        %vm1998 = vcmp.lt.s32.totalorder %v1198, 0
        %v1999 = vsub.s32 0, %v1198
        %v2000 = vsel %vm1998, %v1999, %v1198
        %v2001 = vshrl.u32 %v2000, 5
        %v2002 = vand.u32 %v2000, 31
        %v2003 = vsub.s32 0, %v2002
        %v2004 = vsel %vm1998, %v2003, %v2002
        %vm2005 = vcmp.lt.s32.totalorder %v1199, 0
        %v2006 = vsub.s32 0, %v1199
        %v2007 = vsel %vm2005, %v2006, %v1199
        %v2008 = vshrl.u32 %v2007, 5
        %v2009 = vand.u32 %v2007, 31
        %v2010 = vsub.s32 0, %v2009
        %v2011 = vsel %vm2005, %v2010, %v2009
        %vm2012 = vcmp.lt.s32.totalorder %v1200, 0
        %v2013 = vsub.s32 0, %v1200
        %v2014 = vsel %vm2012, %v2013, %v1200
        %v2015 = vshrl.u32 %v2014, 5
        %v2016 = vand.u32 %v2014, 31
        %v2017 = vsub.s32 0, %v2016
        %v2018 = vsel %vm2012, %v2017, %v2016
        %vm2019 = vcmp.lt.s32.totalorder %v1201, 0
        %v2020 = vsub.s32 0, %v1201
        %v2021 = vsel %vm2019, %v2020, %v1201
        %v2022 = vshrl.u32 %v2021, 5
        %v2023 = vand.u32 %v2021, 31
        %v2024 = vsub.s32 0, %v2023
        %v2025 = vsel %vm2019, %v2024, %v2023
        %vm2026 = vcmp.lt.s32.totalorder %v1202, 0
        %v2027 = vsub.s32 0, %v1202
        %v2028 = vsel %vm2026, %v2027, %v1202
        %v2029 = vshrl.u32 %v2028, 5
        %v2030 = vand.u32 %v2028, 31
        %v2031 = vsub.s32 0, %v2030
        %v2032 = vsel %vm2026, %v2031, %v2030
        %vm2033 = vcmp.lt.s32.totalorder %v1203, 0
        %v2034 = vsub.s32 0, %v1203
        %v2035 = vsel %vm2033, %v2034, %v1203
        %v2036 = vshrl.u32 %v2035, 5
        %v2037 = vand.u32 %v2035, 31
        %v2038 = vsub.s32 0, %v2037
        %v2039 = vsel %vm2033, %v2038, %v2037
        %vm2040 = vcmp.lt.s32.totalorder %v1204, 0
        %v2041 = vsub.s32 0, %v1204
        %v2042 = vsel %vm2040, %v2041, %v1204
        %v2043 = vshrl.u32 %v2042, 5
        %v2044 = vand.u32 %v2042, 31
        %v2045 = vsub.s32 0, %v2044
        %v2046 = vsel %vm2040, %v2045, %v2044
        %vm2047 = vcmp.ne.s32.totalorder %v1941, 0
        %vm2048 = vcmp.ne.s32.totalorder %v1948, 0
        %vm2049 = vcmp.ne.s32.totalorder %v1955, 0
        %vm2050 = vcmp.ne.s32.totalorder %v1962, 0
        %vm2051 = vcmp.ne.s32.totalorder %v1969, 0
        %vm2052 = vcmp.ne.s32.totalorder %v1976, 0
        %vm2053 = vcmp.ne.s32.totalorder %v1983, 0
        %vm2054 = vcmp.ne.s32.totalorder %v1990, 0
        %vm2055 = vcmp.ne.s32.totalorder %v1997, 0
        %vm2056 = vcmp.ne.s32.totalorder %v2004, 0
        %vm2057 = vcmp.ne.s32.totalorder %v2011, 0
        %vm2058 = vcmp.ne.s32.totalorder %v2018, 0
        %vm2059 = vcmp.ne.s32.totalorder %v2025, 0
        %vm2060 = vcmp.ne.s32.totalorder %v2032, 0
        %vm2061 = vcmp.ne.s32.totalorder %v2039, 0
        %vm2062 = vcmp.ne.s32.totalorder %v2046, 0
        %vm2063 = vcmp.lt.s32.totalorder %v1941, 0
        %vm2064 = vcmp.lt.s32.totalorder %v1948, 0
        %vm2065 = vcmp.lt.s32.totalorder %v1955, 0
        %vm2066 = vcmp.lt.s32.totalorder %v1962, 0
        %vm2067 = vcmp.lt.s32.totalorder %v1969, 0
        %vm2068 = vcmp.lt.s32.totalorder %v1976, 0
        %vm2069 = vcmp.lt.s32.totalorder %v1983, 0
        %vm2070 = vcmp.lt.s32.totalorder %v1990, 0
        %vm2071 = vcmp.lt.s32.totalorder %v1997, 0
        %vm2072 = vcmp.lt.s32.totalorder %v2004, 0
        %vm2073 = vcmp.lt.s32.totalorder %v2011, 0
        %vm2074 = vcmp.lt.s32.totalorder %v2018, 0
        %vm2075 = vcmp.lt.s32.totalorder %v2025, 0
        %vm2076 = vcmp.lt.s32.totalorder %v2032, 0
        %vm2077 = vcmp.lt.s32.totalorder %v2039, 0
        %vm2078 = vcmp.lt.s32.totalorder %v2046, 0
        %vm2079 = vmand %vm2063, %vm2047
        %vm2080 = vmand %vm2064, %vm2048
        %vm2081 = vmand %vm2065, %vm2049
        %vm2082 = vmand %vm2066, %vm2050
        %vm2083 = vmand %vm2067, %vm2051
        %vm2084 = vmand %vm2068, %vm2052
        %vm2085 = vmand %vm2069, %vm2053
        %vm2086 = vmand %vm2070, %vm2054
        %vm2087 = vmand %vm2071, %vm2055
        %vm2088 = vmand %vm2072, %vm2056
        %vm2089 = vmand %vm2073, %vm2057
        %vm2090 = vmand %vm2074, %vm2058
        %vm2091 = vmand %vm2075, %vm2059
        %vm2092 = vmand %vm2076, %vm2060
        %vm2093 = vmand %vm2077, %vm2061
        %vm2094 = vmand %vm2078, %vm2062
        %v2095 = vadd.s32 %v1941, 32
        %v2096 = vadd.s32 %v1948, 32
        %v2097 = vadd.s32 %v1955, 32
        %v2098 = vadd.s32 %v1962, 32
        %v2099 = vadd.s32 %v1969, 32
        %v2100 = vadd.s32 %v1976, 32
        %v2101 = vadd.s32 %v1983, 32
        %v2102 = vadd.s32 %v1990, 32
        %v2103 = vadd.s32 %v1997, 32
        %v2104 = vadd.s32 %v2004, 32
        %v2105 = vadd.s32 %v2011, 32
        %v2106 = vadd.s32 %v2018, 32
        %v2107 = vadd.s32 %v2025, 32
        %v2108 = vadd.s32 %v2032, 32
        %v2109 = vadd.s32 %v2039, 32
        %v2110 = vadd.s32 %v2046, 32
        %v2111 = vsel %vm2079, %v2095, %v1941
        %v2112 = vsel %vm2080, %v2096, %v1948
        %v2113 = vsel %vm2081, %v2097, %v1955
        %v2114 = vsel %vm2082, %v2098, %v1962
        %v2115 = vsel %vm2083, %v2099, %v1969
        %v2116 = vsel %vm2084, %v2100, %v1976
        %v2117 = vsel %vm2085, %v2101, %v1983
        %v2118 = vsel %vm2086, %v2102, %v1990
        %v2119 = vsel %vm2087, %v2103, %v1997
        %v2120 = vsel %vm2088, %v2104, %v2004
        %v2121 = vsel %vm2089, %v2105, %v2011
        %v2122 = vsel %vm2090, %v2106, %v2018
        %v2123 = vsel %vm2091, %v2107, %v2025
        %v2124 = vsel %vm2092, %v2108, %v2032
        %v2125 = vsel %vm2093, %v2109, %v2039
        %v2126 = vsel %vm2094, %v2110, %v2046
        %vm2127 = vcmp.lt.s32.totalorder %v1398, 0
        %v2128 = vsub.s32 0, %v1398
        %v2129 = vsel %vm2127, %v2128, %v1398
        %v2130 = vshrl.u32 %v2129, 5
        %v2131 = vand.u32 %v2129, 31
        %v2132 = vsub.s32 0, %v2131
        %v2133 = vsel %vm2127, %v2132, %v2131
        %vm2134 = vcmp.ne.s32.totalorder %v2133, 0
        %vm2135 = vcmp.lt.s32.totalorder %v2133, 0
        %vm2136 = vmand %vm2135, %vm2134
        %v2137 = vadd.s32 %v2133, 32
        %v2138 = vsel %vm2136, %v2137, %v2133
        %vm2139 = vcmp.eq.s32.totalorder %v2111, %v2138
        %vm2140 = vcmp.eq.s32.totalorder %v2112, %v2138
        %vm2141 = vcmp.eq.s32.totalorder %v2113, %v2138
        %vm2142 = vcmp.eq.s32.totalorder %v2114, %v2138
        %vm2143 = vcmp.eq.s32.totalorder %v2115, %v2138
        %vm2144 = vcmp.eq.s32.totalorder %v2116, %v2138
        %vm2145 = vcmp.eq.s32.totalorder %v2117, %v2138
        %vm2146 = vcmp.eq.s32.totalorder %v2118, %v2138
        %vm2147 = vcmp.eq.s32.totalorder %v2119, %v2138
        %vm2148 = vcmp.eq.s32.totalorder %v2120, %v2138
        %vm2149 = vcmp.eq.s32.totalorder %v2121, %v2138
        %vm2150 = vcmp.eq.s32.totalorder %v2122, %v2138
        %vm2151 = vcmp.eq.s32.totalorder %v2123, %v2138
        %vm2152 = vcmp.eq.s32.totalorder %v2124, %v2138
        %vm2153 = vcmp.eq.s32.totalorder %v2125, %v2138
        %vm2154 = vcmp.eq.s32.totalorder %v2126, %v2138
        %v2155 = vsel %vm2139, 1, 0
        %v2156 = vsel %vm2140, 1, 0
        %v2157 = vsel %vm2141, 1, 0
        %v2158 = vsel %vm2142, 1, 0
        %v2159 = vsel %vm2143, 1, 0
        %v2160 = vsel %vm2144, 1, 0
        %v2161 = vsel %vm2145, 1, 0
        %v2162 = vsel %vm2146, 1, 0
        %v2163 = vsel %vm2147, 1, 0
        %v2164 = vsel %vm2148, 1, 0
        %v2165 = vsel %vm2149, 1, 0
        %v2166 = vsel %vm2150, 1, 0
        %v2167 = vsel %vm2151, 1, 0
        %v2168 = vsel %vm2152, 1, 0
        %v2169 = vsel %vm2153, 1, 0
        %v2170 = vsel %vm2154, 1, 0
        %v2171 = vcvt.s32.f32 %v2155
        %v2172 = vcvt.s32.f32 %v2156
        %v2173 = vcvt.s32.f32 %v2157
        %v2174 = vcvt.s32.f32 %v2158
        %v2175 = vcvt.s32.f32 %v2159
        %v2176 = vcvt.s32.f32 %v2160
        %v2177 = vcvt.s32.f32 %v2161
        %v2178 = vcvt.s32.f32 %v2162
        %v2179 = vcvt.s32.f32 %v2163
        %v2180 = vcvt.s32.f32 %v2164
        %v2181 = vcvt.s32.f32 %v2165
        %v2182 = vcvt.s32.f32 %v2166
        %v2183 = vcvt.s32.f32 %v2167
        %v2184 = vcvt.s32.f32 %v2168
        %v2185 = vcvt.s32.f32 %v2169
        %v2186 = vcvt.s32.f32 %v2170
        %vm2187 = vcmask 1043456
        %v2188 = vsel %vm2187, %v1930, 0.0
        %2189 = vadd.xlane.f32.xlu0 %v2188
        %v2190 = vpop.xlane.xlu0 %2189
        %v2191 = vmul.f32 %v2190, %v1461
        %v2192 = vsel %vm2187, %v2191, 0.0
        %v2193 = vrot.slane %v2192, 4
        %v2194 = vadd.f32 %v2192, %v2193
        %v2195 = vrot.slane %v2194, 2
        %v2196 = vadd.f32 %v2194, %v2195
        %v2197 = vrot.slane %v2196, 1
        %v2198 = vadd.f32 %v2196, %v2197
        %v2199 = vrcp.pop 4.0
        %v2200 = vmul.f32 %v2198, %v2199
        %v2201 = vsub.f32 %v1930, %v2200
        %v2202 = vsel %vm2187, %v2201, 0.0
        %v2203 = vrot.slane %v2202, 4
        %v2204 = vadd.f32 %v2202, %v2203
        %v2205 = vrot.slane %v2204, 2
        %v2206 = vadd.f32 %v2204, %v2205
        %v2207 = vrot.slane %v2206, 1
        %v2208 = vadd.f32 %v2206, %v2207
        %v2209 = vmul.f32 %v2201, %v2201
        %v2210 = vsel %vm2187, %v2209, 0.0
        %v2211 = vrot.slane %v2210, 4
        %v2212 = vadd.f32 %v2210, %v2211
        %v2213 = vrot.slane %v2212, 2
        %v2214 = vadd.f32 %v2212, %v2213
        %v2215 = vrot.slane %v2214, 1
        %v2216 = vadd.f32 %v2214, %v2215
        %v2217 = vsel %vm1485, %v2208, %v2216
        %2218 = vmatprep.subr.mxu0 0.0
        %2219 = vmatpush1.msra.mxu0 %v2186
        %2220 = vmatprep.subr.mxu0 0.0
        %2221 = vmatpush1.msra.mxu0 %v2185
        %2222 = vmatprep.subr.mxu0 0.0
        %2223 = vmatpush1.msra.mxu0 %v2184
        %2224 = vmatprep.subr.mxu0 0.0
        %2225 = vmatpush1.msra.mxu0 %v2183
        %2226 = vmatprep.subr.mxu0 0.0
        %2227 = vmatpush1.msra.mxu0 %v2182
        %2228 = vmatprep.subr.mxu0 0.0
        %2229 = vmatpush1.msra.mxu0 %v2181
        %2230 = vmatprep.subr.mxu0 0.0
        %2231 = vmatpush1.msra.mxu0 %v2180
        %2232 = vmatprep.subr.mxu0 0.0
        %2233 = vmatpush1.msra.mxu0 %v2179
        %2234 = vmatprep.subr.mxu0 0.0
        %2235 = vmatpush1.msra.mxu0 %v2178
        %2236 = vmatprep.subr.mxu0 0.0
        %2237 = vmatpush1.msra.mxu0 %v2177
        %2238 = vmatprep.subr.mxu0 0.0
        %2239 = vmatpush1.msra.mxu0 %v2176
        %2240 = vmatprep.subr.mxu0 0.0
        %2241 = vmatpush1.msra.mxu0 %v2175
        %2242 = vmatprep.subr.mxu0 0.0
        %2243 = vmatpush1.msra.mxu0 %v2174
        %2244 = vmatprep.subr.mxu0 0.0
        %2245 = vmatpush1.msra.mxu0 %v2173
        %2246 = vmatprep.subr.mxu0 0.0
        %2247 = vmatpush1.msra.mxu0 %v2172
        %2248 = vmatprep.subr.mxu0 0.0
        %2249 = vmatpush1.msra.mxu0 %v2171
        %2250 = vmatprep.subr.mxu0 0.0
        %2251 = vmatpush2.msra.mxu0 0.0
        %2252 = vmatprep.subr.mxu0 0.0
        %2253 = vmatpush2.msra.mxu0 0.0
        %2254 = vmatprep.subr.mxu0 0.0
        %2255 = vmatpush2.msra.mxu0 0.0
        %2256 = vmatprep.subr.mxu0 0.0
        %2257 = vmatpush2.msra.mxu0 0.0
        %2258 = vmatprep.subr.mxu0 0.0
        %2259 = vmatpush2.msra.mxu0 0.0
        %2260 = vmatprep.subr.mxu0 0.0
        %2261 = vmatpush2.msra.mxu0 0.0
        %2262 = vmatprep.subr.mxu0 0.0
        %2263 = vmatpush2.msra.mxu0 0.0
        %2264 = vmatprep.subr.mxu0 0.0
        %2265 = vmatpush2.msra.mxu0 0.0
        %2266 = vmatprep.subr.mxu0 0.0
        %2267 = vmatpush2.msra.mxu0 0.0
        %2268 = vmatprep.subr.mxu0 0.0
        %2269 = vmatpush2.msra.mxu0 0.0
        %2270 = vmatprep.subr.mxu0 0.0
        %2271 = vmatpush2.msra.mxu0 0.0
        %2272 = vmatprep.subr.mxu0 0.0
        %2273 = vmatpush2.msra.mxu0 0.0
        %2274 = vmatprep.subr.mxu0 0.0
        %2275 = vmatpush2.msra.mxu0 0.0
        %2276 = vmatprep.subr.mxu0 0.0
        %2277 = vmatpush2.msra.mxu0 0.0
        %2278 = vmatprep.subr.mxu0 0.0
        %2279 = vmatpush2.msra.mxu0 0.0
        %2280 = vmatprep.subr.mxu0 0.0
        %2281 = vmatpush2.msra.mxu0 0.0
        %2282 = vmatprep.mubr.f32.mxu0 0.0
        %2283 = vmatmul.mubr.f32.gmra.mxu0 %v2217
        %v2284 = vpop.f32.mrf.mxu0
        %v2285 = vadd.f32 0.0, %v2284
        %v2286 = vpop.f32.mrf.mxu0
        %2287 = vdwg.mxu0
        %v2288 = vmul.f32 %v2285, 0.0625
        %v2289 = vmul.f32 %v2288, %v2288
        %v2291 = vrot.slane %v2289, 7
        %v2293 = vsub.f32 %v2288, %v2291
        %v2294 = vlaneseq
        %v2295 = vshrl.u32 %v2294, 7
        %v2296 = vsub.s32 0, %v2295
        %v2297 = vrot.slane %v2288, %v2296
        %v2298 = vsub.f32 %v2201, %v2297
        %v2299 = vadd.f32 %v2293, 1e-05
        %v2300 = vrsqrt.pop %v2299
        %v2301 = vlaneseq
        %v2302 = vshrl.u32 %v2301, 7
        %v2303 = vsub.s32 1, %v2302
        %v2304 = vrot.slane %v2300, %v2303
        %v2305 = vmul.f32 %v2298, %v2304
        %vm2306 = vcmp.gt.f32.partialorder %v2305, 0.0
        %v2307 = vmul.f32 %v2305, 0.2
        %v2308 = vsel %vm2306, %v2305, %v2307
        %2309 = vst [vmem:[#allocation5] sm:$0x3f] 0.0
        %2310 = vst [vmem:[#allocation5 + $0x1] sm:$0xf] %v2308
        %v2311 = vld [vmem:[#allocation5] sm:$0x7]
        %v2312 = vld [vmem:[#allocation5 + $0x1] sm:$0x7]
        %v2313 = vld [vmem:[#allocation5 + $0x2] sm:$0x7]
        %v2314 = vld [vmem:[#allocation5 + $0x3] sm:$0x7]
        %v2315 = vpack.c.bf16 %v2311, %v2311
        %v2316 = vpack.c.bf16 %v2312, %v2312
        %v2317 = vpack.c.bf16 %v2313, %v2313
        %v2318 = vpack.c.bf16 %v2314, %v2314
        %v2319 = vld [vmem:[%s7] sm:$0xff]
        %v2320 = vld [vmem:[%s7 + $0x8] sm:$0xff]
        %v2321 = vld [vmem:[%s7 + $0x10] sm:$0xff]
        %v2322 = vld [vmem:[%s7 + $0x18] sm:$0xff]
        %v2323 = vld [vmem:[%s7 + $0x20] sm:$0xff]
        %v2324 = vld [vmem:[%s7 + $0x28] sm:$0xff]
        %v2325 = vld [vmem:[%s7 + $0x30] sm:$0xff]
        %v2326 = vld [vmem:[%s7 + $0x38] sm:$0xff]
        %v2327 = vld [vmem:[%s7 + $0x40] sm:$0xff]
        %v2328 = vld [vmem:[%s7 + $0x48] sm:$0xff]
        %v2329 = vld [vmem:[%s7 + $0x50] sm:$0xff]
        %v2330 = vld [vmem:[%s7 + $0x58] sm:$0xff]
        %v2331 = vld [vmem:[%s7 + $0x60] sm:$0xff]
        %v2332 = vld [vmem:[%s7 + $0x68] sm:$0xff]
        %v2333 = vld [vmem:[%s7 + $0x70] sm:$0xff]
        %v2334 = vld [vmem:[%s7 + $0x78] sm:$0xff]
        %v2335 = vld [vmem:[%s7 + $0x80] sm:$0xff]
        %v2336 = vld [vmem:[%s7 + $0x88] sm:$0xff]
        %v2337 = vld [vmem:[%s7 + $0x90] sm:$0xff]
        %v2338 = vld [vmem:[%s7 + $0x98] sm:$0xff]
        %v2339 = vld [vmem:[%s7 + $0xa0] sm:$0xff]
        %v2340 = vld [vmem:[%s7 + $0xa8] sm:$0xff]
        %v2341 = vld [vmem:[%s7 + $0xb0] sm:$0xff]
        %v2342 = vld [vmem:[%s7 + $0xb8] sm:$0xff]
        %v2343 = vld [vmem:[%s7 + $0xc0] sm:$0xff]
        %v2344 = vld [vmem:[%s7 + $0xc8] sm:$0xff]
        %v2345 = vld [vmem:[%s7 + $0xd0] sm:$0xff]
        %v2346 = vld [vmem:[%s7 + $0xd8] sm:$0xff]
        %v2347 = vld [vmem:[%s7 + $0xe0] sm:$0xff]
        %v2348 = vld [vmem:[%s7 + $0xe8] sm:$0xff]
        %v2349 = vld [vmem:[%s7 + $0xf0] sm:$0xff]
        %v2350 = vld [vmem:[%s7 + $0xf8] sm:$0xff]
        %v2351 = vld [vmem:[%s7 + $0x100] sm:$0xff]
        %v2352 = vld [vmem:[%s7 + $0x108] sm:$0xff]
        %v2353 = vld [vmem:[%s7 + $0x110] sm:$0xff]
        %v2354 = vld [vmem:[%s7 + $0x118] sm:$0xff]
        %v2355 = vld [vmem:[%s7 + $0x120] sm:$0xff]
        %v2356 = vld [vmem:[%s7 + $0x128] sm:$0xff]
        %v2357 = vld [vmem:[%s7 + $0x130] sm:$0xff]
        %v2358 = vld [vmem:[%s7 + $0x138] sm:$0xff]
        %v2359 = vld [vmem:[%s7 + $0x140] sm:$0xff]
        %v2360 = vld [vmem:[%s7 + $0x148] sm:$0xff]
        %v2361 = vld [vmem:[%s7 + $0x150] sm:$0xff]
        %v2362 = vld [vmem:[%s7 + $0x158] sm:$0xff]
        %v2363 = vld [vmem:[%s7 + $0x160] sm:$0xff]
        %v2364 = vld [vmem:[%s7 + $0x168] sm:$0xff]
        %v2365 = vld [vmem:[%s7 + $0x170] sm:$0xff]
        %v2366 = vld [vmem:[%s7 + $0x178] sm:$0xff]
        %v2367 = vld [vmem:[%s7 + $0x180] sm:$0xff]
        %v2368 = vld [vmem:[%s7 + $0x188] sm:$0xff]
        %v2369 = vld [vmem:[%s7 + $0x190] sm:$0xff]
        %v2370 = vld [vmem:[%s7 + $0x198] sm:$0xff]
        %v2371 = vld [vmem:[%s7 + $0x1a0] sm:$0xff]
        %v2372 = vld [vmem:[%s7 + $0x1a8] sm:$0xff]
        %v2373 = vld [vmem:[%s7 + $0x1b0] sm:$0xff]
        %v2374 = vld [vmem:[%s7 + $0x1b8] sm:$0xff]
        %v2375 = vld [vmem:[%s7 + $0x1c0] sm:$0xff]
        %v2376 = vld [vmem:[%s7 + $0x1c8] sm:$0xff]
        %v2377 = vld [vmem:[%s7 + $0x1d0] sm:$0xff]
        %v2378 = vld [vmem:[%s7 + $0x1d8] sm:$0xff]
        %v2379 = vld [vmem:[%s7 + $0x1e0] sm:$0xff]
        %v2380 = vld [vmem:[%s7 + $0x1e8] sm:$0xff]
        %v2381 = vld [vmem:[%s7 + $0x1f0] sm:$0xff]
        %v2382 = vld [vmem:[%s7 + $0x1f8] sm:$0xff]
        %v2383 = vld [vmem:[%s8] sm:$0x3]
        %v2385 = vlaneseq
        %v2386 = vshrl.u32 %v2385, 7
        %v2387 = vsub.s32 0, %v2386
        %v2388 = vrot.slane %v2383, %v2387
        %v2389 = vlaneseq
        %v2390 = vshrl.u32 %v2389, 7
        %v2391 = vsub.s32 1, %v2390
        %v2392 = vrot.slane %v2383, %v2391
        %v2459 = vunpack.c.l.b16 %v2319
        %v2460 = vunpack.c.h.b16 %v2319
        %v2461 = vunpack.c.l.b16 %v2320
        %v2462 = vunpack.c.h.b16 %v2320
        %v2463 = vunpack.c.l.b16 %v2321
        %v2464 = vunpack.c.h.b16 %v2321
        %v2465 = vunpack.c.l.b16 %v2322
        %v2466 = vunpack.c.h.b16 %v2322
        %v2467 = vunpack.c.l.b16 %v2323
        %v2468 = vunpack.c.h.b16 %v2323
        %v2469 = vunpack.c.l.b16 %v2324
        %v2470 = vunpack.c.h.b16 %v2324
        %v2471 = vunpack.c.l.b16 %v2325
        %v2472 = vunpack.c.h.b16 %v2325
        %v2473 = vunpack.c.l.b16 %v2326
        %v2474 = vunpack.c.h.b16 %v2326
        %v2475 = vunpack.c.l.b16 %v2327
        %v2476 = vunpack.c.h.b16 %v2327
        %v2477 = vunpack.c.l.b16 %v2328
        %v2478 = vunpack.c.h.b16 %v2328
        %v2479 = vunpack.c.l.b16 %v2329
        %v2480 = vunpack.c.h.b16 %v2329
        %v2481 = vunpack.c.l.b16 %v2330
        %v2482 = vunpack.c.h.b16 %v2330
        %v2483 = vunpack.c.l.b16 %v2331
        %v2484 = vunpack.c.h.b16 %v2331
        %v2485 = vunpack.c.l.b16 %v2332
        %v2486 = vunpack.c.h.b16 %v2332
        %v2487 = vunpack.c.l.b16 %v2333
        %v2488 = vunpack.c.h.b16 %v2333
        %v2489 = vunpack.c.l.b16 %v2334
        %v2490 = vunpack.c.h.b16 %v2334
        %v2491 = vunpack.c.l.b16 %v2335
        %v2492 = vunpack.c.h.b16 %v2335
        %v2493 = vunpack.c.l.b16 %v2336
        %v2494 = vunpack.c.h.b16 %v2336
        %v2495 = vunpack.c.l.b16 %v2337
        %v2496 = vunpack.c.h.b16 %v2337
        %v2497 = vunpack.c.l.b16 %v2338
        %v2498 = vunpack.c.h.b16 %v2338
        %v2499 = vunpack.c.l.b16 %v2339
        %v2500 = vunpack.c.h.b16 %v2339
        %v2501 = vunpack.c.l.b16 %v2340
        %v2502 = vunpack.c.h.b16 %v2340
        %v2503 = vunpack.c.l.b16 %v2341
        %v2504 = vunpack.c.h.b16 %v2341
        %v2505 = vunpack.c.l.b16 %v2342
        %v2506 = vunpack.c.h.b16 %v2342
        %v2507 = vunpack.c.l.b16 %v2343
        %v2508 = vunpack.c.h.b16 %v2343
        %v2509 = vunpack.c.l.b16 %v2344
        %v2510 = vunpack.c.h.b16 %v2344
        %v2511 = vunpack.c.l.b16 %v2345
        %v2512 = vunpack.c.h.b16 %v2345
        %v2513 = vunpack.c.l.b16 %v2346
        %v2514 = vunpack.c.h.b16 %v2346
        %v2515 = vunpack.c.l.b16 %v2347
        %v2516 = vunpack.c.h.b16 %v2347
        %v2517 = vunpack.c.l.b16 %v2348
        %v2518 = vunpack.c.h.b16 %v2348
        %v2519 = vunpack.c.l.b16 %v2349
        %v2520 = vunpack.c.h.b16 %v2349
        %v2521 = vunpack.c.l.b16 %v2350
        %v2522 = vunpack.c.h.b16 %v2350
        %v2523 = vunpack.c.l.b16 %v2351
        %v2524 = vunpack.c.h.b16 %v2351
        %v2525 = vunpack.c.l.b16 %v2352
        %v2526 = vunpack.c.h.b16 %v2352
        %v2527 = vunpack.c.l.b16 %v2353
        %v2528 = vunpack.c.h.b16 %v2353
        %v2529 = vunpack.c.l.b16 %v2354
        %v2530 = vunpack.c.h.b16 %v2354
        %v2531 = vunpack.c.l.b16 %v2355
        %v2532 = vunpack.c.h.b16 %v2355
        %v2533 = vunpack.c.l.b16 %v2356
        %v2534 = vunpack.c.h.b16 %v2356
        %v2535 = vunpack.c.l.b16 %v2357
        %v2536 = vunpack.c.h.b16 %v2357
        %v2537 = vunpack.c.l.b16 %v2358
        %v2538 = vunpack.c.h.b16 %v2358
        %v2539 = vunpack.c.l.b16 %v2359
        %v2540 = vunpack.c.h.b16 %v2359
        %v2541 = vunpack.c.l.b16 %v2360
        %v2542 = vunpack.c.h.b16 %v2360
        %v2543 = vunpack.c.l.b16 %v2361
        %v2544 = vunpack.c.h.b16 %v2361
        %v2545 = vunpack.c.l.b16 %v2362
        %v2546 = vunpack.c.h.b16 %v2362
        %v2547 = vunpack.c.l.b16 %v2363
        %v2548 = vunpack.c.h.b16 %v2363
        %v2549 = vunpack.c.l.b16 %v2364
        %v2550 = vunpack.c.h.b16 %v2364
        %v2551 = vunpack.c.l.b16 %v2365
        %v2552 = vunpack.c.h.b16 %v2365
        %v2553 = vunpack.c.l.b16 %v2366
        %v2554 = vunpack.c.h.b16 %v2366
        %v2555 = vunpack.c.l.b16 %v2367
        %v2556 = vunpack.c.h.b16 %v2367
        %v2557 = vunpack.c.l.b16 %v2368
        %v2558 = vunpack.c.h.b16 %v2368
        %v2559 = vunpack.c.l.b16 %v2369
        %v2560 = vunpack.c.h.b16 %v2369
        %v2561 = vunpack.c.l.b16 %v2370
        %v2562 = vunpack.c.h.b16 %v2370
        %v2563 = vunpack.c.l.b16 %v2371
        %v2564 = vunpack.c.h.b16 %v2371
        %v2565 = vunpack.c.l.b16 %v2372
        %v2566 = vunpack.c.h.b16 %v2372
        %v2567 = vunpack.c.l.b16 %v2373
        %v2568 = vunpack.c.h.b16 %v2373
        %v2569 = vunpack.c.l.b16 %v2374
        %v2570 = vunpack.c.h.b16 %v2374
        %v2571 = vunpack.c.l.b16 %v2375
        %v2572 = vunpack.c.h.b16 %v2375
        %v2573 = vunpack.c.l.b16 %v2376
        %v2574 = vunpack.c.h.b16 %v2376
        %v2575 = vunpack.c.l.b16 %v2377
        %v2576 = vunpack.c.h.b16 %v2377
        %v2577 = vunpack.c.l.b16 %v2378
        %v2578 = vunpack.c.h.b16 %v2378
        %v2579 = vunpack.c.l.b16 %v2379
        %v2580 = vunpack.c.h.b16 %v2379
        %v2581 = vunpack.c.l.b16 %v2380
        %v2582 = vunpack.c.h.b16 %v2380
        %v2583 = vunpack.c.l.b16 %v2381
        %v2584 = vunpack.c.h.b16 %v2381
        %v2585 = vunpack.c.l.b16 %v2382
        %v2586 = vunpack.c.h.b16 %v2382
        %v2587 = vpack.c.b16 %v2461, %v2459
        %v2588 = vpack.c.b16 %v2462, %v2460
        %v2589 = vpack.c.b16 %v2465, %v2463
        %v2590 = vpack.c.b16 %v2466, %v2464
        %v2591 = vpack.c.b16 %v2469, %v2467
        %v2592 = vpack.c.b16 %v2470, %v2468
        %v2593 = vpack.c.b16 %v2473, %v2471
        %v2594 = vpack.c.b16 %v2474, %v2472
        %v2595 = vpack.c.b16 %v2477, %v2475
        %v2596 = vpack.c.b16 %v2478, %v2476
        %v2597 = vpack.c.b16 %v2481, %v2479
        %v2598 = vpack.c.b16 %v2482, %v2480
        %v2599 = vpack.c.b16 %v2485, %v2483
        %v2600 = vpack.c.b16 %v2486, %v2484
        %v2601 = vpack.c.b16 %v2489, %v2487
        %v2602 = vpack.c.b16 %v2490, %v2488
        %v2603 = vpack.c.b16 %v2493, %v2491
        %v2604 = vpack.c.b16 %v2494, %v2492
        %v2605 = vpack.c.b16 %v2497, %v2495
        %v2606 = vpack.c.b16 %v2498, %v2496
        %v2607 = vpack.c.b16 %v2501, %v2499
        %v2608 = vpack.c.b16 %v2502, %v2500
        %v2609 = vpack.c.b16 %v2505, %v2503
        %v2610 = vpack.c.b16 %v2506, %v2504
        %v2611 = vpack.c.b16 %v2509, %v2507
        %v2612 = vpack.c.b16 %v2510, %v2508
        %v2613 = vpack.c.b16 %v2513, %v2511
        %v2614 = vpack.c.b16 %v2514, %v2512
        %v2615 = vpack.c.b16 %v2517, %v2515
        %v2616 = vpack.c.b16 %v2518, %v2516
        %v2617 = vpack.c.b16 %v2521, %v2519
        %v2618 = vpack.c.b16 %v2522, %v2520
        %v2619 = vpack.c.b16 %v2525, %v2523
        %v2620 = vpack.c.b16 %v2526, %v2524
        %v2621 = vpack.c.b16 %v2529, %v2527
        %v2622 = vpack.c.b16 %v2530, %v2528
        %v2623 = vpack.c.b16 %v2533, %v2531
        %v2624 = vpack.c.b16 %v2534, %v2532
        %v2625 = vpack.c.b16 %v2537, %v2535
        %v2626 = vpack.c.b16 %v2538, %v2536
        %v2627 = vpack.c.b16 %v2541, %v2539
        %v2628 = vpack.c.b16 %v2542, %v2540
        %v2629 = vpack.c.b16 %v2545, %v2543
        %v2630 = vpack.c.b16 %v2546, %v2544
        %v2631 = vpack.c.b16 %v2549, %v2547
        %v2632 = vpack.c.b16 %v2550, %v2548
        %v2633 = vpack.c.b16 %v2553, %v2551
        %v2634 = vpack.c.b16 %v2554, %v2552
        %v2635 = vpack.c.b16 %v2557, %v2555
        %v2636 = vpack.c.b16 %v2558, %v2556
        %v2637 = vpack.c.b16 %v2561, %v2559
        %v2638 = vpack.c.b16 %v2562, %v2560
        %v2639 = vpack.c.b16 %v2565, %v2563
        %v2640 = vpack.c.b16 %v2566, %v2564
        %v2641 = vpack.c.b16 %v2569, %v2567
        %v2642 = vpack.c.b16 %v2570, %v2568
        %v2643 = vpack.c.b16 %v2573, %v2571
        %v2644 = vpack.c.b16 %v2574, %v2572
        %v2645 = vpack.c.b16 %v2577, %v2575
        %v2646 = vpack.c.b16 %v2578, %v2576
        %v2647 = vpack.c.b16 %v2581, %v2579
        %v2648 = vpack.c.b16 %v2582, %v2580
        %v2649 = vpack.c.b16 %v2585, %v2583
        %v2650 = vpack.c.b16 %v2586, %v2584
        %2715 = vmatprep.subr.bf16.mxu0 %v2602
        %2716 = vmatpush1.bf16.msra.mxu0 %v2601
        %2717 = vmatprep.subr.bf16.mxu0 %v2600
        %2718 = vmatpush1.bf16.msra.mxu0 %v2599
        %2719 = vmatprep.subr.bf16.mxu0 %v2598
        %2720 = vmatpush1.bf16.msra.mxu0 %v2597
        %2721 = vmatprep.subr.bf16.mxu0 %v2596
        %2722 = vmatpush1.bf16.msra.mxu0 %v2595
        %2723 = vmatprep.subr.bf16.mxu0 %v2594
        %2724 = vmatpush1.bf16.msra.mxu0 %v2593
        %2725 = vmatprep.subr.bf16.mxu0 %v2592
        %2726 = vmatpush1.bf16.msra.mxu0 %v2591
        %2727 = vmatprep.subr.bf16.mxu0 %v2590
        %2728 = vmatpush1.bf16.msra.mxu0 %v2589
        %2729 = vmatprep.subr.bf16.mxu0 %v2588
        %2730 = vmatpush1.bf16.msra.mxu0 %v2587
        %2731 = vmatprep.subr.bf16.mxu0 %v2618
        %2732 = vmatpush2.bf16.msra.mxu0 %v2617
        %2733 = vmatprep.subr.bf16.mxu0 %v2616
        %2734 = vmatpush2.bf16.msra.mxu0 %v2615
        %2735 = vmatprep.subr.bf16.mxu0 %v2614
        %2736 = vmatpush2.bf16.msra.mxu0 %v2613
        %2737 = vmatprep.subr.bf16.mxu0 %v2612
        %2738 = vmatpush2.bf16.msra.mxu0 %v2611
        %2739 = vmatprep.subr.bf16.mxu0 %v2610
        %2740 = vmatpush2.bf16.msra.mxu0 %v2609
        %2741 = vmatprep.subr.bf16.mxu0 %v2608
        %2742 = vmatpush2.bf16.msra.mxu0 %v2607
        %2743 = vmatprep.subr.bf16.mxu0 %v2606
        %2744 = vmatpush2.bf16.msra.mxu0 %v2605
        %2745 = vmatprep.subr.bf16.mxu0 %v2604
        %2746 = vmatpush2.bf16.msra.mxu0 %v2603
        %2747 = vmatprep.mubr.bf16.mxu0 %v2316
        %2748 = vmatmul.mubr.bf16.gmra.mxu0 %v2315
        %v2749 = vpop.f32.mrf.mxu0
        %v2750 = vadd.f32 %v2388, %v2749
        %v2751 = vpop.f32.mrf.mxu0
        %v2752 = vadd.f32 %v2392, %v2751
        %v2753 = vpop.f32.mrf.mxu0
        %v2754 = vpop.f32.mrf.mxu0
        %2755 = vdwg.mxu0
        %2756 = vmatprep.subr.bf16.mxu0 %v2634
        %2757 = vmatpush1.bf16.msra.mxu0 %v2633
        %2758 = vmatprep.subr.bf16.mxu0 %v2632
        %2759 = vmatpush1.bf16.msra.mxu0 %v2631
        %2760 = vmatprep.subr.bf16.mxu0 %v2630
        %2761 = vmatpush1.bf16.msra.mxu0 %v2629
        %2762 = vmatprep.subr.bf16.mxu0 %v2628
        %2763 = vmatpush1.bf16.msra.mxu0 %v2627
        %2764 = vmatprep.subr.bf16.mxu0 %v2626
        %2765 = vmatpush1.bf16.msra.mxu0 %v2625
        %2766 = vmatprep.subr.bf16.mxu0 %v2624
        %2767 = vmatpush1.bf16.msra.mxu0 %v2623
        %2768 = vmatprep.subr.bf16.mxu0 %v2622
        %2769 = vmatpush1.bf16.msra.mxu0 %v2621
        %2770 = vmatprep.subr.bf16.mxu0 %v2620
        %2771 = vmatpush1.bf16.msra.mxu0 %v2619
        %2772 = vmatprep.subr.bf16.mxu0 %v2650
        %2773 = vmatpush2.bf16.msra.mxu0 %v2649
        %2774 = vmatprep.subr.bf16.mxu0 %v2648
        %2775 = vmatpush2.bf16.msra.mxu0 %v2647
        %2776 = vmatprep.subr.bf16.mxu0 %v2646
        %2777 = vmatpush2.bf16.msra.mxu0 %v2645
        %2778 = vmatprep.subr.bf16.mxu0 %v2644
        %2779 = vmatpush2.bf16.msra.mxu0 %v2643
        %2780 = vmatprep.subr.bf16.mxu0 %v2642
        %2781 = vmatpush2.bf16.msra.mxu0 %v2641
        %2782 = vmatprep.subr.bf16.mxu0 %v2640
        %2783 = vmatpush2.bf16.msra.mxu0 %v2639
        %2784 = vmatprep.subr.bf16.mxu0 %v2638
        %2785 = vmatpush2.bf16.msra.mxu0 %v2637
        %2786 = vmatprep.subr.bf16.mxu0 %v2636
        %2787 = vmatpush2.bf16.msra.mxu0 %v2635
        %2788 = vmatprep.mubr.bf16.mxu0 %v2318
        %2789 = vmatmul.mubr.bf16.gmra.mxu0 %v2317
        %v2790 = vpop.f32.mrf.mxu0
        %v2791 = vadd.f32 %v2750, %v2790
        %v2792 = vpop.f32.mrf.mxu0
        %v2793 = vadd.f32 %v2752, %v2792
        %v2794 = vpop.f32.mrf.mxu0
        %v2795 = vpop.f32.mrf.mxu0
        %2796 = vdwg.mxu0
        %v2797 = vadd.s32 %v1189, 128
        %v2798 = vadd.s32 %v1189, 136
        %v2799 = vadd.s32 %v1189, 144
        %v2800 = vadd.s32 %v1189, 152
        %v2801 = vadd.s32 %v1189, 160
        %v2802 = vadd.s32 %v1189, 168
        %v2803 = vadd.s32 %v1189, 176
        %v2804 = vadd.s32 %v1189, 184
        %vm2805 = vcmp.lt.s32.totalorder %v1189, 0
        %v2806 = vsub.s32 0, %v1189
        %v2807 = vsel %vm2805, %v2806, %v1189
        %v2808 = vshrl.u32 %v2807, 6
        %v2809 = vand.u32 %v2807, 63
        %v2810 = vsub.s32 0, %v2809
        %v2811 = vsel %vm2805, %v2810, %v2809
        %vm2812 = vcmp.lt.s32.totalorder %v1190, 0
        %v2813 = vsub.s32 0, %v1190
        %v2814 = vsel %vm2812, %v2813, %v1190
        %v2815 = vshrl.u32 %v2814, 6
        %v2816 = vand.u32 %v2814, 63
        %v2817 = vsub.s32 0, %v2816
        %v2818 = vsel %vm2812, %v2817, %v2816
        %vm2819 = vcmp.lt.s32.totalorder %v1191, 0
        %v2820 = vsub.s32 0, %v1191
        %v2821 = vsel %vm2819, %v2820, %v1191
        %v2822 = vshrl.u32 %v2821, 6
        %v2823 = vand.u32 %v2821, 63
        %v2824 = vsub.s32 0, %v2823
        %v2825 = vsel %vm2819, %v2824, %v2823
        %vm2826 = vcmp.lt.s32.totalorder %v1192, 0
        %v2827 = vsub.s32 0, %v1192
        %v2828 = vsel %vm2826, %v2827, %v1192
        %v2829 = vshrl.u32 %v2828, 6
        %v2830 = vand.u32 %v2828, 63
        %v2831 = vsub.s32 0, %v2830
        %v2832 = vsel %vm2826, %v2831, %v2830
        %vm2833 = vcmp.lt.s32.totalorder %v1193, 0
        %v2834 = vsub.s32 0, %v1193
        %v2835 = vsel %vm2833, %v2834, %v1193
        %v2836 = vshrl.u32 %v2835, 6
        %v2837 = vand.u32 %v2835, 63
        %v2838 = vsub.s32 0, %v2837
        %v2839 = vsel %vm2833, %v2838, %v2837
        %vm2840 = vcmp.lt.s32.totalorder %v1194, 0
        %v2841 = vsub.s32 0, %v1194
        %v2842 = vsel %vm2840, %v2841, %v1194
        %v2843 = vshrl.u32 %v2842, 6
        %v2844 = vand.u32 %v2842, 63
        %v2845 = vsub.s32 0, %v2844
        %v2846 = vsel %vm2840, %v2845, %v2844
        %vm2847 = vcmp.lt.s32.totalorder %v1195, 0
        %v2848 = vsub.s32 0, %v1195
        %v2849 = vsel %vm2847, %v2848, %v1195
        %v2850 = vshrl.u32 %v2849, 6
        %v2851 = vand.u32 %v2849, 63
        %v2852 = vsub.s32 0, %v2851
        %v2853 = vsel %vm2847, %v2852, %v2851
        %vm2854 = vcmp.lt.s32.totalorder %v1196, 0
        %v2855 = vsub.s32 0, %v1196
        %v2856 = vsel %vm2854, %v2855, %v1196
        %v2857 = vshrl.u32 %v2856, 6
        %v2858 = vand.u32 %v2856, 63
        %v2859 = vsub.s32 0, %v2858
        %v2860 = vsel %vm2854, %v2859, %v2858
        %vm2861 = vcmp.lt.s32.totalorder %v1197, 0
        %v2862 = vsub.s32 0, %v1197
        %v2863 = vsel %vm2861, %v2862, %v1197
        %v2864 = vshrl.u32 %v2863, 6
        %v2865 = vand.u32 %v2863, 63
        %v2866 = vsub.s32 0, %v2865
        %v2867 = vsel %vm2861, %v2866, %v2865
        %vm2868 = vcmp.lt.s32.totalorder %v1198, 0
        %v2869 = vsub.s32 0, %v1198
        %v2870 = vsel %vm2868, %v2869, %v1198
        %v2871 = vshrl.u32 %v2870, 6
        %v2872 = vand.u32 %v2870, 63
        %v2873 = vsub.s32 0, %v2872
        %v2874 = vsel %vm2868, %v2873, %v2872
        %vm2875 = vcmp.lt.s32.totalorder %v1199, 0
        %v2876 = vsub.s32 0, %v1199
        %v2877 = vsel %vm2875, %v2876, %v1199
        %v2878 = vshrl.u32 %v2877, 6
        %v2879 = vand.u32 %v2877, 63
        %v2880 = vsub.s32 0, %v2879
        %v2881 = vsel %vm2875, %v2880, %v2879
        %vm2882 = vcmp.lt.s32.totalorder %v1200, 0
        %v2883 = vsub.s32 0, %v1200
        %v2884 = vsel %vm2882, %v2883, %v1200
        %v2885 = vshrl.u32 %v2884, 6
        %v2886 = vand.u32 %v2884, 63
        %v2887 = vsub.s32 0, %v2886
        %v2888 = vsel %vm2882, %v2887, %v2886
        %vm2889 = vcmp.lt.s32.totalorder %v1201, 0
        %v2890 = vsub.s32 0, %v1201
        %v2891 = vsel %vm2889, %v2890, %v1201
        %v2892 = vshrl.u32 %v2891, 6
        %v2893 = vand.u32 %v2891, 63
        %v2894 = vsub.s32 0, %v2893
        %v2895 = vsel %vm2889, %v2894, %v2893
        %vm2896 = vcmp.lt.s32.totalorder %v1202, 0
        %v2897 = vsub.s32 0, %v1202
        %v2898 = vsel %vm2896, %v2897, %v1202
        %v2899 = vshrl.u32 %v2898, 6
        %v2900 = vand.u32 %v2898, 63
        %v2901 = vsub.s32 0, %v2900
        %v2902 = vsel %vm2896, %v2901, %v2900
        %vm2903 = vcmp.lt.s32.totalorder %v1203, 0
        %v2904 = vsub.s32 0, %v1203
        %v2905 = vsel %vm2903, %v2904, %v1203
        %v2906 = vshrl.u32 %v2905, 6
        %v2907 = vand.u32 %v2905, 63
        %v2908 = vsub.s32 0, %v2907
        %v2909 = vsel %vm2903, %v2908, %v2907
        %vm2910 = vcmp.lt.s32.totalorder %v1204, 0
        %v2911 = vsub.s32 0, %v1204
        %v2912 = vsel %vm2910, %v2911, %v1204
        %v2913 = vshrl.u32 %v2912, 6
        %v2914 = vand.u32 %v2912, 63
        %v2915 = vsub.s32 0, %v2914
        %v2916 = vsel %vm2910, %v2915, %v2914
        %vm2917 = vcmp.lt.s32.totalorder %v2797, 0
        %v2918 = vsub.s32 0, %v2797
        %v2919 = vsel %vm2917, %v2918, %v2797
        %v2920 = vshrl.u32 %v2919, 6
        %v2921 = vand.u32 %v2919, 63
        %v2922 = vsub.s32 0, %v2921
        %v2923 = vsel %vm2917, %v2922, %v2921
        %vm2924 = vcmp.lt.s32.totalorder %v2798, 0
        %v2925 = vsub.s32 0, %v2798
        %v2926 = vsel %vm2924, %v2925, %v2798
        %v2927 = vshrl.u32 %v2926, 6
        %v2928 = vand.u32 %v2926, 63
        %v2929 = vsub.s32 0, %v2928
        %v2930 = vsel %vm2924, %v2929, %v2928
        %vm2931 = vcmp.lt.s32.totalorder %v2799, 0
        %v2932 = vsub.s32 0, %v2799
        %v2933 = vsel %vm2931, %v2932, %v2799
        %v2934 = vshrl.u32 %v2933, 6
        %v2935 = vand.u32 %v2933, 63
        %v2936 = vsub.s32 0, %v2935
        %v2937 = vsel %vm2931, %v2936, %v2935
        %vm2938 = vcmp.lt.s32.totalorder %v2800, 0
        %v2939 = vsub.s32 0, %v2800
        %v2940 = vsel %vm2938, %v2939, %v2800
        %v2941 = vshrl.u32 %v2940, 6
        %v2942 = vand.u32 %v2940, 63
        %v2943 = vsub.s32 0, %v2942
        %v2944 = vsel %vm2938, %v2943, %v2942
        %vm2945 = vcmp.lt.s32.totalorder %v2801, 0
        %v2946 = vsub.s32 0, %v2801
        %v2947 = vsel %vm2945, %v2946, %v2801
        %v2948 = vshrl.u32 %v2947, 6
        %v2949 = vand.u32 %v2947, 63
        %v2950 = vsub.s32 0, %v2949
        %v2951 = vsel %vm2945, %v2950, %v2949
        %vm2952 = vcmp.lt.s32.totalorder %v2802, 0
        %v2953 = vsub.s32 0, %v2802
        %v2954 = vsel %vm2952, %v2953, %v2802
        %v2955 = vshrl.u32 %v2954, 6
        %v2956 = vand.u32 %v2954, 63
        %v2957 = vsub.s32 0, %v2956
        %v2958 = vsel %vm2952, %v2957, %v2956
        %vm2959 = vcmp.lt.s32.totalorder %v2803, 0
        %v2960 = vsub.s32 0, %v2803
        %v2961 = vsel %vm2959, %v2960, %v2803
        %v2962 = vshrl.u32 %v2961, 6
        %v2963 = vand.u32 %v2961, 63
        %v2964 = vsub.s32 0, %v2963
        %v2965 = vsel %vm2959, %v2964, %v2963
        %vm2966 = vcmp.lt.s32.totalorder %v2804, 0
        %v2967 = vsub.s32 0, %v2804
        %v2968 = vsel %vm2966, %v2967, %v2804
        %v2969 = vshrl.u32 %v2968, 6
        %v2970 = vand.u32 %v2968, 63
        %v2971 = vsub.s32 0, %v2970
        %v2972 = vsel %vm2966, %v2971, %v2970
        %vm2973 = vcmp.ne.s32.totalorder %v2811, 0
        %vm2974 = vcmp.ne.s32.totalorder %v2818, 0
        %vm2975 = vcmp.ne.s32.totalorder %v2825, 0
        %vm2976 = vcmp.ne.s32.totalorder %v2832, 0
        %vm2977 = vcmp.ne.s32.totalorder %v2839, 0
        %vm2978 = vcmp.ne.s32.totalorder %v2846, 0
        %vm2979 = vcmp.ne.s32.totalorder %v2853, 0
        %vm2980 = vcmp.ne.s32.totalorder %v2860, 0
        %vm2981 = vcmp.ne.s32.totalorder %v2867, 0
        %vm2982 = vcmp.ne.s32.totalorder %v2874, 0
        %vm2983 = vcmp.ne.s32.totalorder %v2881, 0
        %vm2984 = vcmp.ne.s32.totalorder %v2888, 0
        %vm2985 = vcmp.ne.s32.totalorder %v2895, 0
        %vm2986 = vcmp.ne.s32.totalorder %v2902, 0
        %vm2987 = vcmp.ne.s32.totalorder %v2909, 0
        %vm2988 = vcmp.ne.s32.totalorder %v2916, 0
        %vm2989 = vcmp.ne.s32.totalorder %v2923, 0
        %vm2990 = vcmp.ne.s32.totalorder %v2930, 0
        %vm2991 = vcmp.ne.s32.totalorder %v2937, 0
        %vm2992 = vcmp.ne.s32.totalorder %v2944, 0
        %vm2993 = vcmp.ne.s32.totalorder %v2951, 0
        %vm2994 = vcmp.ne.s32.totalorder %v2958, 0
        %vm2995 = vcmp.ne.s32.totalorder %v2965, 0
        %vm2996 = vcmp.ne.s32.totalorder %v2972, 0
        %vm2997 = vcmp.lt.s32.totalorder %v2811, 0
        %vm2998 = vcmp.lt.s32.totalorder %v2818, 0
        %vm2999 = vcmp.lt.s32.totalorder %v2825, 0
        %vm3000 = vcmp.lt.s32.totalorder %v2832, 0
        %vm3001 = vcmp.lt.s32.totalorder %v2839, 0
        %vm3002 = vcmp.lt.s32.totalorder %v2846, 0
        %vm3003 = vcmp.lt.s32.totalorder %v2853, 0
        %vm3004 = vcmp.lt.s32.totalorder %v2860, 0
        %vm3005 = vcmp.lt.s32.totalorder %v2867, 0
        %vm3006 = vcmp.lt.s32.totalorder %v2874, 0
        %vm3007 = vcmp.lt.s32.totalorder %v2881, 0
        %vm3008 = vcmp.lt.s32.totalorder %v2888, 0
        %vm3009 = vcmp.lt.s32.totalorder %v2895, 0
        %vm3010 = vcmp.lt.s32.totalorder %v2902, 0
        %vm3011 = vcmp.lt.s32.totalorder %v2909, 0
        %vm3012 = vcmp.lt.s32.totalorder %v2916, 0
        %vm3013 = vcmp.lt.s32.totalorder %v2923, 0
        %vm3014 = vcmp.lt.s32.totalorder %v2930, 0
        %vm3015 = vcmp.lt.s32.totalorder %v2937, 0
        %vm3016 = vcmp.lt.s32.totalorder %v2944, 0
        %vm3017 = vcmp.lt.s32.totalorder %v2951, 0
        %vm3018 = vcmp.lt.s32.totalorder %v2958, 0
        %vm3019 = vcmp.lt.s32.totalorder %v2965, 0
        %vm3020 = vcmp.lt.s32.totalorder %v2972, 0
        %vm3021 = vmand %vm2997, %vm2973
        %vm3022 = vmand %vm2998, %vm2974
        %vm3023 = vmand %vm2999, %vm2975
        %vm3024 = vmand %vm3000, %vm2976
        %vm3025 = vmand %vm3001, %vm2977
        %vm3026 = vmand %vm3002, %vm2978
        %vm3027 = vmand %vm3003, %vm2979
        %vm3028 = vmand %vm3004, %vm2980
        %vm3029 = vmand %vm3005, %vm2981
        %vm3030 = vmand %vm3006, %vm2982
        %vm3031 = vmand %vm3007, %vm2983
        %vm3032 = vmand %vm3008, %vm2984
        %vm3033 = vmand %vm3009, %vm2985
        %vm3034 = vmand %vm3010, %vm2986
        %vm3035 = vmand %vm3011, %vm2987
        %vm3036 = vmand %vm3012, %vm2988
        %vm3037 = vmand %vm3013, %vm2989
        %vm3038 = vmand %vm3014, %vm2990
        %vm3039 = vmand %vm3015, %vm2991
        %vm3040 = vmand %vm3016, %vm2992
        %vm3041 = vmand %vm3017, %vm2993
        %vm3042 = vmand %vm3018, %vm2994
        %vm3043 = vmand %vm3019, %vm2995
        %vm3044 = vmand %vm3020, %vm2996
        %v3045 = vadd.s32 %v2811, 64
        %v3046 = vadd.s32 %v2818, 64
        %v3047 = vadd.s32 %v2825, 64
        %v3048 = vadd.s32 %v2832, 64
        %v3049 = vadd.s32 %v2839, 64
        %v3050 = vadd.s32 %v2846, 64
        %v3051 = vadd.s32 %v2853, 64
        %v3052 = vadd.s32 %v2860, 64
        %v3053 = vadd.s32 %v2867, 64
        %v3054 = vadd.s32 %v2874, 64
        %v3055 = vadd.s32 %v2881, 64
        %v3056 = vadd.s32 %v2888, 64
        %v3057 = vadd.s32 %v2895, 64
        %v3058 = vadd.s32 %v2902, 64
        %v3059 = vadd.s32 %v2909, 64
        %v3060 = vadd.s32 %v2916, 64
        %v3061 = vadd.s32 %v2923, 64
        %v3062 = vadd.s32 %v2930, 64
        %v3063 = vadd.s32 %v2937, 64
        %v3064 = vadd.s32 %v2944, 64
        %v3065 = vadd.s32 %v2951, 64
        %v3066 = vadd.s32 %v2958, 64
        %v3067 = vadd.s32 %v2965, 64
        %v3068 = vadd.s32 %v2972, 64
        %v3069 = vsel %vm3021, %v3045, %v2811
        %v3070 = vsel %vm3022, %v3046, %v2818
        %v3071 = vsel %vm3023, %v3047, %v2825
        %v3072 = vsel %vm3024, %v3048, %v2832
        %v3073 = vsel %vm3025, %v3049, %v2839
        %v3074 = vsel %vm3026, %v3050, %v2846
        %v3075 = vsel %vm3027, %v3051, %v2853
        %v3076 = vsel %vm3028, %v3052, %v2860
        %v3077 = vsel %vm3029, %v3053, %v2867
        %v3078 = vsel %vm3030, %v3054, %v2874
        %v3079 = vsel %vm3031, %v3055, %v2881
        %v3080 = vsel %vm3032, %v3056, %v2888
        %v3081 = vsel %vm3033, %v3057, %v2895
        %v3082 = vsel %vm3034, %v3058, %v2902
        %v3083 = vsel %vm3035, %v3059, %v2909
        %v3084 = vsel %vm3036, %v3060, %v2916
        %v3085 = vsel %vm3037, %v3061, %v2923
        %v3086 = vsel %vm3038, %v3062, %v2930
        %v3087 = vsel %vm3039, %v3063, %v2937
        %v3088 = vsel %vm3040, %v3064, %v2944
        %v3089 = vsel %vm3041, %v3065, %v2951
        %v3090 = vsel %vm3042, %v3066, %v2958
        %v3091 = vsel %vm3043, %v3067, %v2965
        %v3092 = vsel %vm3044, %v3068, %v2972
        %v3093 = vadd.s32 %v1398, 128
        %vm3094 = vcmp.lt.s32.totalorder %v1398, 0
        %v3095 = vsub.s32 0, %v1398
        %v3096 = vsel %vm3094, %v3095, %v1398
        %v3097 = vshrl.u32 %v3096, 6
        %v3098 = vand.u32 %v3096, 63
        %v3099 = vsub.s32 0, %v3098
        %v3100 = vsel %vm3094, %v3099, %v3098
        %vm3101 = vcmp.lt.s32.totalorder %v3093, 0
        %v3102 = vsub.s32 0, %v3093
        %v3103 = vsel %vm3101, %v3102, %v3093
        %v3104 = vshrl.u32 %v3103, 6
        %v3105 = vand.u32 %v3103, 63
        %v3106 = vsub.s32 0, %v3105
        %v3107 = vsel %vm3101, %v3106, %v3105
        %vm3108 = vcmp.ne.s32.totalorder %v3100, 0
        %vm3109 = vcmp.ne.s32.totalorder %v3107, 0
        %vm3110 = vcmp.lt.s32.totalorder %v3100, 0
        %vm3111 = vcmp.lt.s32.totalorder %v3107, 0
        %vm3112 = vmand %vm3110, %vm3108
        %vm3113 = vmand %vm3111, %vm3109
        %v3114 = vadd.s32 %v3100, 64
        %v3115 = vadd.s32 %v3107, 64
        %v3116 = vsel %vm3112, %v3114, %v3100
        %v3117 = vsel %vm3113, %v3115, %v3107
        %vm3118 = vcmp.eq.s32.totalorder %v3069, %v3116
        %vm3119 = vcmp.eq.s32.totalorder %v3069, %v3117
        %vm3120 = vcmp.eq.s32.totalorder %v3070, %v3116
        %vm3121 = vcmp.eq.s32.totalorder %v3070, %v3117
        %vm3122 = vcmp.eq.s32.totalorder %v3071, %v3116
        %vm3123 = vcmp.eq.s32.totalorder %v3071, %v3117
        %vm3124 = vcmp.eq.s32.totalorder %v3072, %v3116
        %vm3125 = vcmp.eq.s32.totalorder %v3072, %v3117
        %vm3126 = vcmp.eq.s32.totalorder %v3073, %v3116
        %vm3127 = vcmp.eq.s32.totalorder %v3073, %v3117
        %vm3128 = vcmp.eq.s32.totalorder %v3074, %v3116
        %vm3129 = vcmp.eq.s32.totalorder %v3074, %v3117
        %vm3130 = vcmp.eq.s32.totalorder %v3075, %v3116
        %vm3131 = vcmp.eq.s32.totalorder %v3075, %v3117
        %vm3132 = vcmp.eq.s32.totalorder %v3076, %v3116
        %vm3133 = vcmp.eq.s32.totalorder %v3076, %v3117
        %vm3134 = vcmp.eq.s32.totalorder %v3077, %v3116
        %vm3135 = vcmp.eq.s32.totalorder %v3077, %v3117
        %vm3136 = vcmp.eq.s32.totalorder %v3078, %v3116
        %vm3137 = vcmp.eq.s32.totalorder %v3078, %v3117
        %vm3138 = vcmp.eq.s32.totalorder %v3079, %v3116
        %vm3139 = vcmp.eq.s32.totalorder %v3079, %v3117
        %vm3140 = vcmp.eq.s32.totalorder %v3080, %v3116
        %vm3141 = vcmp.eq.s32.totalorder %v3080, %v3117
        %vm3142 = vcmp.eq.s32.totalorder %v3081, %v3116
        %vm3143 = vcmp.eq.s32.totalorder %v3081, %v3117
        %vm3144 = vcmp.eq.s32.totalorder %v3082, %v3116
        %vm3145 = vcmp.eq.s32.totalorder %v3082, %v3117
        %vm3146 = vcmp.eq.s32.totalorder %v3083, %v3116
        %vm3147 = vcmp.eq.s32.totalorder %v3083, %v3117
        %vm3148 = vcmp.eq.s32.totalorder %v3084, %v3116
        %vm3149 = vcmp.eq.s32.totalorder %v3084, %v3117
        %vm3150 = vcmp.eq.s32.totalorder %v3085, %v3116
        %vm3151 = vcmp.eq.s32.totalorder %v3085, %v3117
        %vm3152 = vcmp.eq.s32.totalorder %v3086, %v3116
        %vm3153 = vcmp.eq.s32.totalorder %v3086, %v3117
        %vm3154 = vcmp.eq.s32.totalorder %v3087, %v3116
        %vm3155 = vcmp.eq.s32.totalorder %v3087, %v3117
        %vm3156 = vcmp.eq.s32.totalorder %v3088, %v3116
        %vm3157 = vcmp.eq.s32.totalorder %v3088, %v3117
        %vm3158 = vcmp.eq.s32.totalorder %v3089, %v3116
        %vm3159 = vcmp.eq.s32.totalorder %v3089, %v3117
        %vm3160 = vcmp.eq.s32.totalorder %v3090, %v3116
        %vm3161 = vcmp.eq.s32.totalorder %v3090, %v3117
        %vm3162 = vcmp.eq.s32.totalorder %v3091, %v3116
        %vm3163 = vcmp.eq.s32.totalorder %v3091, %v3117
        %vm3164 = vcmp.eq.s32.totalorder %v3092, %v3116
        %vm3165 = vcmp.eq.s32.totalorder %v3092, %v3117
        %v3166 = vsel %vm3118, 1, 0
        %v3167 = vsel %vm3119, 1, 0
        %v3168 = vsel %vm3120, 1, 0
        %v3169 = vsel %vm3121, 1, 0
        %v3170 = vsel %vm3122, 1, 0
        %v3171 = vsel %vm3123, 1, 0
        %v3172 = vsel %vm3124, 1, 0
        %v3173 = vsel %vm3125, 1, 0
        %v3174 = vsel %vm3126, 1, 0
        %v3175 = vsel %vm3127, 1, 0
        %v3176 = vsel %vm3128, 1, 0
        %v3177 = vsel %vm3129, 1, 0
        %v3178 = vsel %vm3130, 1, 0
        %v3179 = vsel %vm3131, 1, 0
        %v3180 = vsel %vm3132, 1, 0
        %v3181 = vsel %vm3133, 1, 0
        %v3182 = vsel %vm3134, 1, 0
        %v3183 = vsel %vm3135, 1, 0
        %v3184 = vsel %vm3136, 1, 0
        %v3185 = vsel %vm3137, 1, 0
        %v3186 = vsel %vm3138, 1, 0
        %v3187 = vsel %vm3139, 1, 0
        %v3188 = vsel %vm3140, 1, 0
        %v3189 = vsel %vm3141, 1, 0
        %v3190 = vsel %vm3142, 1, 0
        %v3191 = vsel %vm3143, 1, 0
        %v3192 = vsel %vm3144, 1, 0
        %v3193 = vsel %vm3145, 1, 0
        %v3194 = vsel %vm3146, 1, 0
        %v3195 = vsel %vm3147, 1, 0
        %v3196 = vsel %vm3148, 1, 0
        %v3197 = vsel %vm3149, 1, 0
        %v3198 = vsel %vm3150, 1, 0
        %v3199 = vsel %vm3151, 1, 0
        %v3200 = vsel %vm3152, 1, 0
        %v3201 = vsel %vm3153, 1, 0
        %v3202 = vsel %vm3154, 1, 0
        %v3203 = vsel %vm3155, 1, 0
        %v3204 = vsel %vm3156, 1, 0
        %v3205 = vsel %vm3157, 1, 0
        %v3206 = vsel %vm3158, 1, 0
        %v3207 = vsel %vm3159, 1, 0
        %v3208 = vsel %vm3160, 1, 0
        %v3209 = vsel %vm3161, 1, 0
        %v3210 = vsel %vm3162, 1, 0
        %v3211 = vsel %vm3163, 1, 0
        %v3212 = vsel %vm3164, 1, 0
        %v3213 = vsel %vm3165, 1, 0
        %v3214 = vcvt.s32.f32 %v3166
        %v3215 = vcvt.s32.f32 %v3167
        %v3216 = vcvt.s32.f32 %v3168
        %v3217 = vcvt.s32.f32 %v3169
        %v3218 = vcvt.s32.f32 %v3170
        %v3219 = vcvt.s32.f32 %v3171
        %v3220 = vcvt.s32.f32 %v3172
        %v3221 = vcvt.s32.f32 %v3173
        %v3222 = vcvt.s32.f32 %v3174
        %v3223 = vcvt.s32.f32 %v3175
        %v3224 = vcvt.s32.f32 %v3176
        %v3225 = vcvt.s32.f32 %v3177
        %v3226 = vcvt.s32.f32 %v3178
        %v3227 = vcvt.s32.f32 %v3179
        %v3228 = vcvt.s32.f32 %v3180
        %v3229 = vcvt.s32.f32 %v3181
        %v3230 = vcvt.s32.f32 %v3182
        %v3231 = vcvt.s32.f32 %v3183
        %v3232 = vcvt.s32.f32 %v3184
        %v3233 = vcvt.s32.f32 %v3185
        %v3234 = vcvt.s32.f32 %v3186
        %v3235 = vcvt.s32.f32 %v3187
        %v3236 = vcvt.s32.f32 %v3188
        %v3237 = vcvt.s32.f32 %v3189
        %v3238 = vcvt.s32.f32 %v3190
        %v3239 = vcvt.s32.f32 %v3191
        %v3240 = vcvt.s32.f32 %v3192
        %v3241 = vcvt.s32.f32 %v3193
        %v3242 = vcvt.s32.f32 %v3194
        %v3243 = vcvt.s32.f32 %v3195
        %v3244 = vcvt.s32.f32 %v3196
        %v3245 = vcvt.s32.f32 %v3197
        %v3246 = vcvt.s32.f32 %v3198
        %v3247 = vcvt.s32.f32 %v3199
        %v3248 = vcvt.s32.f32 %v3200
        %v3249 = vcvt.s32.f32 %v3201
        %v3250 = vcvt.s32.f32 %v3202
        %v3251 = vcvt.s32.f32 %v3203
        %v3252 = vcvt.s32.f32 %v3204
        %v3253 = vcvt.s32.f32 %v3205
        %v3254 = vcvt.s32.f32 %v3206
        %v3255 = vcvt.s32.f32 %v3207
        %v3256 = vcvt.s32.f32 %v3208
        %v3257 = vcvt.s32.f32 %v3209
        %v3258 = vcvt.s32.f32 %v3210
        %v3259 = vcvt.s32.f32 %v3211
        %v3260 = vcvt.s32.f32 %v3212
        %v3261 = vcvt.s32.f32 %v3213
        %vm3262 = vcmask 1042432
        %v3263 = vsel %vm3262, %v2791, 0.0
        %vm3264 = vcmask 518144
        %v3265 = vsel %vm3264, %v2793, 0.0
        %v3266 = vadd.f32 %v3263, %v3265
        %3267 = vadd.xlane.f32.xlu0 %v3266
        %v3268 = vpop.xlane.xlu0 %3267
        %v3269 = vrcp.pop 192.0
        %v3270 = vmul.f32 %v3268, %v3269
        %v3271 = vsel %vm3262, %v3270, 0.0
        %v3272 = vrot.slane %v3271, 4
        %v3273 = vadd.f32 %v3271, %v3272
        %v3274 = vrot.slane %v3273, 2
        %v3275 = vadd.f32 %v3273, %v3274
        %v3276 = vrot.slane %v3275, 1
        %v3277 = vadd.f32 %v3275, %v3276
        %v3278 = vrcp.pop 3.0
        %v3279 = vmul.f32 %v3277, %v3278
        %v3280 = vsub.f32 %v2791, %v3279
        %v3281 = vsub.f32 %v2793, %v3279
        %v3282 = vsel %vm3262, %v3280, 0.0
        %v3283 = vrot.slane %v3282, 4
        %v3284 = vadd.f32 %v3282, %v3283
        %v3285 = vrot.slane %v3284, 2
        %v3286 = vadd.f32 %v3284, %v3285
        %v3287 = vrot.slane %v3286, 1
        %v3288 = vadd.f32 %v3286, %v3287
        %v3289 = vsel %vm3264, %v3281, 0.0
        %v3290 = vrot.slane %v3289, 4
        %v3291 = vadd.f32 %v3289, %v3290
        %v3292 = vrot.slane %v3291, 2
        %v3293 = vadd.f32 %v3291, %v3292
        %v3294 = vrot.slane %v3293, 1
        %v3295 = vadd.f32 %v3293, %v3294
        %v3296 = vmul.f32 %v3280, %v3280
        %v3297 = vmul.f32 %v3281, %v3281
        %v3298 = vsel %vm3262, %v3296, 0.0
        %v3299 = vrot.slane %v3298, 4
        %v3300 = vadd.f32 %v3298, %v3299
        %v3301 = vrot.slane %v3300, 2
        %v3302 = vadd.f32 %v3300, %v3301
        %v3303 = vrot.slane %v3302, 1
        %v3304 = vadd.f32 %v3302, %v3303
        %v3305 = vsel %vm3264, %v3297, 0.0
        %v3306 = vrot.slane %v3305, 4
        %v3307 = vadd.f32 %v3305, %v3306
        %v3308 = vrot.slane %v3307, 2
        %v3309 = vadd.f32 %v3307, %v3308
        %v3310 = vrot.slane %v3309, 1
        %v3311 = vadd.f32 %v3309, %v3310
        %v3312 = vsel %vm1485, %v3288, %v3304
        %v3313 = vsel %vm1485, %v3295, %v3311
        %vm3314 = vcmask 523264
        %v3316 = vsel %vm3314, %v3313, 0
        %3318 = vmatprep.subr.mxu0 %v3245
        %3319 = vmatpush1.msra.mxu0 %v3244
        %3320 = vmatprep.subr.mxu0 %v3243
        %3321 = vmatpush1.msra.mxu0 %v3242
        %3322 = vmatprep.subr.mxu0 %v3241
        %3323 = vmatpush1.msra.mxu0 %v3240
        %3324 = vmatprep.subr.mxu0 %v3239
        %3325 = vmatpush1.msra.mxu0 %v3238
        %3326 = vmatprep.subr.mxu0 %v3237
        %3327 = vmatpush1.msra.mxu0 %v3236
        %3328 = vmatprep.subr.mxu0 %v3235
        %3329 = vmatpush1.msra.mxu0 %v3234
        %3330 = vmatprep.subr.mxu0 %v3233
        %3331 = vmatpush1.msra.mxu0 %v3232
        %3332 = vmatprep.subr.mxu0 %v3231
        %3333 = vmatpush1.msra.mxu0 %v3230
        %3334 = vmatprep.subr.mxu0 %v3229
        %3335 = vmatpush1.msra.mxu0 %v3228
        %3336 = vmatprep.subr.mxu0 %v3227
        %3337 = vmatpush1.msra.mxu0 %v3226
        %3338 = vmatprep.subr.mxu0 %v3225
        %3339 = vmatpush1.msra.mxu0 %v3224
        %3340 = vmatprep.subr.mxu0 %v3223
        %3341 = vmatpush1.msra.mxu0 %v3222
        %3342 = vmatprep.subr.mxu0 %v3221
        %3343 = vmatpush1.msra.mxu0 %v3220
        %3344 = vmatprep.subr.mxu0 %v3219
        %3345 = vmatpush1.msra.mxu0 %v3218
        %3346 = vmatprep.subr.mxu0 %v3217
        %3347 = vmatpush1.msra.mxu0 %v3216
        %3348 = vmatprep.subr.mxu0 %v3215
        %3349 = vmatpush1.msra.mxu0 %v3214
        %3350 = vmatprep.subr.mxu0 0.0
        %3351 = vmatpush2.msra.mxu0 0.0
        %3352 = vmatprep.subr.mxu0 0.0
        %3353 = vmatpush2.msra.mxu0 0.0
        %3354 = vmatprep.subr.mxu0 0.0
        %3355 = vmatpush2.msra.mxu0 0.0
        %3356 = vmatprep.subr.mxu0 0.0
        %3357 = vmatpush2.msra.mxu0 0.0
        %3358 = vmatprep.subr.mxu0 0.0
        %3359 = vmatpush2.msra.mxu0 0.0
        %3360 = vmatprep.subr.mxu0 0.0
        %3361 = vmatpush2.msra.mxu0 0.0
        %3362 = vmatprep.subr.mxu0 0.0
        %3363 = vmatpush2.msra.mxu0 0.0
        %3364 = vmatprep.subr.mxu0 0.0
        %3365 = vmatpush2.msra.mxu0 0.0
        %3366 = vmatprep.subr.mxu0 %v3261
        %3367 = vmatpush2.msra.mxu0 %v3260
        %3368 = vmatprep.subr.mxu0 %v3259
        %3369 = vmatpush2.msra.mxu0 %v3258
        %3370 = vmatprep.subr.mxu0 %v3257
        %3371 = vmatpush2.msra.mxu0 %v3256
        %3372 = vmatprep.subr.mxu0 %v3255
        %3373 = vmatpush2.msra.mxu0 %v3254
        %3374 = vmatprep.subr.mxu0 %v3253
        %3375 = vmatpush2.msra.mxu0 %v3252
        %3376 = vmatprep.subr.mxu0 %v3251
        %3377 = vmatpush2.msra.mxu0 %v3250
        %3378 = vmatprep.subr.mxu0 %v3249
        %3379 = vmatpush2.msra.mxu0 %v3248
        %3380 = vmatprep.subr.mxu0 %v3247
        %3381 = vmatpush2.msra.mxu0 %v3246
        %3382 = vmatprep.mubr.f32.mxu0 %v3316
        %3383 = vmatmul.mubr.f32.gmra.mxu0 %v3312
        %v3384 = vpop.f32.mrf.mxu0
        %v3385 = vadd.f32 0.0, %v3384
        %v3386 = vpop.f32.mrf.mxu0
        %v3387 = vadd.f32 0.0, %v3386
        %3388 = vdwg.mxu0
        %v3389 = vmul.f32 %v3385, 0.11111111
        %v3390 = vmul.f32 %v3387, 0.11111111
        %v3391 = vmul.f32 %v3389, %v3389
        %v3392 = vmul.f32 %v3390, %v3390
        %v3395 = vrot.slane %v3391, 7
        %v3396 = vrot.slane %v3392, 7
        %v3399 = vsub.f32 %v3389, %v3395
        %v3400 = vsub.f32 %v3390, %v3396
        %v3401 = vlaneseq
        %v3402 = vshrl.u32 %v3401, 7
        %v3403 = vsub.s32 0, %v3402
        %v3404 = vrot.slane %v3389, %v3403
        %v3405 = vlaneseq
        %v3406 = vshrl.u32 %v3405, 7
        %v3407 = vsub.s32 0, %v3406
        %v3408 = vrot.slane %v3390, %v3407
        %v3409 = vsub.f32 %v3280, %v3404
        %v3410 = vsub.f32 %v3281, %v3408
        %v3411 = vadd.f32 %v3399, 1e-05
        %v3412 = vadd.f32 %v3400, 1e-05
        %v3413 = vrsqrt.pop %v3411
        %v3414 = vrsqrt.pop %v3412
        %v3415 = vlaneseq
        %v3416 = vshrl.u32 %v3415, 7
        %v3417 = vsub.s32 1, %v3416
        %v3418 = vrot.slane %v3413, %v3417
        %v3419 = vlaneseq
        %v3420 = vshrl.u32 %v3419, 7
        %v3421 = vsub.s32 1, %v3420
        %v3422 = vrot.slane %v3414, %v3421
        %v3423 = vmul.f32 %v3409, %v3418
        %v3424 = vmul.f32 %v3410, %v3422
        %vm3425 = vcmp.gt.f32.partialorder %v3423, 0.0
        %vm3426 = vcmp.gt.f32.partialorder %v3424, 0.0
        %v3427 = vmul.f32 %v3423, 0.2
        %v3428 = vmul.f32 %v3424, 0.2
        %v3429 = vsel %vm3425, %v3423, %v3427
        %v3430 = vsel %vm3426, %v3424, %v3428
        %3431 = vst [vmem:[#allocation6] sm:$0x1f] 0.0
        %vm3432 = vcmask 520192
        %3433 = vst.msk [vmem:[#allocation6 + $0x8] sm:$0x1f] %vm3432, 0.0
        %v3436 = vrot.slane %v3429, 7
        %v3437 = vrot.slane %v3430, 7
        %3440 = vst [vmem:[#allocation6] sm:$0xe] %v3436
        %vm3441 = vcmask 519169
        %3442 = vst.msk [vmem:[#allocation6 + $0x8] sm:$0xe] %vm3441, %v3437
        %v3443 = vld [vmem:[#allocation6] sm:$0x3]
        %v3444 = vld [vmem:[#allocation6 + $0x8] sm:$0x3]
        %v3445 = vld [vmem:[#allocation6] sm:$0x6]
        %v3446 = vld [vmem:[#allocation6 + $0x8] sm:$0x6]
        %v3447 = vld [vmem:[#allocation6] sm:$0xc]
        %v3448 = vld [vmem:[#allocation6 + $0x8] sm:$0xc]
        %v3449 = vld [vmem:[#allocation6] sm:$0x18]
        %v3450 = vld [vmem:[#allocation6 + $0x8] sm:$0x18]
        %v3453 = vrot.slane %v3445, 1
        %v3454 = vrot.slane %v3446, 1
        %3455 = vrot.lane.b32.xlu0 %v3453, 64
        %v3456 = vpop.permute.xlu0 %3455
        %3457 = vrot.lane.b32.xlu0 %v3454, 64
        %v3458 = vpop.permute.xlu0 %3457
        %v3459 = vsel %vm3314, %v3456, %v3458
        %v3464 = vrot.slane %v3447, 2
        %v3465 = vrot.slane %v3448, 2
        %v3470 = vrot.slane %v3449, 3
        %v3471 = vrot.slane %v3450, 3
        %3472 = vrot.lane.b32.xlu0 %v3470, 64
        %v3473 = vpop.permute.xlu0 %3472
        %3474 = vrot.lane.b32.xlu0 %v3471, 64
        %v3475 = vpop.permute.xlu0 %3474
        %v3476 = vsel %vm3314, %v3473, %v3475
        %v3479 = vsel %vm3314, %v3444, %v3456
        %v3480 = vsel %vm3314, %v3465, %v3473
        %v3481 = vpack.c.bf16 %v3443, %v3443
        %v3482 = vpack.c.bf16 %v3479, %v3479
        %v3483 = vpack.c.bf16 %v3459, %v3459
        %v3484 = vpack.c.bf16 %v3464, %v3464
        %v3485 = vpack.c.bf16 %v3480, %v3480
        %v3486 = vpack.c.bf16 %v3476, %v3476
        %v3487 = vld [vmem:[%s9] sm:$0xf]
        %v3488 = vld [vmem:[%s9 + $0x4] sm:$0xf]
        %v3489 = vld [vmem:[%s9 + $0x8] sm:$0xf]
        %v3490 = vld [vmem:[%s9 + $0xc] sm:$0xf]
        %v3491 = vld [vmem:[%s9 + $0x10] sm:$0xf]
        %v3492 = vld [vmem:[%s9 + $0x14] sm:$0xf]
        %v3493 = vld [vmem:[%s9 + $0x18] sm:$0xf]
        %v3494 = vld [vmem:[%s9 + $0x1c] sm:$0xf]
        %v3495 = vld [vmem:[%s9 + $0x20] sm:$0xf]
        %v3496 = vld [vmem:[%s9 + $0x24] sm:$0xf]
        %v3497 = vld [vmem:[%s9 + $0x28] sm:$0xf]
        %v3498 = vld [vmem:[%s9 + $0x2c] sm:$0xf]
        %v3499 = vld [vmem:[%s9 + $0x30] sm:$0xf]
        %v3500 = vld [vmem:[%s9 + $0x34] sm:$0xf]
        %v3501 = vld [vmem:[%s9 + $0x38] sm:$0xf]
        %v3502 = vld [vmem:[%s9 + $0x3c] sm:$0xf]
        %v3503 = vld [vmem:[%s9 + $0x40] sm:$0xf]
        %v3504 = vld [vmem:[%s9 + $0x44] sm:$0xf]
        %v3505 = vld [vmem:[%s9 + $0x48] sm:$0xf]
        %v3506 = vld [vmem:[%s9 + $0x4c] sm:$0xf]
        %v3507 = vld [vmem:[%s9 + $0x50] sm:$0xf]
        %v3508 = vld [vmem:[%s9 + $0x54] sm:$0xf]
        %v3509 = vld [vmem:[%s9 + $0x58] sm:$0xf]
        %v3510 = vld [vmem:[%s9 + $0x5c] sm:$0xf]
        %v3511 = vld [vmem:[%s9 + $0x60] sm:$0xf]
        %v3512 = vld [vmem:[%s9 + $0x64] sm:$0xf]
        %v3513 = vld [vmem:[%s9 + $0x68] sm:$0xf]
        %v3514 = vld [vmem:[%s9 + $0x6c] sm:$0xf]
        %v3515 = vld [vmem:[%s9 + $0x70] sm:$0xf]
        %v3516 = vld [vmem:[%s9 + $0x74] sm:$0xf]
        %v3517 = vld [vmem:[%s9 + $0x78] sm:$0xf]
        %v3518 = vld [vmem:[%s9 + $0x7c] sm:$0xf]
        %v3519 = vld [vmem:[%s9 + $0x80] sm:$0xf]
        %v3520 = vld [vmem:[%s9 + $0x84] sm:$0xf]
        %v3521 = vld [vmem:[%s9 + $0x88] sm:$0xf]
        %v3522 = vld [vmem:[%s9 + $0x8c] sm:$0xf]
        %v3523 = vld [vmem:[%s9 + $0x90] sm:$0xf]
        %v3524 = vld [vmem:[%s9 + $0x94] sm:$0xf]
        %v3525 = vld [vmem:[%s9 + $0x98] sm:$0xf]
        %v3526 = vld [vmem:[%s9 + $0x9c] sm:$0xf]
        %v3527 = vld [vmem:[%s9 + $0xa0] sm:$0xf]
        %v3528 = vld [vmem:[%s9 + $0xa4] sm:$0xf]
        %v3529 = vld [vmem:[%s9 + $0xa8] sm:$0xf]
        %v3530 = vld [vmem:[%s9 + $0xac] sm:$0xf]
        %v3531 = vld [vmem:[%s9 + $0xb0] sm:$0xf]
        %v3532 = vld [vmem:[%s9 + $0xb4] sm:$0xf]
        %v3533 = vld [vmem:[%s9 + $0xb8] sm:$0xf]
        %v3534 = vld [vmem:[%s9 + $0xbc] sm:$0xf]
        %v3535 = vld [vmem:[%s9 + $0xc0] sm:$0xf]
        %v3536 = vld [vmem:[%s9 + $0xc4] sm:$0xf]
        %v3537 = vld [vmem:[%s9 + $0xc8] sm:$0xf]
        %v3538 = vld [vmem:[%s9 + $0xcc] sm:$0xf]
        %v3539 = vld [vmem:[%s9 + $0xd0] sm:$0xf]
        %v3540 = vld [vmem:[%s9 + $0xd4] sm:$0xf]
        %v3541 = vld [vmem:[%s9 + $0xd8] sm:$0xf]
        %v3542 = vld [vmem:[%s9 + $0xdc] sm:$0xf]
        %v3543 = vld [vmem:[%s9 + $0xe0] sm:$0xf]
        %v3544 = vld [vmem:[%s9 + $0xe4] sm:$0xf]
        %v3545 = vld [vmem:[%s9 + $0xe8] sm:$0xf]
        %v3546 = vld [vmem:[%s9 + $0xec] sm:$0xf]
        %v3547 = vld [vmem:[%s9 + $0xf0] sm:$0xf]
        %v3548 = vld [vmem:[%s9 + $0xf4] sm:$0xf]
        %v3549 = vld [vmem:[%s9 + $0xf8] sm:$0xf]
        %v3550 = vld [vmem:[%s9 + $0xfc] sm:$0xf]
        %v3551 = vld [vmem:[%s9 + $0x100] sm:$0xf]
        %v3552 = vld [vmem:[%s9 + $0x104] sm:$0xf]
        %v3553 = vld [vmem:[%s9 + $0x108] sm:$0xf]
        %v3554 = vld [vmem:[%s9 + $0x10c] sm:$0xf]
        %v3555 = vld [vmem:[%s9 + $0x110] sm:$0xf]
        %v3556 = vld [vmem:[%s9 + $0x114] sm:$0xf]
        %v3557 = vld [vmem:[%s9 + $0x118] sm:$0xf]
        %v3558 = vld [vmem:[%s9 + $0x11c] sm:$0xf]
        %v3559 = vld [vmem:[%s9 + $0x120] sm:$0xf]
        %v3560 = vld [vmem:[%s9 + $0x124] sm:$0xf]
        %v3561 = vld [vmem:[%s9 + $0x128] sm:$0xf]
        %v3562 = vld [vmem:[%s9 + $0x12c] sm:$0xf]
        %v3563 = vld [vmem:[%s9 + $0x130] sm:$0xf]
        %v3564 = vld [vmem:[%s9 + $0x134] sm:$0xf]
        %v3565 = vld [vmem:[%s9 + $0x138] sm:$0xf]
        %v3566 = vld [vmem:[%s9 + $0x13c] sm:$0xf]
        %v3567 = vld [vmem:[%s9 + $0x140] sm:$0xf]
        %v3568 = vld [vmem:[%s9 + $0x144] sm:$0xf]
        %v3569 = vld [vmem:[%s9 + $0x148] sm:$0xf]
        %v3570 = vld [vmem:[%s9 + $0x14c] sm:$0xf]
        %v3571 = vld [vmem:[%s9 + $0x150] sm:$0xf]
        %v3572 = vld [vmem:[%s9 + $0x154] sm:$0xf]
        %v3573 = vld [vmem:[%s9 + $0x158] sm:$0xf]
        %v3574 = vld [vmem:[%s9 + $0x15c] sm:$0xf]
        %v3575 = vld [vmem:[%s9 + $0x160] sm:$0xf]
        %v3576 = vld [vmem:[%s9 + $0x164] sm:$0xf]
        %v3577 = vld [vmem:[%s9 + $0x168] sm:$0xf]
        %v3578 = vld [vmem:[%s9 + $0x16c] sm:$0xf]
        %v3579 = vld [vmem:[%s9 + $0x170] sm:$0xf]
        %v3580 = vld [vmem:[%s9 + $0x174] sm:$0xf]
        %v3581 = vld [vmem:[%s9 + $0x178] sm:$0xf]
        %v3582 = vld [vmem:[%s9 + $0x17c] sm:$0xf]
        %v3583 = vld [vmem:[%s10] sm:$0x1]
        %v3585 = vlaneseq
        %v3586 = vshrl.u32 %v3585, 7
        %v3587 = vsub.s32 0, %v3586
        %v3588 = vrot.slane %v3583, %v3587
        %v3686 = vunpack.c.l.b16 %v3487
        %v3687 = vunpack.c.l.b16 %v3488
        %v3688 = vunpack.c.l.b16 %v3489
        %v3689 = vunpack.c.l.b16 %v3490
        %v3690 = vunpack.c.l.b16 %v3491
        %v3691 = vunpack.c.l.b16 %v3492
        %v3692 = vunpack.c.l.b16 %v3493
        %v3693 = vunpack.c.l.b16 %v3494
        %v3694 = vunpack.c.l.b16 %v3495
        %v3695 = vunpack.c.l.b16 %v3496
        %v3696 = vunpack.c.l.b16 %v3497
        %v3697 = vunpack.c.l.b16 %v3498
        %v3698 = vunpack.c.l.b16 %v3499
        %v3699 = vunpack.c.l.b16 %v3500
        %v3700 = vunpack.c.l.b16 %v3501
        %v3701 = vunpack.c.l.b16 %v3502
        %v3702 = vunpack.c.l.b16 %v3503
        %v3703 = vunpack.c.l.b16 %v3504
        %v3704 = vunpack.c.l.b16 %v3505
        %v3705 = vunpack.c.l.b16 %v3506
        %v3706 = vunpack.c.l.b16 %v3507
        %v3707 = vunpack.c.l.b16 %v3508
        %v3708 = vunpack.c.l.b16 %v3509
        %v3709 = vunpack.c.l.b16 %v3510
        %v3710 = vunpack.c.l.b16 %v3511
        %v3711 = vunpack.c.l.b16 %v3512
        %v3712 = vunpack.c.l.b16 %v3513
        %v3713 = vunpack.c.l.b16 %v3514
        %v3714 = vunpack.c.l.b16 %v3515
        %v3715 = vunpack.c.l.b16 %v3516
        %v3716 = vunpack.c.l.b16 %v3517
        %v3717 = vunpack.c.l.b16 %v3518
        %v3718 = vunpack.c.l.b16 %v3519
        %v3719 = vunpack.c.l.b16 %v3520
        %v3720 = vunpack.c.l.b16 %v3521
        %v3721 = vunpack.c.l.b16 %v3522
        %v3722 = vunpack.c.l.b16 %v3523
        %v3723 = vunpack.c.l.b16 %v3524
        %v3724 = vunpack.c.l.b16 %v3525
        %v3725 = vunpack.c.l.b16 %v3526
        %v3726 = vunpack.c.l.b16 %v3527
        %v3727 = vunpack.c.l.b16 %v3528
        %v3728 = vunpack.c.l.b16 %v3529
        %v3729 = vunpack.c.l.b16 %v3530
        %v3730 = vunpack.c.l.b16 %v3531
        %v3731 = vunpack.c.l.b16 %v3532
        %v3732 = vunpack.c.l.b16 %v3533
        %v3733 = vunpack.c.l.b16 %v3534
        %v3734 = vunpack.c.l.b16 %v3535
        %v3735 = vunpack.c.l.b16 %v3536
        %v3736 = vunpack.c.l.b16 %v3537
        %v3737 = vunpack.c.l.b16 %v3538
        %v3738 = vunpack.c.l.b16 %v3539
        %v3739 = vunpack.c.l.b16 %v3540
        %v3740 = vunpack.c.l.b16 %v3541
        %v3741 = vunpack.c.l.b16 %v3542
        %v3742 = vunpack.c.l.b16 %v3543
        %v3743 = vunpack.c.l.b16 %v3544
        %v3744 = vunpack.c.l.b16 %v3545
        %v3745 = vunpack.c.l.b16 %v3546
        %v3746 = vunpack.c.l.b16 %v3547
        %v3747 = vunpack.c.l.b16 %v3548
        %v3748 = vunpack.c.l.b16 %v3549
        %v3749 = vunpack.c.l.b16 %v3550
        %v3750 = vunpack.c.l.b16 %v3551
        %v3751 = vunpack.c.l.b16 %v3552
        %v3752 = vunpack.c.l.b16 %v3553
        %v3753 = vunpack.c.l.b16 %v3554
        %v3754 = vunpack.c.l.b16 %v3555
        %v3755 = vunpack.c.l.b16 %v3556
        %v3756 = vunpack.c.l.b16 %v3557
        %v3757 = vunpack.c.l.b16 %v3558
        %v3758 = vunpack.c.l.b16 %v3559
        %v3759 = vunpack.c.l.b16 %v3560
        %v3760 = vunpack.c.l.b16 %v3561
        %v3761 = vunpack.c.l.b16 %v3562
        %v3762 = vunpack.c.l.b16 %v3563
        %v3763 = vunpack.c.l.b16 %v3564
        %v3764 = vunpack.c.l.b16 %v3565
        %v3765 = vunpack.c.l.b16 %v3566
        %v3766 = vunpack.c.l.b16 %v3567
        %v3767 = vunpack.c.l.b16 %v3568
        %v3768 = vunpack.c.l.b16 %v3569
        %v3769 = vunpack.c.l.b16 %v3570
        %v3770 = vunpack.c.l.b16 %v3571
        %v3771 = vunpack.c.l.b16 %v3572
        %v3772 = vunpack.c.l.b16 %v3573
        %v3773 = vunpack.c.l.b16 %v3574
        %v3774 = vunpack.c.l.b16 %v3575
        %v3775 = vunpack.c.l.b16 %v3576
        %v3776 = vunpack.c.l.b16 %v3577
        %v3777 = vunpack.c.l.b16 %v3578
        %v3778 = vunpack.c.l.b16 %v3579
        %v3779 = vunpack.c.l.b16 %v3580
        %v3780 = vunpack.c.l.b16 %v3581
        %v3781 = vunpack.c.l.b16 %v3582
        %v3782 = vpack.c.b16 %v3687, %v3686
        %v3783 = vpack.c.b16 %v3689, %v3688
        %v3784 = vpack.c.b16 %v3691, %v3690
        %v3785 = vpack.c.b16 %v3693, %v3692
        %v3786 = vpack.c.b16 %v3695, %v3694
        %v3787 = vpack.c.b16 %v3697, %v3696
        %v3788 = vpack.c.b16 %v3699, %v3698
        %v3789 = vpack.c.b16 %v3701, %v3700
        %v3790 = vpack.c.b16 %v3703, %v3702
        %v3791 = vpack.c.b16 %v3705, %v3704
        %v3792 = vpack.c.b16 %v3707, %v3706
        %v3793 = vpack.c.b16 %v3709, %v3708
        %v3794 = vpack.c.b16 %v3711, %v3710
        %v3795 = vpack.c.b16 %v3713, %v3712
        %v3796 = vpack.c.b16 %v3715, %v3714
        %v3797 = vpack.c.b16 %v3717, %v3716
        %v3798 = vpack.c.b16 %v3719, %v3718
        %v3799 = vpack.c.b16 %v3721, %v3720
        %v3800 = vpack.c.b16 %v3723, %v3722
        %v3801 = vpack.c.b16 %v3725, %v3724
        %v3802 = vpack.c.b16 %v3727, %v3726
        %v3803 = vpack.c.b16 %v3729, %v3728
        %v3804 = vpack.c.b16 %v3731, %v3730
        %v3805 = vpack.c.b16 %v3733, %v3732
        %v3806 = vpack.c.b16 %v3735, %v3734
        %v3807 = vpack.c.b16 %v3737, %v3736
        %v3808 = vpack.c.b16 %v3739, %v3738
        %v3809 = vpack.c.b16 %v3741, %v3740
        %v3810 = vpack.c.b16 %v3743, %v3742
        %v3811 = vpack.c.b16 %v3745, %v3744
        %v3812 = vpack.c.b16 %v3747, %v3746
        %v3813 = vpack.c.b16 %v3749, %v3748
        %v3814 = vpack.c.b16 %v3751, %v3750
        %v3815 = vpack.c.b16 %v3753, %v3752
        %v3816 = vpack.c.b16 %v3755, %v3754
        %v3817 = vpack.c.b16 %v3757, %v3756
        %v3818 = vpack.c.b16 %v3759, %v3758
        %v3819 = vpack.c.b16 %v3761, %v3760
        %v3820 = vpack.c.b16 %v3763, %v3762
        %v3821 = vpack.c.b16 %v3765, %v3764
        %v3822 = vpack.c.b16 %v3767, %v3766
        %v3823 = vpack.c.b16 %v3769, %v3768
        %v3824 = vpack.c.b16 %v3771, %v3770
        %v3825 = vpack.c.b16 %v3773, %v3772
        %v3826 = vpack.c.b16 %v3775, %v3774
        %v3827 = vpack.c.b16 %v3777, %v3776
        %v3828 = vpack.c.b16 %v3779, %v3778
        %v3829 = vpack.c.b16 %v3781, %v3780
        %3878 = vmatprep.subr.bf16.mxu0 0
        %3879 = vmatpush1.bf16.msra.mxu0 %v3789
        %3880 = vmatprep.subr.bf16.mxu0 0
        %3881 = vmatpush1.bf16.msra.mxu0 %v3788
        %3882 = vmatprep.subr.bf16.mxu0 0
        %3883 = vmatpush1.bf16.msra.mxu0 %v3787
        %3884 = vmatprep.subr.bf16.mxu0 0
        %3885 = vmatpush1.bf16.msra.mxu0 %v3786
        %3886 = vmatprep.subr.bf16.mxu0 0
        %3887 = vmatpush1.bf16.msra.mxu0 %v3785
        %3888 = vmatprep.subr.bf16.mxu0 0
        %3889 = vmatpush1.bf16.msra.mxu0 %v3784
        %3890 = vmatprep.subr.bf16.mxu0 0
        %3891 = vmatpush1.bf16.msra.mxu0 %v3783
        %3892 = vmatprep.subr.bf16.mxu0 0
        %3893 = vmatpush1.bf16.msra.mxu0 %v3782
        %3894 = vmatprep.subr.bf16.mxu0 0
        %3895 = vmatpush2.bf16.msra.mxu0 %v3797
        %3896 = vmatprep.subr.bf16.mxu0 0
        %3897 = vmatpush2.bf16.msra.mxu0 %v3796
        %3898 = vmatprep.subr.bf16.mxu0 0
        %3899 = vmatpush2.bf16.msra.mxu0 %v3795
        %3900 = vmatprep.subr.bf16.mxu0 0
        %3901 = vmatpush2.bf16.msra.mxu0 %v3794
        %3902 = vmatprep.subr.bf16.mxu0 0
        %3903 = vmatpush2.bf16.msra.mxu0 %v3793
        %3904 = vmatprep.subr.bf16.mxu0 0
        %3905 = vmatpush2.bf16.msra.mxu0 %v3792
        %3906 = vmatprep.subr.bf16.mxu0 0
        %3907 = vmatpush2.bf16.msra.mxu0 %v3791
        %3908 = vmatprep.subr.bf16.mxu0 0
        %3909 = vmatpush2.bf16.msra.mxu0 %v3790
        %3910 = vmatprep.mubr.bf16.mxu0 %v3482
        %3911 = vmatmul.mubr.bf16.gmra.mxu0 %v3481
        %v3912 = vpop.f32.mrf.mxu0
        %v3913 = vadd.f32 %v3588, %v3912
        %v3914 = vpop.f32.mrf.mxu0
        %v3915 = vpop.f32.mrf.mxu0
        %v3916 = vpop.f32.mrf.mxu0
        %3917 = vdwg.mxu0
        %3918 = vmatprep.subr.bf16.mxu0 0
        %3919 = vmatpush1.bf16.msra.mxu0 %v3805
        %3920 = vmatprep.subr.bf16.mxu0 0
        %3921 = vmatpush1.bf16.msra.mxu0 %v3804
        %3922 = vmatprep.subr.bf16.mxu0 0
        %3923 = vmatpush1.bf16.msra.mxu0 %v3803
        %3924 = vmatprep.subr.bf16.mxu0 0
        %3925 = vmatpush1.bf16.msra.mxu0 %v3802
        %3926 = vmatprep.subr.bf16.mxu0 0
        %3927 = vmatpush1.bf16.msra.mxu0 %v3801
        %3928 = vmatprep.subr.bf16.mxu0 0
        %3929 = vmatpush1.bf16.msra.mxu0 %v3800
        %3930 = vmatprep.subr.bf16.mxu0 0
        %3931 = vmatpush1.bf16.msra.mxu0 %v3799
        %3932 = vmatprep.subr.bf16.mxu0 0
        %3933 = vmatpush1.bf16.msra.mxu0 %v3798
        %3934 = vmatprep.subr.bf16.mxu0 0
        %3935 = vmatpush2.bf16.msra.mxu0 %v3813
        %3936 = vmatprep.subr.bf16.mxu0 0
        %3937 = vmatpush2.bf16.msra.mxu0 %v3812
        %3938 = vmatprep.subr.bf16.mxu0 0
        %3939 = vmatpush2.bf16.msra.mxu0 %v3811
        %3940 = vmatprep.subr.bf16.mxu0 0
        %3941 = vmatpush2.bf16.msra.mxu0 %v3810
        %3942 = vmatprep.subr.bf16.mxu0 0
        %3943 = vmatpush2.bf16.msra.mxu0 %v3809
        %3944 = vmatprep.subr.bf16.mxu0 0
        %3945 = vmatpush2.bf16.msra.mxu0 %v3808
        %3946 = vmatprep.subr.bf16.mxu0 0
        %3947 = vmatpush2.bf16.msra.mxu0 %v3807
        %3948 = vmatprep.subr.bf16.mxu0 0
        %3949 = vmatpush2.bf16.msra.mxu0 %v3806
        %3950 = vmatprep.mubr.bf16.mxu0 %v3484
        %3951 = vmatmul.mubr.bf16.gmra.mxu0 %v3483
        %v3952 = vpop.f32.mrf.mxu0
        %v3953 = vadd.f32 %v3913, %v3952
        %v3954 = vpop.f32.mrf.mxu0
        %v3955 = vpop.f32.mrf.mxu0
        %v3956 = vpop.f32.mrf.mxu0
        %3957 = vdwg.mxu0
        %3958 = vmatprep.subr.bf16.mxu0 0
        %3959 = vmatpush1.bf16.msra.mxu0 %v3821
        %3960 = vmatprep.subr.bf16.mxu0 0
        %3961 = vmatpush1.bf16.msra.mxu0 %v3820
        %3962 = vmatprep.subr.bf16.mxu0 0
        %3963 = vmatpush1.bf16.msra.mxu0 %v3819
        %3964 = vmatprep.subr.bf16.mxu0 0
        %3965 = vmatpush1.bf16.msra.mxu0 %v3818
        %3966 = vmatprep.subr.bf16.mxu0 0
        %3967 = vmatpush1.bf16.msra.mxu0 %v3817
        %3968 = vmatprep.subr.bf16.mxu0 0
        %3969 = vmatpush1.bf16.msra.mxu0 %v3816
        %3970 = vmatprep.subr.bf16.mxu0 0
        %3971 = vmatpush1.bf16.msra.mxu0 %v3815
        %3972 = vmatprep.subr.bf16.mxu0 0
        %3973 = vmatpush1.bf16.msra.mxu0 %v3814
        %3974 = vmatprep.subr.bf16.mxu0 0
        %3975 = vmatpush2.bf16.msra.mxu0 %v3829
        %3976 = vmatprep.subr.bf16.mxu0 0
        %3977 = vmatpush2.bf16.msra.mxu0 %v3828
        %3978 = vmatprep.subr.bf16.mxu0 0
        %3979 = vmatpush2.bf16.msra.mxu0 %v3827
        %3980 = vmatprep.subr.bf16.mxu0 0
        %3981 = vmatpush2.bf16.msra.mxu0 %v3826
        %3982 = vmatprep.subr.bf16.mxu0 0
        %3983 = vmatpush2.bf16.msra.mxu0 %v3825
        %3984 = vmatprep.subr.bf16.mxu0 0
        %3985 = vmatpush2.bf16.msra.mxu0 %v3824
        %3986 = vmatprep.subr.bf16.mxu0 0
        %3987 = vmatpush2.bf16.msra.mxu0 %v3823
        %3988 = vmatprep.subr.bf16.mxu0 0
        %3989 = vmatpush2.bf16.msra.mxu0 %v3822
        %3990 = vmatprep.mubr.bf16.mxu0 %v3486
        %3991 = vmatmul.mubr.bf16.gmra.mxu0 %v3485
        %v3992 = vpop.f32.mrf.mxu0
        %v3993 = vadd.f32 %v3953, %v3992
        %v3994 = vpop.f32.mrf.mxu0
        %v3995 = vpop.f32.mrf.mxu0
        %v3996 = vpop.f32.mrf.mxu0
        %3997 = vdwg.mxu0
        %v3998 = vsub.f32 0.0, %v3993
        %v3999 = vmul.f32 %v3998, 1.442695
        %v4000 = vpow.pop %v3999
        %v4001 = vadd.f32 %v4000, 1.0
        %v4002 = vrcp.pop %v4001
        %4003 = vst [vmem:[%s444] sm:$0x3] %v4002
        %s4004 = sand.u32 %s274, 1
        %s4005 = scalar_lea.sflag [#allocation9], %s4004
        %s4006 = sand.u32 %s274, 1
        %s4007 = smul.addr %s4006, 2
        %s4008 = scalar_lea.vmem [#allocation15], %s4007
        // Predicated region
        $region81: #{tpu_custom_call.1} parent=63 // pred_check
          %p4009 = pneg %p284
        $region82: #{tpu_custom_call.1} parent=63 // pred_check_branch
          %4011 = sbr.rel (%p4009) target = $region84
        $region83: #{tpu_custom_call.1} parent=63 // pred_region
          %s4013 = ssub.s32 32, 32
          %4014 = vsyncadd %s4005, %s4013
          %s4015 = smul.addr %s30, 32
          %s4016 = scalar_lea.hbm %s11, %s4015
          %s4018 = sshll.u32 %s4008, 4
          %s4019 = int_to_ptr.vmem [resolvable:$true] %s4018
          %4021 = dma.vmem_to_hbm [thread:$0]  %s4019, 32, %s4016, %s4005
        $region84: #{tpu_custom_call.1} parent=63 // pred_fallthru
          _
      $region64: #{tpu_custom_call.1} parent=5 // pred_fallthru
        _
      %p4022 = scmp.le.s32.totalorder 2, %s25
      // Predicated region
      $region85: #{tpu_custom_call.1} parent=5 // pred_check
        %p4023 = pneg %p4022
      $region86: #{tpu_custom_call.1} parent=5 // pred_check_branch
        %4025 = sbr.rel (%p4023) target = $region88
      $region87: #{tpu_custom_call.1} parent=5 // pred_region
        %s4026 = ssub.s32 %s25, 2
        // Predicated region
        $region89: #{tpu_custom_call.1} parent=87 // pred_check
          %p4027 = pneg %p290
        $region90: #{tpu_custom_call.1} parent=87 // pred_check_branch
          %4029 = sbr.rel (%p4027) target = $region92
        $region91: #{tpu_custom_call.1} parent=87 // pred_region
          %s4030 = sand.u32 %s275, 1
          %s4031 = scalar_lea.sflag [#allocation9], %s4030
          %s4032 = sand.u32 %s275, 1
          %s4033 = smul.addr %s4032, 2
          %s4034 = scalar_lea.vmem [#allocation15], %s4033
          %4035 = dma.done %s4031, 32
        $region92: #{tpu_custom_call.1} parent=87 // pred_fallthru
          _
      $region88: #{tpu_custom_call.1} parent=5 // pred_fallthru
        _
    $region6: #{tpu_custom_call.1} parent=1 // loop_footer
      %s29 = sadd.s32 1, %s25
    $region7: #{tpu_custom_call.1} parent=1 // loop_footer_branch
      %24 = sbr.rel target = $region3
    $region8: #{tpu_custom_call.1} parent=1 // loop_exit
      _
    %4036 = vsyncpa [#allocation8], 1
    %s4037 = scalar_lea.sflag [#allocation8], 1
    %4038 = vsyncpa %s4037, 1
    %4039 = vsyncpa [#allocation11], 1
    %4040 = vsyncpa [#allocation14], 1
    %4041 = vsyncpa [#allocation9], 1
    %s4042 = scalar_lea.sflag [#allocation9], 1
    %4043 = vsyncpa %s4042, 1

</llo_original>
